<compile_context>
chip_gen: v7x
topology: tpu7x:2x2x1
jax: 0.10.0
libtpu: 0.0.40
codegen_flags: <defaults>
</compile_context>

<pallas_src>
import jax
import jax.numpy as jnp
from jax import lax
from jax.experimental import pallas as pl
from jax.experimental.pallas import tpu as pltpu


def _bottleneck_kernel(xpad_ref, w1_ref, s1_ref, b1_ref,
                       w2_ref, s2_ref, b2_ref,
                       w3_ref, s3_ref, b3_ref, o_ref):
    """Fused conv1x1+BN+ReLU -> conv3x3+BN+ReLU -> conv1x1+BN -> +res -> ReLU.

    Per grid step (n, r): processes TH output rows of batch element n.
    xpad_ref block: (1, H+2, W+2, Cin)  -- whole padded image of element n
                    (constant across r, so it is DMA'd once per n).
    o_ref block:    (1, TH, W, Cout)
    """
    TH = o_ref.shape[1]
    W = o_ref.shape[2]
    Cout = o_ref.shape[3]
    Cin = xpad_ref.shape[3]
    P = w1_ref.shape[1]
    H = pl.num_programs(1) * TH          # original (unpadded) image height

    r = pl.program_id(1)
    h0 = pl.multiple_of(r * TH, TH)      # row offset into the padded image

    # ---- conv1 (1x1) + bn1 + relu on the (TH+2, W+2) halo window ----
    xw = xpad_ref[0, pl.ds(h0, TH + 2), :, :]                    # (TH+2, W+2, Cin) f32
    h1 = jnp.dot(xw.reshape((TH + 2) * (W + 2), Cin).astype(jnp.bfloat16),
                 w1_ref[...], preferred_element_type=jnp.float32)
    h1 = jnp.maximum(h1 * s1_ref[...] + b1_ref[...], 0.0)
    h1 = h1.reshape(TH + 2, W + 2, P)

    # conv2's zero padding applies AFTER bn1+relu: zero the halo ring that
    # falls outside the original image (cheap VPU select).
    gh = h0 - 1 + lax.broadcasted_iota(jnp.int32, (TH + 2, W + 2, 1), 0)
    gw = lax.broadcasted_iota(jnp.int32, (TH + 2, W + 2, 1), 1) - 1
    inside = (gh >= 0) & (gh < H) & (gw >= 0) & (gw < W)
    h1 = jnp.where(inside, h1, 0.0).astype(jnp.bfloat16)

    # ---- conv2 (3x3, stride=1, dilation=1): single im2col matmul, K = 9*P ----
    taps = [h1[dy:dy + TH, dx:dx + W, :]
            for dy in range(3) for dx in range(3)]                # each (TH, W, P)
    im2col = jnp.concatenate(taps, axis=-1).reshape(TH * W, 9 * P)
    h2 = jnp.dot(im2col, w2_ref[...], preferred_element_type=jnp.float32)
    h2 = jnp.maximum(h2 * s2_ref[...] + b2_ref[...], 0.0)

    # ---- conv3 (1x1) + bn3 ----
    h3 = jnp.dot(h2.astype(jnp.bfloat16), w3_ref[...],
                 preferred_element_type=jnp.float32)
    h3 = h3 * s3_ref[...] + b3_ref[...]

    # ---- residual (downsample=None => residual == x), final relu ----
    # Re-read the interior of the already-resident padded block right before
    # the add (exact x values, short live range, no extra HBM traffic).
    res = xpad_ref[0, pl.ds(h0 + 1, TH), 1:W + 1, :]              # (TH, W, Cin) f32
    out = jnp.maximum(h3 + res.reshape(TH * W, Cin), 0.0)
    o_ref[...] = out.reshape(1, TH, W, Cout)


def bottleneck_forward_nhwc(x, w1, s1, b1, w2_hwio, s2, b2, w3, s3, b3,
                            *, row_tile=8):
    """x: (N, H, W, Cin) float32 NHWC. Returns (N, H, W, 4*planes) float32."""
    N, H, W, Cin = x.shape
    P = w1.shape[1]
    Cout = w3.shape[1]
    # downsample=None path of the module requires inplanes == planes*4.
    assert Cin == 4 * P and Cout == 4 * P, (
        "Bottleneck with downsample=None needs inplanes == planes*4")
    assert H % row_tile == 0, "H must be divisible by row_tile"

    # Zero-pad spatially once (padding=1 for the 3x3 conv). The conv2 halo is
    # re-zeroed in-kernel after bn1+relu to match PyTorch semantics.
    x_pad = jnp.pad(x, ((0, 0), (1, 1), (1, 1), (0, 0)))

    # bf16 matmul operands (f32 accumulation happens on the MXU).
    w1b = w1.astype(jnp.bfloat16)                        # (Cin, P)
    w2b = w2_hwio.reshape(9 * P, P).astype(jnp.bfloat16)  # (9P, P) im2col layout
    w3b = w3.astype(jnp.bfloat16)                        # (P, 4P)

    HB = H // row_tile
    grid = (N, HB)

    flops = 2 * N * H * W * (Cin * P + 9 * P * P + P * Cout)
    bytes_accessed = int(x_pad.size * 4 + N * H * W * Cout * 4
                         + (w1b.size + w2b.size + w3b.size) * 2
                         + (s1.size + b1.size + s2.size + b2.size
                            + s3.size + b3.size) * 4)

    def rep(shape):
        # full-array block, constant across the grid (fetched once, kept resident)
        return pl.BlockSpec(shape, lambda n, r: (0,) * len(shape))

    out = pl.pallas_call(
        _bottleneck_kernel,
        out_shape=jax.ShapeDtypeStruct((N, H, W, Cout), jnp.float32),
        grid=grid,
        in_specs=[
            # whole padded image of batch element n; constant across r
            pl.BlockSpec((1, H + 2, W + 2, Cin), lambda n, r: (n, 0, 0, 0)),
            rep(w1b.shape), rep(s1.shape), rep(b1.shape),
            rep(w2b.shape), rep(s2.shape), rep(b2.shape),
            rep(w3b.shape), rep(s3.shape), rep(b3.shape),
        ],
        out_specs=pl.BlockSpec((1, row_tile, W, Cout), lambda n, r: (n, r, 0, 0)),
        compiler_params=pltpu.CompilerParams(
            # both axes are embarrassingly parallel -> v7x megacore sharding
            dimension_semantics=("parallel", "parallel"),
            # explicit scoped-VMEM budget; raise for larger row tiles on v6e,
            # keep <= 64 MiB on v7x.
            vmem_limit_bytes=32 * 1024 * 1024),
        cost_estimate=pl.CostEstimate(flops=flops, transcendentals=0,
                                      bytes_accessed=bytes_accessed),
    )(x_pad, w1b, s1, b1, w2b, s2, b2, w3b, s3, b3)
    return out


def bottleneck_forward_nchw(x_nchw, *args, **kw):
    """PyTorch-layout adapter. Prefer the NHWC entry point end-to-end: these
    two transposes are full HBM round trips."""
    x = jnp.transpose(x_nchw, (0, 2, 3, 1))
    out = bottleneck_forward_nhwc(x, *args, **kw)
    return jnp.transpose(out, (0, 3, 1, 2))


def _reference_nhwc(x, w1, s1, b1, w2_hwio, s2, b2, w3, s3, b3):
    """Pure-JAX NHWC reference mirroring the kernel's mixed precision
    (bf16 matmul operands, f32 accumulation, f32 BN/ReLU/residual)."""
    f32 = jnp.float32
    h = jnp.einsum('nhwc,cp->nhwp', x.astype(jnp.bfloat16),
                   w1.astype(jnp.bfloat16), preferred_element_type=f32)
    h = jax.nn.relu(h * s1.reshape(-1) + b1.reshape(-1))
    h = lax.conv_general_dilated(h.astype(jnp.bfloat16),
                                 w2_hwio.astype(jnp.bfloat16),
                                 window_strides=(1, 1),
                                 padding=((1, 1), (1, 1)),
                                 dimension_numbers=('NHWC', 'HWIO', 'NHWC'),
                                 preferred_element_type=f32)
    h = jax.nn.relu(h * s2.reshape(-1) + b2.reshape(-1))
    h = jnp.einsum('nhwp,pq->nhwq', h.astype(jnp.bfloat16),
                   w3.astype(jnp.bfloat16), preferred_element_type=f32)
    h = h * s3.reshape(-1) + b3.reshape(-1)
    return jax.nn.relu(h + x)


if __name__ == "__main__":
    N, H, W = 2, 16, 16
    planes = 32
    inplanes = planes * 4   # 128: lane-dense channels; downsample=None residual path

    key = jax.random.PRNGKey(0)
    kx, k1, k2, k3 = jax.random.split(key, 4)

    # NHWC end-to-end (avoids the NCHW<->NHWC wrapper transposes entirely).
    x = jax.random.normal(kx, (N, H, W, inplanes), dtype=jnp.float32)

    # conv weights generated in torch layout, then converted once.
    w1_t = 0.1 * jax.random.normal(k1, (planes, inplanes), dtype=jnp.float32)      # (out,in)
    w2_t = 0.1 * jax.random.normal(k2, (planes, planes, 3, 3), dtype=jnp.float32)  # (out,in,kh,kw)
    w3_t = 0.1 * jax.random.normal(k3, (planes * 4, planes), dtype=jnp.float32)
    w1 = w1_t.T                                   # (Cin, P)
    w2_hwio = jnp.transpose(w2_t, (2, 3, 1, 0))   # (kh, kw, in=P, out=P)
    w3 = w3_t.T                                   # (P, 4P)

    def bn_fold(c, base):
        gamma = 1.0 + 0.05 * jnp.arange(c, dtype=jnp.float32)
        beta = base + 0.01 * jnp.arange(c, dtype=jnp.float32)
        mean = 0.02 * jnp.arange(c, dtype=jnp.float32)
        var = 1.0 + 0.03 * jnp.arange(c, dtype=jnp.float32)
        scale = gamma * lax.rsqrt(var + 1e-5)
        bias = beta - mean * scale
        return scale.reshape(1, c), bias.reshape(1, c)

    s1, b1 = bn_fold(planes, 0.0)
    s2, b2 = bn_fold(planes, 0.1)
    s3, b3 = bn_fold(planes * 4, -0.1)

    out = bottleneck_forward_nhwc(x, w1, s1, b1, w2_hwio, s2, b2, w3, s3, b3,
                                  row_tile=8)
    out = jax.block_until_ready(out)

    ref = _reference_nhwc(x, w1, s1, b1, w2_hwio, s2, b2, w3, s3, b3)
    # tolerance reflects bf16 matmul operands (f32 accumulation) on both sides
    if not bool(jnp.allclose(out, ref, atol=1e-2, rtol=1e-2)):
        err = float(jnp.max(jnp.abs(out - ref)))
        raise AssertionError(f"Pallas Bottleneck mismatch vs reference, max abs err={err}")

    print("KERNEL_OK")
</pallas_src>

<mosaic_0001>
module attributes {stable_mosaic.version = 11 : i64} {
  func.func @_bottleneck_kernel(%arg0: i32, %arg1: i32, %arg2: memref<1x18x18x128xf32, #tpu.memory_space<vmem>>, %arg3: memref<128x32xbf16, #tpu.memory_space<vmem>>, %arg4: memref<1x32xf32, #tpu.memory_space<vmem>>, %arg5: memref<1x32xf32, #tpu.memory_space<vmem>>, %arg6: memref<288x32xbf16, #tpu.memory_space<vmem>>, %arg7: memref<1x32xf32, #tpu.memory_space<vmem>>, %arg8: memref<1x32xf32, #tpu.memory_space<vmem>>, %arg9: memref<32x128xbf16, #tpu.memory_space<vmem>>, %arg10: memref<1x128xf32, #tpu.memory_space<vmem>>, %arg11: memref<1x128xf32, #tpu.memory_space<vmem>>, %arg12: memref<1x8x16x128xf32, #tpu.memory_space<vmem>>) attributes {dimension_semantics = [#tpu.dimension_semantics<parallel>, #tpu.dimension_semantics<parallel>], iteration_bounds = array<i64: 2, 2>, scalar_prefetch = 0 : i64, scratch_operands = 0 : i64, tpu.core_type = #tpu.core_type<tc>, window_params = [{transform_indices = @transform_0, window_bounds = array<i64: 1, 18, 18, 128>}, {pipeline_mode = #tpu.pipeline_mode<synchronous>, transform_indices = @transform_1, window_bounds = array<i64: 128, 32>}, {pipeline_mode = #tpu.pipeline_mode<synchronous>, transform_indices = @transform_2, window_bounds = array<i64: 1, 32>}, {pipeline_mode = #tpu.pipeline_mode<synchronous>, transform_indices = @transform_3, window_bounds = array<i64: 1, 32>}, {pipeline_mode = #tpu.pipeline_mode<synchronous>, transform_indices = @transform_4, window_bounds = array<i64: 288, 32>}, {pipeline_mode = #tpu.pipeline_mode<synchronous>, transform_indices = @transform_5, window_bounds = array<i64: 1, 32>}, {pipeline_mode = #tpu.pipeline_mode<synchronous>, transform_indices = @transform_6, window_bounds = array<i64: 1, 32>}, {pipeline_mode = #tpu.pipeline_mode<synchronous>, transform_indices = @transform_7, window_bounds = array<i64: 32, 128>}, {pipeline_mode = #tpu.pipeline_mode<synchronous>, transform_indices = @transform_8, window_bounds = array<i64: 1, 128>}, {pipeline_mode = #tpu.pipeline_mode<synchronous>, transform_indices = @transform_9, window_bounds = array<i64: 1, 128>}, {transform_indices = @transform_10, window_bounds = array<i64: 1, 8, 16, 128>}]} {
    %c8_i32 = arith.constant 8 : i32
    %0 = arith.muli %arg1, %c8_i32 : i32
    %1 = tpu.assume_multiple %0, 8 : i32
    %c0 = arith.constant 0 : index
    %2 = arith.index_cast %1 : i32 to index
    %c0_0 = arith.constant 0 : index
    %c0_1 = arith.constant 0 : index
    %3 = vector.load %arg2[%c0, %2, %c0_0, %c0_1] : memref<1x18x18x128xf32, #tpu.memory_space<vmem>>, vector<1x10x18x128xf32>
    %4 = vector.shape_cast %3 : vector<1x10x18x128xf32> to vector<10x18x128xf32>
    %5 = vector.shape_cast %4 : vector<10x18x128xf32> to vector<180x128xf32>
    %6 = arith.truncf %5 : vector<180x128xf32> to vector<180x128xbf16>
    %c0_2 = arith.constant 0 : index
    %c0_3 = arith.constant 0 : index
    %7 = vector.load %arg3[%c0_2, %c0_3] : memref<128x32xbf16, #tpu.memory_space<vmem>>, vector<128x32xbf16>
    %cst = arith.constant dense<0.000000e+00> : vector<180x32xf32>
    %8 = tpu.matmul %6, %7, %cst {dimension_numbers = #tpu.dot_dimension_numbers<[1], [0], [0], [1], [0, 0, 1, 1], [], []>} : vector<180x128xbf16>, vector<128x32xbf16>, vector<180x32xf32> -> vector<180x32xf32>
    %c0_4 = arith.constant 0 : index
    %c0_5 = arith.constant 0 : index
    %9 = vector.load %arg4[%c0_4, %c0_5] : memref<1x32xf32, #tpu.memory_space<vmem>>, vector<1x32xf32>
    %10 = vector.broadcast %9 : vector<1x32xf32> to vector<180x32xf32>
    %11 = arith.mulf %8, %10 : vector<180x32xf32>
    %c0_6 = arith.constant 0 : index
    %c0_7 = arith.constant 0 : index
    %12 = vector.load %arg5[%c0_6, %c0_7] : memref<1x32xf32, #tpu.memory_space<vmem>>, vector<1x32xf32>
    %13 = vector.broadcast %12 : vector<1x32xf32> to vector<180x32xf32>
    %14 = arith.addf %11, %13 : vector<180x32xf32>
    %cst_8 = arith.constant 0.000000e+00 : f32
    %15 = vector.broadcast %cst_8 : f32 to vector<180x32xf32>
    %16 = arith.maximumf %14, %15 : vector<180x32xf32>
    %17 = vector.shape_cast %16 : vector<180x32xf32> to vector<10x18x32xf32>
    %c1_i32 = arith.constant 1 : i32
    %18 = arith.subi %1, %c1_i32 : i32
    %19 = tpu.iota {dimensions = array<i32: 0>} : vector<10x18x1xi32>
    %20 = vector.broadcast %18 : i32 to vector<10x18x1xi32>
    %21 = arith.addi %20, %19 : vector<10x18x1xi32>
    %22 = tpu.iota {dimensions = array<i32: 1>} : vector<10x18x1xi32>
    %c1_i32_9 = arith.constant 1 : i32
    %23 = vector.broadcast %c1_i32_9 : i32 to vector<10x18x1xi32>
    %24 = arith.subi %22, %23 : vector<10x18x1xi32>
    %c0_i32 = arith.constant 0 : i32
    %25 = vector.broadcast %c0_i32 : i32 to vector<10x18x1xi32>
    %26 = arith.cmpi sge, %21, %25 : vector<10x18x1xi32>
    %c16_i32 = arith.constant 16 : i32
    %27 = vector.broadcast %c16_i32 : i32 to vector<10x18x1xi32>
    %28 = arith.cmpi slt, %21, %27 : vector<10x18x1xi32>
    %29 = arith.andi %26, %28 : vector<10x18x1xi1>
    %c0_i32_10 = arith.constant 0 : i32
    %30 = vector.broadcast %c0_i32_10 : i32 to vector<10x18x1xi32>
    %31 = arith.cmpi sge, %24, %30 : vector<10x18x1xi32>
    %32 = arith.andi %29, %31 : vector<10x18x1xi1>
    %c16_i32_11 = arith.constant 16 : i32
    %33 = vector.broadcast %c16_i32_11 : i32 to vector<10x18x1xi32>
    %34 = arith.cmpi slt, %24, %33 : vector<10x18x1xi32>
    %35 = arith.andi %32, %34 : vector<10x18x1xi1>
    %cst_12 = arith.constant 0.000000e+00 : f32
    %36 = vector.shape_cast %35 : vector<10x18x1xi1> to vector<10x18x1xi1>
    %37 = vector.broadcast %36 : vector<10x18x1xi1> to vector<10x18x32xi1>
    %38 = vector.broadcast %cst_12 : f32 to vector<10x18x32xf32>
    %39 = arith.select %37, %17, %38 : vector<10x18x32xi1>, vector<10x18x32xf32>
    %40 = arith.truncf %39 : vector<10x18x32xf32> to vector<10x18x32xbf16>
    %41 = vector.extract_strided_slice %40 {offsets = [0, 0, 0], sizes = [8, 16, 32], strides = [1, 1, 1]} : vector<10x18x32xbf16> to vector<8x16x32xbf16>
    %42 = vector.extract_strided_slice %40 {offsets = [0, 1, 0], sizes = [8, 16, 32], strides = [1, 1, 1]} : vector<10x18x32xbf16> to vector<8x16x32xbf16>
    %43 = vector.extract_strided_slice %40 {offsets = [0, 2, 0], sizes = [8, 16, 32], strides = [1, 1, 1]} : vector<10x18x32xbf16> to vector<8x16x32xbf16>
    %44 = vector.extract_strided_slice %40 {offsets = [1, 0, 0], sizes = [8, 16, 32], strides = [1, 1, 1]} : vector<10x18x32xbf16> to vector<8x16x32xbf16>
    %45 = vector.extract_strided_slice %40 {offsets = [1, 1, 0], sizes = [8, 16, 32], strides = [1, 1, 1]} : vector<10x18x32xbf16> to vector<8x16x32xbf16>
    %46 = vector.extract_strided_slice %40 {offsets = [1, 2, 0], sizes = [8, 16, 32], strides = [1, 1, 1]} : vector<10x18x32xbf16> to vector<8x16x32xbf16>
    %47 = vector.extract_strided_slice %40 {offsets = [2, 0, 0], sizes = [8, 16, 32], strides = [1, 1, 1]} : vector<10x18x32xbf16> to vector<8x16x32xbf16>
    %48 = vector.extract_strided_slice %40 {offsets = [2, 1, 0], sizes = [8, 16, 32], strides = [1, 1, 1]} : vector<10x18x32xbf16> to vector<8x16x32xbf16>
    %49 = vector.extract_strided_slice %40 {offsets = [2, 2, 0], sizes = [8, 16, 32], strides = [1, 1, 1]} : vector<10x18x32xbf16> to vector<8x16x32xbf16>
    %50 = tpu.concatenate %41, %42, %43, %44, %45, %46, %47, %48, %49 in 2 : vector<8x16x32xbf16>, vector<8x16x32xbf16>, vector<8x16x32xbf16>, vector<8x16x32xbf16>, vector<8x16x32xbf16>, vector<8x16x32xbf16>, vector<8x16x32xbf16>, vector<8x16x32xbf16>, vector<8x16x32xbf16> -> vector<8x16x288xbf16>
    %51 = vector.shape_cast %50 : vector<8x16x288xbf16> to vector<128x288xbf16>
    %c0_13 = arith.constant 0 : index
    %c0_14 = arith.constant 0 : index
    %52 = vector.load %arg6[%c0_13, %c0_14] : memref<288x32xbf16, #tpu.memory_space<vmem>>, vector<288x32xbf16>
    %cst_15 = arith.constant dense<0.000000e+00> : vector<128x32xf32>
    %53 = tpu.matmul %51, %52, %cst_15 {dimension_numbers = #tpu.dot_dimension_numbers<[1], [0], [0], [1], [0, 0, 1, 1], [], []>} : vector<128x288xbf16>, vector<288x32xbf16>, vector<128x32xf32> -> vector<128x32xf32>
    %c0_16 = arith.constant 0 : index
    %c0_17 = arith.constant 0 : index
    %54 = vector.load %arg7[%c0_16, %c0_17] : memref<1x32xf32, #tpu.memory_space<vmem>>, vector<1x32xf32>
    %55 = vector.broadcast %54 : vector<1x32xf32> to vector<128x32xf32>
    %56 = arith.mulf %53, %55 : vector<128x32xf32>
    %c0_18 = arith.constant 0 : index
    %c0_19 = arith.constant 0 : index
    %57 = vector.load %arg8[%c0_18, %c0_19] : memref<1x32xf32, #tpu.memory_space<vmem>>, vector<1x32xf32>
    %58 = vector.broadcast %57 : vector<1x32xf32> to vector<128x32xf32>
    %59 = arith.addf %56, %58 : vector<128x32xf32>
    %cst_20 = arith.constant 0.000000e+00 : f32
    %60 = vector.broadcast %cst_20 : f32 to vector<128x32xf32>
    %61 = arith.maximumf %59, %60 : vector<128x32xf32>
    %62 = arith.truncf %61 : vector<128x32xf32> to vector<128x32xbf16>
    %c0_21 = arith.constant 0 : index
    %c0_22 = arith.constant 0 : index
    %63 = vector.load %arg9[%c0_21, %c0_22] : memref<32x128xbf16, #tpu.memory_space<vmem>>, vector<32x128xbf16>
    %cst_23 = arith.constant dense<0.000000e+00> : vector<128x128xf32>
    %64 = tpu.matmul %62, %63, %cst_23 {dimension_numbers = #tpu.dot_dimension_numbers<[1], [0], [0], [1], [0, 0, 1, 1], [], []>} : vector<128x32xbf16>, vector<32x128xbf16>, vector<128x128xf32> -> vector<128x128xf32>
    %c0_24 = arith.constant 0 : index
    %c0_25 = arith.constant 0 : index
    %65 = vector.load %arg10[%c0_24, %c0_25] : memref<1x128xf32, #tpu.memory_space<vmem>>, vector<1x128xf32>
    %66 = vector.broadcast %65 : vector<1x128xf32> to vector<128x128xf32>
    %67 = arith.mulf %64, %66 : vector<128x128xf32>
    %c0_26 = arith.constant 0 : index
    %c0_27 = arith.constant 0 : index
    %68 = vector.load %arg11[%c0_26, %c0_27] : memref<1x128xf32, #tpu.memory_space<vmem>>, vector<1x128xf32>
    %69 = vector.broadcast %68 : vector<1x128xf32> to vector<128x128xf32>
    %70 = arith.addf %67, %69 : vector<128x128xf32>
    %c1_i32_28 = arith.constant 1 : i32
    %71 = arith.addi %1, %c1_i32_28 : i32
    %c0_29 = arith.constant 0 : index
    %72 = arith.index_cast %71 : i32 to index
    %c1 = arith.constant 1 : index
    %c0_30 = arith.constant 0 : index
    %73 = vector.load %arg2[%c0_29, %72, %c1, %c0_30] : memref<1x18x18x128xf32, #tpu.memory_space<vmem>>, vector<1x8x16x128xf32>
    %74 = vector.shape_cast %73 : vector<1x8x16x128xf32> to vector<8x16x128xf32>
    %75 = vector.shape_cast %74 : vector<8x16x128xf32> to vector<128x128xf32>
    %76 = arith.addf %70, %75 : vector<128x128xf32>
    %cst_31 = arith.constant 0.000000e+00 : f32
    %77 = vector.broadcast %cst_31 : f32 to vector<128x128xf32>
    %78 = arith.maximumf %76, %77 : vector<128x128xf32>
    %79 = vector.shape_cast %78 : vector<128x128xf32> to vector<1x8x16x128xf32>
    %c0_32 = arith.constant 0 : index
    %c0_33 = arith.constant 0 : index
    %c0_34 = arith.constant 0 : index
    %c0_35 = arith.constant 0 : index
    %80 = vector.load %arg12[%c0_32, %c0_33, %c0_34, %c0_35] : memref<1x8x16x128xf32, #tpu.memory_space<vmem>>, vector<1x8x16x128xf32>
    tpu.vector_store %arg12[%c0_32, %c0_33, %c0_34, %c0_35], %79 {strides = array<i32>} : memref<1x8x16x128xf32, #tpu.memory_space<vmem>>, vector<1x8x16x128xf32>,
    return
  }
  func.func @transform_0(%arg0: i32, %arg1: i32) -> (i32, i32, i32, i32) {
    %c0_i32 = arith.constant 0 : i32
    %c0_i32_0 = arith.constant 0 : i32
    %c0_i32_1 = arith.constant 0 : i32
    %c0_i32_2 = arith.constant 0 : i32
    return %arg0, %c0_i32, %c0_i32_0, %c0_i32_1 : i32, i32, i32, i32
  }
  func.func @transform_1(%arg0: i32, %arg1: i32) -> (i32, i32) {
    %c0_i32 = arith.constant 0 : i32
    %c0_i32_0 = arith.constant 0 : i32
    %c0_i32_1 = arith.constant 0 : i32
    return %c0_i32, %c0_i32_0 : i32, i32
  }
  func.func @transform_2(%arg0: i32, %arg1: i32) -> (i32, i32) {
    %c0_i32 = arith.constant 0 : i32
    %c0_i32_0 = arith.constant 0 : i32
    %c0_i32_1 = arith.constant 0 : i32
    return %c0_i32, %c0_i32_0 : i32, i32
  }
  func.func @transform_3(%arg0: i32, %arg1: i32) -> (i32, i32) {
    %c0_i32 = arith.constant 0 : i32
    %c0_i32_0 = arith.constant 0 : i32
    %c0_i32_1 = arith.constant 0 : i32
    return %c0_i32, %c0_i32_0 : i32, i32
  }
  func.func @transform_4(%arg0: i32, %arg1: i32) -> (i32, i32) {
    %c0_i32 = arith.constant 0 : i32
    %c0_i32_0 = arith.constant 0 : i32
    %c0_i32_1 = arith.constant 0 : i32
    return %c0_i32, %c0_i32_0 : i32, i32
  }
  func.func @transform_5(%arg0: i32, %arg1: i32) -> (i32, i32) {
    %c0_i32 = arith.constant 0 : i32
    %c0_i32_0 = arith.constant 0 : i32
    %c0_i32_1 = arith.constant 0 : i32
    return %c0_i32, %c0_i32_0 : i32, i32
  }
  func.func @transform_6(%arg0: i32, %arg1: i32) -> (i32, i32) {
    %c0_i32 = arith.constant 0 : i32
    %c0_i32_0 = arith.constant 0 : i32
    %c0_i32_1 = arith.constant 0 : i32
    return %c0_i32, %c0_i32_0 : i32, i32
  }
  func.func @transform_7(%arg0: i32, %arg1: i32) -> (i32, i32) {
    %c0_i32 = arith.constant 0 : i32
    %c0_i32_0 = arith.constant 0 : i32
    %c0_i32_1 = arith.constant 0 : i32
    return %c0_i32, %c0_i32_0 : i32, i32
  }
  func.func @transform_8(%arg0: i32, %arg1: i32) -> (i32, i32) {
    %c0_i32 = arith.constant 0 : i32
    %c0_i32_0 = arith.constant 0 : i32
    %c0_i32_1 = arith.constant 0 : i32
    return %c0_i32, %c0_i32_0 : i32, i32
  }
  func.func @transform_9(%arg0: i32, %arg1: i32) -> (i32, i32) {
    %c0_i32 = arith.constant 0 : i32
    %c0_i32_0 = arith.constant 0 : i32
    %c0_i32_1 = arith.constant 0 : i32
    return %c0_i32, %c0_i32_0 : i32, i32
  }
  func.func @transform_10(%arg0: i32, %arg1: i32) -> (i32, i32, i32, i32) {
    %c0_i32 = arith.constant 0 : i32
    %c0_i32_0 = arith.constant 0 : i32
    %c0_i32_1 = arith.constant 0 : i32
    return %arg0, %arg1, %c0_i32, %c0_i32_0 : i32, i32, i32, i32
  }
}

</mosaic_0001>

<llo_original>
// kernel: tpu_custom_call.1
$region0: #{tpu_custom_call.1}
  #allocation0 [shape = 'u32[]', space=smem, size = 0x4, offset = 0x4, fixed_abs, tag = 'smem constant byte address 0x4 - core index']
  #allocation1 [shape = 'u32[144,128]{1,0:T(1,128)}', space=vmem, size = 0x12000, scoped, tag = 'internal scratch']
  %s0 = inlined_call_operand.vmem [shape: f32[2,18,18,128], index: 0, kind: input, shape index: {}]
  %s1 = inlined_call_operand.vmem [shape: bf16[128,32], index: 1, kind: input, shape index: {}]
  %s2 = inlined_call_operand.vmem [shape: f32[1,32], index: 2, kind: input, shape index: {}]
  %s3 = inlined_call_operand.vmem [shape: f32[1,32], index: 3, kind: input, shape index: {}]
  %s4 = inlined_call_operand.vmem [shape: bf16[288,32], index: 4, kind: input, shape index: {}]
  %s5 = inlined_call_operand.vmem [shape: f32[1,32], index: 5, kind: input, shape index: {}]
  %s6 = inlined_call_operand.vmem [shape: f32[1,32], index: 6, kind: input, shape index: {}]
  %s7 = inlined_call_operand.vmem [shape: bf16[32,128], index: 7, kind: input, shape index: {}]
  %s8 = inlined_call_operand.vmem [shape: f32[1,128], index: 8, kind: input, shape index: {}]
  %s9 = inlined_call_operand.vmem [shape: f32[1,128], index: 9, kind: input, shape index: {}]
  %s10 = inlined_call_operand.hbm [shape: f32[2,16,16,128], index: 10, kind: output, shape index: {}]
  %s11 = sld [smem:[#allocation0]]
  $region73: #{tpu_custom_call.1} parent=0
    _
  %s13 = ssub.s32 1, %s11
  %s14 = scalar_select 0, %s13, %s11
  $region1: #{tpu_custom_call.1} parent=0
    #allocation2 [shape = 'u8[131072]{0}', space=vmem, size = 0x20000, scoped, tag = 'output window, operand 0']
    #allocation3 [shape = 's32[2]{0}', space=sflag, size = 0x8, scoped, tag = 'scoped memory for tpu_custom_call.1']
    %15 = vsyncpa [#allocation3], 0
    %s16 = scalar_lea.sflag [#allocation3], 1
    %17 = vsyncpa %s16, 0
    loop: start=0, step=1, limit=6
    $region2: #{tpu_custom_call.1} parent=1 // loop_pre_header
      _
    $region3: #{tpu_custom_call.1} parent=1 // loop_header
      %s19 = sphi 0, %s23
      %p20 = scmp.ge.s32.totalorder %s19, 6
      %s26 = sphi 0, %s38
      %s27 = sphi 0, %s34
      %s28 = sphi 0, %s26
      %s29 = sphi 0, %s27
      %s30 = sphi 0, %s28
      %s31 = sphi 0, %s29
      %s41 = sphi 0, %s43
      %s44 = sphi 0, %s41
      %s45 = sphi 0, %s44
      %s61 = sphi 0, %s45
      %s65 = sphi 0, %s65
      %s67 = sphi 0, %s65
      %s68 = sphi 0, %s67
      %s82 = sphi 0, %s68
      %s86 = sphi 0, %s86
      %s88 = sphi 0, %s86
      %s89 = sphi 0, %s88
      %s103 = sphi 0, %s89
      %s107 = sphi 0, %s107
      %s109 = sphi 0, %s107
      %s110 = sphi 0, %s109
      %s124 = sphi 0, %s110
      %s128 = sphi 0, %s128
      %s130 = sphi 0, %s128
      %s131 = sphi 0, %s130
      %s145 = sphi 0, %s131
      %s149 = sphi 0, %s149
      %s151 = sphi 0, %s149
      %s152 = sphi 0, %s151
      %s166 = sphi 0, %s152
      %s170 = sphi 0, %s170
      %s172 = sphi 0, %s170
      %s173 = sphi 0, %s172
      %s187 = sphi 0, %s173
      %s191 = sphi 0, %s191
      %s193 = sphi 0, %s191
      %s194 = sphi 0, %s193
      %s208 = sphi 0, %s194
      %s212 = sphi 0, %s212
      %s214 = sphi 0, %s212
      %s215 = sphi 0, %s214
      %s229 = sphi 0, %s215
      %s233 = sphi 0, %s233
      %s235 = sphi 0, %s233
      %s236 = sphi 0, %s235
      %s250 = sphi 0, %s236
      %s258 = sphi 0, %s260
      %s261 = sphi 0, %s258
      %s262 = sphi 0, %s261
      %s278 = sphi 0, %s262
    $region4: #{tpu_custom_call.1} parent=1 // loop_header_branch
      %22 = sbr.rel (%p20) target = $region8
    $region5: #{tpu_custom_call.1} parent=1 // loop_body
      %s24 = ssub.s32 %s19, 1
      %s25 = ssub.s32 %s19, 2
      %s32 = sadd.s32 1, %s27
      %p33 = scmp.ge.s32.totalorder %s32, 2
      %s34 = scalar_select %p33, 0, %s32
      %s35 = sadd.s32 1, %s26
      %s36 = scalar_select %p33, %s35, %s26
      %p37 = scmp.ge.s32.totalorder %s36, 2
      %s38 = scalar_select %p37, 0, %s36
      %s39 = ssub.s32 %s26, %s38
      %p40 = scmp.eq.s32.totalorder %s39, 0
      %s42 = sadd.s32 %s41, 1
      %s43 = scalar_select %p40, %s41, %s42
      %p46 = pneg %p40
      %p47 = scmp.eq.s32.totalorder %s19, 3
      %p48 = por %p46, %p47
      %p49 = scmp.ne.s32.totalorder %s41, %s44
      %p50 = scmp.eq.s32.totalorder %s19, 0
      %p51 = por %p49, %p50
      %p52 = scmp.ne.s32.totalorder %s41, %s44
      %p53 = scmp.eq.s32.totalorder %s24, 3
      %p54 = por %p52, %p53
      %p55 = scmp.ne.s32.totalorder %s44, %s45
      %p56 = scmp.eq.s32.totalorder %s24, 0
      %p57 = por %p55, %p56
      %p58 = scmp.ne.s32.totalorder %s44, %s45
      %p59 = scmp.eq.s32.totalorder %s25, 3
      %p60 = por %p58, %p59
      %p62 = scmp.ne.s32.totalorder %s45, %s61
      %p63 = scmp.eq.s32.totalorder %s25, 0
      %p64 = por %p62, %p63
      %s66 = sadd.s32 %s65, 1
      %p69 = scmp.eq.s32.totalorder %s19, 3
      %p70 = scmp.ne.s32.totalorder %s65, %s67
      %p71 = scmp.eq.s32.totalorder %s19, 0
      %p72 = por %p70, %p71
      %p73 = scmp.ne.s32.totalorder %s65, %s67
      %p74 = scmp.eq.s32.totalorder %s24, 3
      %p75 = por %p73, %p74
      %p76 = scmp.ne.s32.totalorder %s67, %s68
      %p77 = scmp.eq.s32.totalorder %s24, 0
      %p78 = por %p76, %p77
      %p79 = scmp.ne.s32.totalorder %s67, %s68
      %p80 = scmp.eq.s32.totalorder %s25, 3
      %p81 = por %p79, %p80
      %p83 = scmp.ne.s32.totalorder %s68, %s82
      %p84 = scmp.eq.s32.totalorder %s25, 0
      %p85 = por %p83, %p84
      %s87 = sadd.s32 %s86, 1
      %p90 = scmp.eq.s32.totalorder %s19, 3
      %p91 = scmp.ne.s32.totalorder %s86, %s88
      %p92 = scmp.eq.s32.totalorder %s19, 0
      %p93 = por %p91, %p92
      %p94 = scmp.ne.s32.totalorder %s86, %s88
      %p95 = scmp.eq.s32.totalorder %s24, 3
      %p96 = por %p94, %p95
      %p97 = scmp.ne.s32.totalorder %s88, %s89
      %p98 = scmp.eq.s32.totalorder %s24, 0
      %p99 = por %p97, %p98
      %p100 = scmp.ne.s32.totalorder %s88, %s89
      %p101 = scmp.eq.s32.totalorder %s25, 3
      %p102 = por %p100, %p101
      %p104 = scmp.ne.s32.totalorder %s89, %s103
      %p105 = scmp.eq.s32.totalorder %s25, 0
      %p106 = por %p104, %p105
      %s108 = sadd.s32 %s107, 1
      %p111 = scmp.eq.s32.totalorder %s19, 3
      %p112 = scmp.ne.s32.totalorder %s107, %s109
      %p113 = scmp.eq.s32.totalorder %s19, 0
      %p114 = por %p112, %p113
      %p115 = scmp.ne.s32.totalorder %s107, %s109
      %p116 = scmp.eq.s32.totalorder %s24, 3
      %p117 = por %p115, %p116
      %p118 = scmp.ne.s32.totalorder %s109, %s110
      %p119 = scmp.eq.s32.totalorder %s24, 0
      %p120 = por %p118, %p119
      %p121 = scmp.ne.s32.totalorder %s109, %s110
      %p122 = scmp.eq.s32.totalorder %s25, 3
      %p123 = por %p121, %p122
      %p125 = scmp.ne.s32.totalorder %s110, %s124
      %p126 = scmp.eq.s32.totalorder %s25, 0
      %p127 = por %p125, %p126
      %s129 = sadd.s32 %s128, 1
      %p132 = scmp.eq.s32.totalorder %s19, 3
      %p133 = scmp.ne.s32.totalorder %s128, %s130
      %p134 = scmp.eq.s32.totalorder %s19, 0
      %p135 = por %p133, %p134
      %p136 = scmp.ne.s32.totalorder %s128, %s130
      %p137 = scmp.eq.s32.totalorder %s24, 3
      %p138 = por %p136, %p137
      %p139 = scmp.ne.s32.totalorder %s130, %s131
      %p140 = scmp.eq.s32.totalorder %s24, 0
      %p141 = por %p139, %p140
      %p142 = scmp.ne.s32.totalorder %s130, %s131
      %p143 = scmp.eq.s32.totalorder %s25, 3
      %p144 = por %p142, %p143
      %p146 = scmp.ne.s32.totalorder %s131, %s145
      %p147 = scmp.eq.s32.totalorder %s25, 0
      %p148 = por %p146, %p147
      %s150 = sadd.s32 %s149, 1
      %p153 = scmp.eq.s32.totalorder %s19, 3
      %p154 = scmp.ne.s32.totalorder %s149, %s151
      %p155 = scmp.eq.s32.totalorder %s19, 0
      %p156 = por %p154, %p155
      %p157 = scmp.ne.s32.totalorder %s149, %s151
      %p158 = scmp.eq.s32.totalorder %s24, 3
      %p159 = por %p157, %p158
      %p160 = scmp.ne.s32.totalorder %s151, %s152
      %p161 = scmp.eq.s32.totalorder %s24, 0
      %p162 = por %p160, %p161
      %p163 = scmp.ne.s32.totalorder %s151, %s152
      %p164 = scmp.eq.s32.totalorder %s25, 3
      %p165 = por %p163, %p164
      %p167 = scmp.ne.s32.totalorder %s152, %s166
      %p168 = scmp.eq.s32.totalorder %s25, 0
      %p169 = por %p167, %p168
      %s171 = sadd.s32 %s170, 1
      %p174 = scmp.eq.s32.totalorder %s19, 3
      %p175 = scmp.ne.s32.totalorder %s170, %s172
      %p176 = scmp.eq.s32.totalorder %s19, 0
      %p177 = por %p175, %p176
      %p178 = scmp.ne.s32.totalorder %s170, %s172
      %p179 = scmp.eq.s32.totalorder %s24, 3
      %p180 = por %p178, %p179
      %p181 = scmp.ne.s32.totalorder %s172, %s173
      %p182 = scmp.eq.s32.totalorder %s24, 0
      %p183 = por %p181, %p182
      %p184 = scmp.ne.s32.totalorder %s172, %s173
      %p185 = scmp.eq.s32.totalorder %s25, 3
      %p186 = por %p184, %p185
      %p188 = scmp.ne.s32.totalorder %s173, %s187
      %p189 = scmp.eq.s32.totalorder %s25, 0
      %p190 = por %p188, %p189
      %s192 = sadd.s32 %s191, 1
      %p195 = scmp.eq.s32.totalorder %s19, 3
      %p196 = scmp.ne.s32.totalorder %s191, %s193
      %p197 = scmp.eq.s32.totalorder %s19, 0
      %p198 = por %p196, %p197
      %p199 = scmp.ne.s32.totalorder %s191, %s193
      %p200 = scmp.eq.s32.totalorder %s24, 3
      %p201 = por %p199, %p200
      %p202 = scmp.ne.s32.totalorder %s193, %s194
      %p203 = scmp.eq.s32.totalorder %s24, 0
      %p204 = por %p202, %p203
      %p205 = scmp.ne.s32.totalorder %s193, %s194
      %p206 = scmp.eq.s32.totalorder %s25, 3
      %p207 = por %p205, %p206
      %p209 = scmp.ne.s32.totalorder %s194, %s208
      %p210 = scmp.eq.s32.totalorder %s25, 0
      %p211 = por %p209, %p210
      %s213 = sadd.s32 %s212, 1
      %p216 = scmp.eq.s32.totalorder %s19, 3
      %p217 = scmp.ne.s32.totalorder %s212, %s214
      %p218 = scmp.eq.s32.totalorder %s19, 0
      %p219 = por %p217, %p218
      %p220 = scmp.ne.s32.totalorder %s212, %s214
      %p221 = scmp.eq.s32.totalorder %s24, 3
      %p222 = por %p220, %p221
      %p223 = scmp.ne.s32.totalorder %s214, %s215
      %p224 = scmp.eq.s32.totalorder %s24, 0
      %p225 = por %p223, %p224
      %p226 = scmp.ne.s32.totalorder %s214, %s215
      %p227 = scmp.eq.s32.totalorder %s25, 3
      %p228 = por %p226, %p227
      %p230 = scmp.ne.s32.totalorder %s215, %s229
      %p231 = scmp.eq.s32.totalorder %s25, 0
      %p232 = por %p230, %p231
      %s234 = sadd.s32 %s233, 1
      %p237 = scmp.eq.s32.totalorder %s19, 3
      %p238 = scmp.ne.s32.totalorder %s233, %s235
      %p239 = scmp.eq.s32.totalorder %s19, 0
      %p240 = por %p238, %p239
      %p241 = scmp.ne.s32.totalorder %s233, %s235
      %p242 = scmp.eq.s32.totalorder %s24, 3
      %p243 = por %p241, %p242
      %p244 = scmp.ne.s32.totalorder %s235, %s236
      %p245 = scmp.eq.s32.totalorder %s24, 0
      %p246 = por %p244, %p245
      %p247 = scmp.ne.s32.totalorder %s235, %s236
      %p248 = scmp.eq.s32.totalorder %s25, 3
      %p249 = por %p247, %p248
      %p251 = scmp.ne.s32.totalorder %s236, %s250
      %p252 = scmp.eq.s32.totalorder %s25, 0
      %p253 = por %p251, %p252
      %s254 = ssub.s32 %s26, %s38
      %s255 = ssub.s32 %s27, %s34
      %s256 = sor.u32 %s254, %s255
      %p257 = scmp.eq.s32.totalorder %s256, 0
      %s259 = sadd.s32 %s258, 1
      %s260 = scalar_select %p257, %s258, %s259
      %p263 = pneg %p257
      %p264 = scmp.eq.s32.totalorder %s19, 3
      %p265 = por %p263, %p264
      %p266 = scmp.ne.s32.totalorder %s258, %s261
      %p267 = scmp.eq.s32.totalorder %s19, 0
      %p268 = por %p266, %p267
      %p269 = scmp.ne.s32.totalorder %s258, %s261
      %p270 = scmp.eq.s32.totalorder %s24, 3
      %p271 = por %p269, %p270
      %p272 = scmp.ne.s32.totalorder %s261, %s262
      %p273 = scmp.eq.s32.totalorder %s24, 0
      %p274 = por %p272, %p273
      %p275 = scmp.ne.s32.totalorder %s261, %s262
      %p276 = scmp.eq.s32.totalorder %s25, 3
      %p277 = por %p275, %p276
      %p279 = scmp.ne.s32.totalorder %s262, %s278
      %p280 = scmp.eq.s32.totalorder %s25, 0
      %p281 = por %p279, %p280
      %p282 = scmp.le.s32.totalorder 1, %s19
      %p283 = scmp.lt.s32.totalorder %s19, 5
      %p284 = pnand %p282, %p283
      %p285 = pneg %p284
      // Predicated region
      $region9: #{tpu_custom_call.1} parent=5 // pred_check
        _
      $region10: #{tpu_custom_call.1} parent=5 // pred_check_branch
        %287 = sbr.rel (%p284) target = $region12
      $region11: #{tpu_custom_call.1} parent=5 // pred_region
        %s288 = ssub.s32 %s19, 1
        // Predicated region
        $region13: #{tpu_custom_call.1} parent=11 // pred_check
          %p289 = pneg %p78
        $region14: #{tpu_custom_call.1} parent=11 // pred_check_branch
          %291 = sbr.rel (%p289) target = $region16
        $region15: #{tpu_custom_call.1} parent=11 // pred_region
          _
        $region16: #{tpu_custom_call.1} parent=11 // pred_fallthru
          _
        // Predicated region
        $region17: #{tpu_custom_call.1} parent=11 // pred_check
          %p292 = pneg %p99
        $region18: #{tpu_custom_call.1} parent=11 // pred_check_branch
          %294 = sbr.rel (%p292) target = $region20
        $region19: #{tpu_custom_call.1} parent=11 // pred_region
          _
        $region20: #{tpu_custom_call.1} parent=11 // pred_fallthru
          _
        // Predicated region
        $region21: #{tpu_custom_call.1} parent=11 // pred_check
          %p295 = pneg %p120
        $region22: #{tpu_custom_call.1} parent=11 // pred_check_branch
          %297 = sbr.rel (%p295) target = $region24
        $region23: #{tpu_custom_call.1} parent=11 // pred_region
          _
        $region24: #{tpu_custom_call.1} parent=11 // pred_fallthru
          _
        // Predicated region
        $region25: #{tpu_custom_call.1} parent=11 // pred_check
          %p298 = pneg %p141
        $region26: #{tpu_custom_call.1} parent=11 // pred_check_branch
          %300 = sbr.rel (%p298) target = $region28
        $region27: #{tpu_custom_call.1} parent=11 // pred_region
          _
        $region28: #{tpu_custom_call.1} parent=11 // pred_fallthru
          _
        // Predicated region
        $region29: #{tpu_custom_call.1} parent=11 // pred_check
          %p301 = pneg %p162
        $region30: #{tpu_custom_call.1} parent=11 // pred_check_branch
          %303 = sbr.rel (%p301) target = $region32
        $region31: #{tpu_custom_call.1} parent=11 // pred_region
          _
        $region32: #{tpu_custom_call.1} parent=11 // pred_fallthru
          _
        // Predicated region
        $region33: #{tpu_custom_call.1} parent=11 // pred_check
          %p304 = pneg %p183
        $region34: #{tpu_custom_call.1} parent=11 // pred_check_branch
          %306 = sbr.rel (%p304) target = $region36
        $region35: #{tpu_custom_call.1} parent=11 // pred_region
          _
        $region36: #{tpu_custom_call.1} parent=11 // pred_fallthru
          _
        // Predicated region
        $region37: #{tpu_custom_call.1} parent=11 // pred_check
          %p307 = pneg %p204
        $region38: #{tpu_custom_call.1} parent=11 // pred_check_branch
          %309 = sbr.rel (%p307) target = $region40
        $region39: #{tpu_custom_call.1} parent=11 // pred_region
          _
        $region40: #{tpu_custom_call.1} parent=11 // pred_fallthru
          _
        // Predicated region
        $region41: #{tpu_custom_call.1} parent=11 // pred_check
          %p310 = pneg %p225
        $region42: #{tpu_custom_call.1} parent=11 // pred_check_branch
          %312 = sbr.rel (%p310) target = $region44
        $region43: #{tpu_custom_call.1} parent=11 // pred_region
          _
        $region44: #{tpu_custom_call.1} parent=11 // pred_fallthru
          _
        // Predicated region
        $region45: #{tpu_custom_call.1} parent=11 // pred_check
          %p313 = pneg %p246
        $region46: #{tpu_custom_call.1} parent=11 // pred_check_branch
          %315 = sbr.rel (%p313) target = $region48
        $region47: #{tpu_custom_call.1} parent=11 // pred_region
          _
        $region48: #{tpu_custom_call.1} parent=11 // pred_fallthru
          _
      $region12: #{tpu_custom_call.1} parent=5 // pred_fallthru
        _
      %p316 = scmp.lt.s32.totalorder %s19, 4
      // Predicated region
      $region49: #{tpu_custom_call.1} parent=5 // pred_check
        %p317 = pneg %p316
      $region50: #{tpu_custom_call.1} parent=5 // pred_check_branch
        %319 = sbr.rel (%p317) target = $region52
      $region51: #{tpu_custom_call.1} parent=5 // pred_region
        // Predicated region
        $region53: #{tpu_custom_call.1} parent=51 // pred_check
          %p320 = pneg %p51
        $region54: #{tpu_custom_call.1} parent=51 // pred_check_branch
          %322 = sbr.rel (%p320) target = $region56
        $region55: #{tpu_custom_call.1} parent=51 // pred_region
          %p323 = scmp.lt.s32.totalorder %s26, 1
          %s324 = scalar_select %p323, %s26, 1
          %s325 = smul.addr %s324, 54
          %s326 = smul.addr %s325, 8
          %s327 = scalar_lea.vmem %s0, %s326
        $region56: #{tpu_custom_call.1} parent=51 // pred_fallthru
          _
      $region52: #{tpu_custom_call.1} parent=5 // pred_fallthru
        _
      %p328 = scmp.le.s32.totalorder 1, %s19
      %p329 = scmp.lt.s32.totalorder %s19, 5
      %p330 = pnand %p328, %p329
      %p331 = pneg %p330
      // Predicated region
      $region57: #{tpu_custom_call.1} parent=5 // pred_check
        _
      $region58: #{tpu_custom_call.1} parent=5 // pred_check_branch
        %333 = sbr.rel (%p330) target = $region60
      $region59: #{tpu_custom_call.1} parent=5 // pred_region
        %s334 = ssub.s32 %s19, 1
        %p335 = scmp.lt.s32.totalorder %s28, 1
        %s336 = scalar_select %p335, %s28, 1
        %s337 = smul.addr %s336, 54
        %s338 = smul.addr %s337, 8
        %s339 = scalar_lea.vmem %s0, %s338
        %p340 = pneg %p57
        %p341 = pneg %p54
        %p342 = pneg %p78
        %p343 = pneg %p75
        %p344 = pneg %p99
        %p345 = pneg %p96
        %p346 = pneg %p120
        %p347 = pneg %p117
        %p348 = pneg %p141
        %p349 = pneg %p138
        %p350 = pneg %p162
        %p351 = pneg %p159
        %p352 = pneg %p183
        %p353 = pneg %p180
        %p354 = pneg %p204
        %p355 = pneg %p201
        %p356 = pneg %p225
        %p357 = pneg %p222
        %p358 = pneg %p246
        %p359 = pneg %p243
        %p360 = pneg %p274
        %p361 = pneg %p271
        %s362 = sand.u32 %s261, 1
        %s363 = scalar_lea.sflag [#allocation3], %s362
        %s364 = sand.u32 %s261, 1
        %s365 = smul.addr %s364, 128
        %s366 = scalar_lea.vmem [#allocation2], %s365
        %p367 = scmp.lt.s32.totalorder %s28, 1
        %s368 = scalar_select %p367, %s28, 1
        %s369 = smul.addr %s368, 54
        %s370 = smul.addr %s369, 8
        %s371 = scalar_lea.vmem %s0, %s370
        %s372 = smul.u32 8, %s29
        %s374 = smul.u32 %s29, 8
        %s375 = smul.u32 %s374, 24
        %s376 = scalar_lea.vmem %s371, %s375
        %v377 = vld [vmem:[%s376] sm:$0xff]
        %v378 = vld [vmem:[%s376 + $0x8] sm:$0xff]
        %v379 = vld [vmem:[%s376 + $0x10] sm:$0x3]
        %v380 = vld [vmem:[%s376 + $0x18] sm:$0xff]
        %v381 = vld [vmem:[%s376 + $0x20] sm:$0xff]
        %v382 = vld [vmem:[%s376 + $0x28] sm:$0x3]
        %v383 = vld [vmem:[%s376 + $0x30] sm:$0xff]
        %v384 = vld [vmem:[%s376 + $0x38] sm:$0xff]
        %v385 = vld [vmem:[%s376 + $0x40] sm:$0x3]
        %v386 = vld [vmem:[%s376 + $0x48] sm:$0xff]
        %v387 = vld [vmem:[%s376 + $0x50] sm:$0xff]
        %v388 = vld [vmem:[%s376 + $0x58] sm:$0x3]
        %v389 = vld [vmem:[%s376 + $0x60] sm:$0xff]
        %v390 = vld [vmem:[%s376 + $0x68] sm:$0xff]
        %v391 = vld [vmem:[%s376 + $0x70] sm:$0x3]
        %v392 = vld [vmem:[%s376 + $0x78] sm:$0xff]
        %v393 = vld [vmem:[%s376 + $0x80] sm:$0xff]
        %v394 = vld [vmem:[%s376 + $0x88] sm:$0x3]
        %v395 = vld [vmem:[%s376 + $0x90] sm:$0xff]
        %v396 = vld [vmem:[%s376 + $0x98] sm:$0xff]
        %v397 = vld [vmem:[%s376 + $0xa0] sm:$0x3]
        %v398 = vld [vmem:[%s376 + $0xa8] sm:$0xff]
        %v399 = vld [vmem:[%s376 + $0xb0] sm:$0xff]
        %v400 = vld [vmem:[%s376 + $0xb8] sm:$0x3]
        %v401 = vld [vmem:[%s376 + $0xc0] sm:$0xff]
        %v402 = vld [vmem:[%s376 + $0xc8] sm:$0xff]
        %v403 = vld [vmem:[%s376 + $0xd0] sm:$0x3]
        %v404 = vld [vmem:[%s376 + $0xd8] sm:$0xff]
        %v405 = vld [vmem:[%s376 + $0xe0] sm:$0xff]
        %v406 = vld [vmem:[%s376 + $0xe8] sm:$0x3]
        %v437 = vcombine.high %v377, %v377
        %v439 = vunpack.c.l.s4 1983009808
        %v440 = vunpack.c.0.s8 %v439
        %v441 = vlaneseq
        %v442 = vshrl.u32 %v441, 7
        %v443 = vsub.s32 %v440, %v442
        %v444 = vrot.slane %v377, %v443
        %v446 = vunpack.c.l.s4 1983009808
        %v447 = vunpack.c.0.s8 %v446
        %v448 = vlaneseq
        %v449 = vshrl.u32 %v448, 7
        %v450 = vsub.s32 %v447, %v449
        %v451 = vrot.slane %v437, %v450
        %v452 = vcombine.high %v444, %v444
        %v453 = vcombine.high %v451, %v451
        %v454 = vcombine.high %v378, %v378
        %v456 = vunpack.c.l.s4 1983009808
        %v457 = vunpack.c.0.s8 %v456
        %v458 = vlaneseq
        %v459 = vshrl.u32 %v458, 7
        %v460 = vsub.s32 %v457, %v459
        %v461 = vrot.slane %v378, %v460
        %v463 = vunpack.c.l.s4 1983009808
        %v464 = vunpack.c.0.s8 %v463
        %v465 = vlaneseq
        %v466 = vshrl.u32 %v465, 7
        %v467 = vsub.s32 %v464, %v466
        %v468 = vrot.slane %v454, %v467
        %v469 = vcombine.high %v461, %v461
        %v470 = vcombine.high %v468, %v468
        %v472 = vunpack.c.l.s4 1983009808
        %v473 = vunpack.c.0.s8 %v472
        %v474 = vlaneseq
        %v475 = vshrl.u32 %v474, 7
        %v476 = vsub.s32 %v473, %v475
        %v477 = vrot.slane %v379, %v476
        %v478 = vcombine.high %v380, %v380
        %v480 = vunpack.c.l.s4 1983009808
        %v481 = vunpack.c.0.s8 %v480
        %v482 = vlaneseq
        %v483 = vshrl.u32 %v482, 7
        %v484 = vsub.s32 %v481, %v483
        %v485 = vrot.slane %v380, %v484
        %v487 = vunpack.c.l.s4 1983009808
        %v488 = vunpack.c.0.s8 %v487
        %v489 = vlaneseq
        %v490 = vshrl.u32 %v489, 7
        %v491 = vsub.s32 %v488, %v490
        %v492 = vrot.slane %v478, %v491
        %v493 = vcombine.high %v485, %v485
        %v494 = vcombine.high %v492, %v492
        %v495 = vcombine.high %v381, %v381
        %v497 = vunpack.c.l.s4 1983009808
        %v498 = vunpack.c.0.s8 %v497
        %v499 = vlaneseq
        %v500 = vshrl.u32 %v499, 7
        %v501 = vsub.s32 %v498, %v500
        %v502 = vrot.slane %v381, %v501
        %v504 = vunpack.c.l.s4 1983009808
        %v505 = vunpack.c.0.s8 %v504
        %v506 = vlaneseq
        %v507 = vshrl.u32 %v506, 7
        %v508 = vsub.s32 %v505, %v507
        %v509 = vrot.slane %v495, %v508
        %v510 = vcombine.high %v502, %v502
        %v511 = vcombine.high %v509, %v509
        %v513 = vunpack.c.l.s4 1983009808
        %v514 = vunpack.c.0.s8 %v513
        %v515 = vlaneseq
        %v516 = vshrl.u32 %v515, 7
        %v517 = vsub.s32 %v514, %v516
        %v518 = vrot.slane %v382, %v517
        %v519 = vcombine.high %v383, %v383
        %v521 = vunpack.c.l.s4 1983009808
        %v522 = vunpack.c.0.s8 %v521
        %v523 = vlaneseq
        %v524 = vshrl.u32 %v523, 7
        %v525 = vsub.s32 %v522, %v524
        %v526 = vrot.slane %v383, %v525
        %v528 = vunpack.c.l.s4 1983009808
        %v529 = vunpack.c.0.s8 %v528
        %v530 = vlaneseq
        %v531 = vshrl.u32 %v530, 7
        %v532 = vsub.s32 %v529, %v531
        %v533 = vrot.slane %v519, %v532
        %v534 = vcombine.high %v526, %v526
        %v535 = vcombine.high %v533, %v533
        %v536 = vcombine.high %v384, %v384
        %v538 = vunpack.c.l.s4 1983009808
        %v539 = vunpack.c.0.s8 %v538
        %v540 = vlaneseq
        %v541 = vshrl.u32 %v540, 7
        %v542 = vsub.s32 %v539, %v541
        %v543 = vrot.slane %v384, %v542
        %v545 = vunpack.c.l.s4 1983009808
        %v546 = vunpack.c.0.s8 %v545
        %v547 = vlaneseq
        %v548 = vshrl.u32 %v547, 7
        %v549 = vsub.s32 %v546, %v548
        %v550 = vrot.slane %v536, %v549
        %v551 = vcombine.high %v543, %v543
        %v552 = vcombine.high %v550, %v550
        %v554 = vunpack.c.l.s4 1983009808
        %v555 = vunpack.c.0.s8 %v554
        %v556 = vlaneseq
        %v557 = vshrl.u32 %v556, 7
        %v558 = vsub.s32 %v555, %v557
        %v559 = vrot.slane %v385, %v558
        %v560 = vcombine.high %v386, %v386
        %v562 = vunpack.c.l.s4 1983009808
        %v563 = vunpack.c.0.s8 %v562
        %v564 = vlaneseq
        %v565 = vshrl.u32 %v564, 7
        %v566 = vsub.s32 %v563, %v565
        %v567 = vrot.slane %v386, %v566
        %v569 = vunpack.c.l.s4 1983009808
        %v570 = vunpack.c.0.s8 %v569
        %v571 = vlaneseq
        %v572 = vshrl.u32 %v571, 7
        %v573 = vsub.s32 %v570, %v572
        %v574 = vrot.slane %v560, %v573
        %v575 = vcombine.high %v567, %v567
        %v576 = vcombine.high %v574, %v574
        %v577 = vcombine.high %v387, %v387
        %v579 = vunpack.c.l.s4 1983009808
        %v580 = vunpack.c.0.s8 %v579
        %v581 = vlaneseq
        %v582 = vshrl.u32 %v581, 7
        %v583 = vsub.s32 %v580, %v582
        %v584 = vrot.slane %v387, %v583
        %v586 = vunpack.c.l.s4 1983009808
        %v587 = vunpack.c.0.s8 %v586
        %v588 = vlaneseq
        %v589 = vshrl.u32 %v588, 7
        %v590 = vsub.s32 %v587, %v589
        %v591 = vrot.slane %v577, %v590
        %v592 = vcombine.high %v584, %v584
        %v593 = vcombine.high %v591, %v591
        %v595 = vunpack.c.l.s4 1983009808
        %v596 = vunpack.c.0.s8 %v595
        %v597 = vlaneseq
        %v598 = vshrl.u32 %v597, 7
        %v599 = vsub.s32 %v596, %v598
        %v600 = vrot.slane %v388, %v599
        %v601 = vcombine.high %v389, %v389
        %v603 = vunpack.c.l.s4 1983009808
        %v604 = vunpack.c.0.s8 %v603
        %v605 = vlaneseq
        %v606 = vshrl.u32 %v605, 7
        %v607 = vsub.s32 %v604, %v606
        %v608 = vrot.slane %v389, %v607
        %v610 = vunpack.c.l.s4 1983009808
        %v611 = vunpack.c.0.s8 %v610
        %v612 = vlaneseq
        %v613 = vshrl.u32 %v612, 7
        %v614 = vsub.s32 %v611, %v613
        %v615 = vrot.slane %v601, %v614
        %v616 = vcombine.high %v608, %v608
        %v617 = vcombine.high %v615, %v615
        %v618 = vcombine.high %v390, %v390
        %v620 = vunpack.c.l.s4 1983009808
        %v621 = vunpack.c.0.s8 %v620
        %v622 = vlaneseq
        %v623 = vshrl.u32 %v622, 7
        %v624 = vsub.s32 %v621, %v623
        %v625 = vrot.slane %v390, %v624
        %v627 = vunpack.c.l.s4 1983009808
        %v628 = vunpack.c.0.s8 %v627
        %v629 = vlaneseq
        %v630 = vshrl.u32 %v629, 7
        %v631 = vsub.s32 %v628, %v630
        %v632 = vrot.slane %v618, %v631
        %v633 = vcombine.high %v625, %v625
        %v634 = vcombine.high %v632, %v632
        %v636 = vunpack.c.l.s4 1983009808
        %v637 = vunpack.c.0.s8 %v636
        %v638 = vlaneseq
        %v639 = vshrl.u32 %v638, 7
        %v640 = vsub.s32 %v637, %v639
        %v641 = vrot.slane %v391, %v640
        %v642 = vcombine.high %v392, %v392
        %v644 = vunpack.c.l.s4 1983009808
        %v645 = vunpack.c.0.s8 %v644
        %v646 = vlaneseq
        %v647 = vshrl.u32 %v646, 7
        %v648 = vsub.s32 %v645, %v647
        %v649 = vrot.slane %v392, %v648
        %v651 = vunpack.c.l.s4 1983009808
        %v652 = vunpack.c.0.s8 %v651
        %v653 = vlaneseq
        %v654 = vshrl.u32 %v653, 7
        %v655 = vsub.s32 %v652, %v654
        %v656 = vrot.slane %v642, %v655
        %v657 = vcombine.high %v649, %v649
        %v658 = vcombine.high %v656, %v656
        %v659 = vcombine.high %v393, %v393
        %v661 = vunpack.c.l.s4 1983009808
        %v662 = vunpack.c.0.s8 %v661
        %v663 = vlaneseq
        %v664 = vshrl.u32 %v663, 7
        %v665 = vsub.s32 %v662, %v664
        %v666 = vrot.slane %v393, %v665
        %v668 = vunpack.c.l.s4 1983009808
        %v669 = vunpack.c.0.s8 %v668
        %v670 = vlaneseq
        %v671 = vshrl.u32 %v670, 7
        %v672 = vsub.s32 %v669, %v671
        %v673 = vrot.slane %v659, %v672
        %v674 = vcombine.high %v666, %v666
        %v675 = vcombine.high %v673, %v673
        %v677 = vunpack.c.l.s4 1983009808
        %v678 = vunpack.c.0.s8 %v677
        %v679 = vlaneseq
        %v680 = vshrl.u32 %v679, 7
        %v681 = vsub.s32 %v678, %v680
        %v682 = vrot.slane %v394, %v681
        %v683 = vcombine.high %v395, %v395
        %v685 = vunpack.c.l.s4 1983009808
        %v686 = vunpack.c.0.s8 %v685
        %v687 = vlaneseq
        %v688 = vshrl.u32 %v687, 7
        %v689 = vsub.s32 %v686, %v688
        %v690 = vrot.slane %v395, %v689
        %v692 = vunpack.c.l.s4 1983009808
        %v693 = vunpack.c.0.s8 %v692
        %v694 = vlaneseq
        %v695 = vshrl.u32 %v694, 7
        %v696 = vsub.s32 %v693, %v695
        %v697 = vrot.slane %v683, %v696
        %v698 = vcombine.high %v690, %v690
        %v699 = vcombine.high %v697, %v697
        %v700 = vcombine.high %v396, %v396
        %v702 = vunpack.c.l.s4 1983009808
        %v703 = vunpack.c.0.s8 %v702
        %v704 = vlaneseq
        %v705 = vshrl.u32 %v704, 7
        %v706 = vsub.s32 %v703, %v705
        %v707 = vrot.slane %v396, %v706
        %v709 = vunpack.c.l.s4 1983009808
        %v710 = vunpack.c.0.s8 %v709
        %v711 = vlaneseq
        %v712 = vshrl.u32 %v711, 7
        %v713 = vsub.s32 %v710, %v712
        %v714 = vrot.slane %v700, %v713
        %v715 = vcombine.high %v707, %v707
        %v716 = vcombine.high %v714, %v714
        %v718 = vunpack.c.l.s4 1983009808
        %v719 = vunpack.c.0.s8 %v718
        %v720 = vlaneseq
        %v721 = vshrl.u32 %v720, 7
        %v722 = vsub.s32 %v719, %v721
        %v723 = vrot.slane %v397, %v722
        %v724 = vcombine.high %v398, %v398
        %v726 = vunpack.c.l.s4 1983009808
        %v727 = vunpack.c.0.s8 %v726
        %v728 = vlaneseq
        %v729 = vshrl.u32 %v728, 7
        %v730 = vsub.s32 %v727, %v729
        %v731 = vrot.slane %v398, %v730
        %v733 = vunpack.c.l.s4 1983009808
        %v734 = vunpack.c.0.s8 %v733
        %v735 = vlaneseq
        %v736 = vshrl.u32 %v735, 7
        %v737 = vsub.s32 %v734, %v736
        %v738 = vrot.slane %v724, %v737
        %v739 = vcombine.high %v731, %v731
        %v740 = vcombine.high %v738, %v738
        %v741 = vcombine.high %v399, %v399
        %v743 = vunpack.c.l.s4 1983009808
        %v744 = vunpack.c.0.s8 %v743
        %v745 = vlaneseq
        %v746 = vshrl.u32 %v745, 7
        %v747 = vsub.s32 %v744, %v746
        %v748 = vrot.slane %v399, %v747
        %v750 = vunpack.c.l.s4 1983009808
        %v751 = vunpack.c.0.s8 %v750
        %v752 = vlaneseq
        %v753 = vshrl.u32 %v752, 7
        %v754 = vsub.s32 %v751, %v753
        %v755 = vrot.slane %v741, %v754
        %v756 = vcombine.high %v748, %v748
        %v757 = vcombine.high %v755, %v755
        %v759 = vunpack.c.l.s4 1983009808
        %v760 = vunpack.c.0.s8 %v759
        %v761 = vlaneseq
        %v762 = vshrl.u32 %v761, 7
        %v763 = vsub.s32 %v760, %v762
        %v764 = vrot.slane %v400, %v763
        %v765 = vcombine.high %v401, %v401
        %v767 = vunpack.c.l.s4 1983009808
        %v768 = vunpack.c.0.s8 %v767
        %v769 = vlaneseq
        %v770 = vshrl.u32 %v769, 7
        %v771 = vsub.s32 %v768, %v770
        %v772 = vrot.slane %v401, %v771
        %v774 = vunpack.c.l.s4 1983009808
        %v775 = vunpack.c.0.s8 %v774
        %v776 = vlaneseq
        %v777 = vshrl.u32 %v776, 7
        %v778 = vsub.s32 %v775, %v777
        %v779 = vrot.slane %v765, %v778
        %v780 = vcombine.high %v772, %v772
        %v781 = vcombine.high %v779, %v779
        %v782 = vcombine.high %v402, %v402
        %v784 = vunpack.c.l.s4 1983009808
        %v785 = vunpack.c.0.s8 %v784
        %v786 = vlaneseq
        %v787 = vshrl.u32 %v786, 7
        %v788 = vsub.s32 %v785, %v787
        %v789 = vrot.slane %v402, %v788
        %v791 = vunpack.c.l.s4 1983009808
        %v792 = vunpack.c.0.s8 %v791
        %v793 = vlaneseq
        %v794 = vshrl.u32 %v793, 7
        %v795 = vsub.s32 %v792, %v794
        %v796 = vrot.slane %v782, %v795
        %v797 = vcombine.high %v789, %v789
        %v798 = vcombine.high %v796, %v796
        %v800 = vunpack.c.l.s4 1983009808
        %v801 = vunpack.c.0.s8 %v800
        %v802 = vlaneseq
        %v803 = vshrl.u32 %v802, 7
        %v804 = vsub.s32 %v801, %v803
        %v805 = vrot.slane %v403, %v804
        %v806 = vcombine.high %v404, %v404
        %v808 = vunpack.c.l.s4 1983009808
        %v809 = vunpack.c.0.s8 %v808
        %v810 = vlaneseq
        %v811 = vshrl.u32 %v810, 7
        %v812 = vsub.s32 %v809, %v811
        %v813 = vrot.slane %v404, %v812
        %v815 = vunpack.c.l.s4 1983009808
        %v816 = vunpack.c.0.s8 %v815
        %v817 = vlaneseq
        %v818 = vshrl.u32 %v817, 7
        %v819 = vsub.s32 %v816, %v818
        %v820 = vrot.slane %v806, %v819
        %v821 = vcombine.high %v813, %v813
        %v822 = vcombine.high %v820, %v820
        %v823 = vcombine.high %v405, %v405
        %v825 = vunpack.c.l.s4 1983009808
        %v826 = vunpack.c.0.s8 %v825
        %v827 = vlaneseq
        %v828 = vshrl.u32 %v827, 7
        %v829 = vsub.s32 %v826, %v828
        %v830 = vrot.slane %v405, %v829
        %v832 = vunpack.c.l.s4 1983009808
        %v833 = vunpack.c.0.s8 %v832
        %v834 = vlaneseq
        %v835 = vshrl.u32 %v834, 7
        %v836 = vsub.s32 %v833, %v835
        %v837 = vrot.slane %v823, %v836
        %v838 = vcombine.high %v830, %v830
        %v839 = vcombine.high %v837, %v837
        %v841 = vunpack.c.l.s4 1983009808
        %v842 = vunpack.c.0.s8 %v841
        %v843 = vlaneseq
        %v844 = vshrl.u32 %v843, 7
        %v845 = vsub.s32 %v842, %v844
        %v846 = vrot.slane %v406, %v845
        %v847 = vcombine.low %v444, %v452
        %v848 = vcombine.low %v451, %v453
        %v850 = vunpack.c.l.s4 1983009808
        %v851 = vunpack.c.0.s8 %v850
        %v852 = vlaneseq
        %v853 = vshrl.u32 %v852, 7
        %v854 = vsub.s32 %v851, %v853
        %v855 = vrot.slane %v847, %v854
        %v857 = vunpack.c.l.s4 1983009808
        %v858 = vunpack.c.0.s8 %v857
        %v859 = vlaneseq
        %v860 = vshrl.u32 %v859, 7
        %v861 = vsub.s32 %v858, %v860
        %v862 = vrot.slane %v848, %v861
        %v863 = vcombine.low %v855, %v862
        %v864 = vcombine.low %v461, %v469
        %v865 = vcombine.low %v468, %v470
        %v867 = vunpack.c.l.s4 1983009808
        %v868 = vunpack.c.0.s8 %v867
        %v869 = vlaneseq
        %v870 = vshrl.u32 %v869, 7
        %v871 = vsub.s32 %v868, %v870
        %v872 = vrot.slane %v864, %v871
        %v874 = vunpack.c.l.s4 1983009808
        %v875 = vunpack.c.0.s8 %v874
        %v876 = vlaneseq
        %v877 = vshrl.u32 %v876, 7
        %v878 = vsub.s32 %v875, %v877
        %v879 = vrot.slane %v865, %v878
        %v880 = vcombine.low %v872, %v879
        %v881 = vcombine.low %v477, %v485
        %v882 = vcombine.low %v493, %v492
        %v884 = vunpack.c.l.s4 1983009808
        %v885 = vunpack.c.0.s8 %v884
        %v886 = vlaneseq
        %v887 = vshrl.u32 %v886, 7
        %v888 = vsub.s32 %v885, %v887
        %v889 = vrot.slane %v881, %v888
        %v891 = vunpack.c.l.s4 1983009808
        %v892 = vunpack.c.0.s8 %v891
        %v893 = vlaneseq
        %v894 = vshrl.u32 %v893, 7
        %v895 = vsub.s32 %v892, %v894
        %v896 = vrot.slane %v882, %v895
        %v897 = vcombine.low %v889, %v896
        %v898 = vcombine.low %v494, %v502
        %v899 = vcombine.low %v510, %v509
        %v901 = vunpack.c.l.s4 1983009808
        %v902 = vunpack.c.0.s8 %v901
        %v903 = vlaneseq
        %v904 = vshrl.u32 %v903, 7
        %v905 = vsub.s32 %v902, %v904
        %v906 = vrot.slane %v898, %v905
        %v908 = vunpack.c.l.s4 1983009808
        %v909 = vunpack.c.0.s8 %v908
        %v910 = vlaneseq
        %v911 = vshrl.u32 %v910, 7
        %v912 = vsub.s32 %v909, %v911
        %v913 = vrot.slane %v899, %v912
        %v914 = vcombine.low %v906, %v913
        %v915 = vcombine.low %v511, %v518
        %v916 = vcombine.low %v526, %v534
        %v918 = vunpack.c.l.s4 1983009808
        %v919 = vunpack.c.0.s8 %v918
        %v920 = vlaneseq
        %v921 = vshrl.u32 %v920, 7
        %v922 = vsub.s32 %v919, %v921
        %v923 = vrot.slane %v915, %v922
        %v925 = vunpack.c.l.s4 1983009808
        %v926 = vunpack.c.0.s8 %v925
        %v927 = vlaneseq
        %v928 = vshrl.u32 %v927, 7
        %v929 = vsub.s32 %v926, %v928
        %v930 = vrot.slane %v916, %v929
        %v931 = vcombine.low %v923, %v930
        %v932 = vcombine.low %v533, %v535
        %v933 = vcombine.low %v543, %v551
        %v935 = vunpack.c.l.s4 1983009808
        %v936 = vunpack.c.0.s8 %v935
        %v937 = vlaneseq
        %v938 = vshrl.u32 %v937, 7
        %v939 = vsub.s32 %v936, %v938
        %v940 = vrot.slane %v932, %v939
        %v942 = vunpack.c.l.s4 1983009808
        %v943 = vunpack.c.0.s8 %v942
        %v944 = vlaneseq
        %v945 = vshrl.u32 %v944, 7
        %v946 = vsub.s32 %v943, %v945
        %v947 = vrot.slane %v933, %v946
        %v948 = vcombine.low %v940, %v947
        %v949 = vcombine.low %v550, %v552
        %v950 = vcombine.low %v559, %v567
        %v952 = vunpack.c.l.s4 1983009808
        %v953 = vunpack.c.0.s8 %v952
        %v954 = vlaneseq
        %v955 = vshrl.u32 %v954, 7
        %v956 = vsub.s32 %v953, %v955
        %v957 = vrot.slane %v949, %v956
        %v959 = vunpack.c.l.s4 1983009808
        %v960 = vunpack.c.0.s8 %v959
        %v961 = vlaneseq
        %v962 = vshrl.u32 %v961, 7
        %v963 = vsub.s32 %v960, %v962
        %v964 = vrot.slane %v950, %v963
        %v965 = vcombine.low %v957, %v964
        %v966 = vcombine.low %v575, %v574
        %v967 = vcombine.low %v576, %v584
        %v969 = vunpack.c.l.s4 1983009808
        %v970 = vunpack.c.0.s8 %v969
        %v971 = vlaneseq
        %v972 = vshrl.u32 %v971, 7
        %v973 = vsub.s32 %v970, %v972
        %v974 = vrot.slane %v966, %v973
        %v976 = vunpack.c.l.s4 1983009808
        %v977 = vunpack.c.0.s8 %v976
        %v978 = vlaneseq
        %v979 = vshrl.u32 %v978, 7
        %v980 = vsub.s32 %v977, %v979
        %v981 = vrot.slane %v967, %v980
        %v982 = vcombine.low %v974, %v981
        %v983 = vcombine.low %v592, %v591
        %v984 = vcombine.low %v593, %v600
        %v986 = vunpack.c.l.s4 1983009808
        %v987 = vunpack.c.0.s8 %v986
        %v988 = vlaneseq
        %v989 = vshrl.u32 %v988, 7
        %v990 = vsub.s32 %v987, %v989
        %v991 = vrot.slane %v983, %v990
        %v993 = vunpack.c.l.s4 1983009808
        %v994 = vunpack.c.0.s8 %v993
        %v995 = vlaneseq
        %v996 = vshrl.u32 %v995, 7
        %v997 = vsub.s32 %v994, %v996
        %v998 = vrot.slane %v984, %v997
        %v999 = vcombine.low %v991, %v998
        %v1000 = vcombine.low %v608, %v616
        %v1001 = vcombine.low %v615, %v617
        %v1003 = vunpack.c.l.s4 1983009808
        %v1004 = vunpack.c.0.s8 %v1003
        %v1005 = vlaneseq
        %v1006 = vshrl.u32 %v1005, 7
        %v1007 = vsub.s32 %v1004, %v1006
        %v1008 = vrot.slane %v1000, %v1007
        %v1010 = vunpack.c.l.s4 1983009808
        %v1011 = vunpack.c.0.s8 %v1010
        %v1012 = vlaneseq
        %v1013 = vshrl.u32 %v1012, 7
        %v1014 = vsub.s32 %v1011, %v1013
        %v1015 = vrot.slane %v1001, %v1014
        %v1016 = vcombine.low %v1008, %v1015
        %v1017 = vcombine.low %v625, %v633
        %v1018 = vcombine.low %v632, %v634
        %v1020 = vunpack.c.l.s4 1983009808
        %v1021 = vunpack.c.0.s8 %v1020
        %v1022 = vlaneseq
        %v1023 = vshrl.u32 %v1022, 7
        %v1024 = vsub.s32 %v1021, %v1023
        %v1025 = vrot.slane %v1017, %v1024
        %v1027 = vunpack.c.l.s4 1983009808
        %v1028 = vunpack.c.0.s8 %v1027
        %v1029 = vlaneseq
        %v1030 = vshrl.u32 %v1029, 7
        %v1031 = vsub.s32 %v1028, %v1030
        %v1032 = vrot.slane %v1018, %v1031
        %v1033 = vcombine.low %v1025, %v1032
        %v1034 = vcombine.low %v641, %v649
        %v1035 = vcombine.low %v657, %v656
        %v1037 = vunpack.c.l.s4 1983009808
        %v1038 = vunpack.c.0.s8 %v1037
        %v1039 = vlaneseq
        %v1040 = vshrl.u32 %v1039, 7
        %v1041 = vsub.s32 %v1038, %v1040
        %v1042 = vrot.slane %v1034, %v1041
        %v1044 = vunpack.c.l.s4 1983009808
        %v1045 = vunpack.c.0.s8 %v1044
        %v1046 = vlaneseq
        %v1047 = vshrl.u32 %v1046, 7
        %v1048 = vsub.s32 %v1045, %v1047
        %v1049 = vrot.slane %v1035, %v1048
        %v1050 = vcombine.low %v1042, %v1049
        %v1051 = vcombine.low %v658, %v666
        %v1052 = vcombine.low %v674, %v673
        %v1054 = vunpack.c.l.s4 1983009808
        %v1055 = vunpack.c.0.s8 %v1054
        %v1056 = vlaneseq
        %v1057 = vshrl.u32 %v1056, 7
        %v1058 = vsub.s32 %v1055, %v1057
        %v1059 = vrot.slane %v1051, %v1058
        %v1061 = vunpack.c.l.s4 1983009808
        %v1062 = vunpack.c.0.s8 %v1061
        %v1063 = vlaneseq
        %v1064 = vshrl.u32 %v1063, 7
        %v1065 = vsub.s32 %v1062, %v1064
        %v1066 = vrot.slane %v1052, %v1065
        %v1067 = vcombine.low %v1059, %v1066
        %v1068 = vcombine.low %v675, %v682
        %v1069 = vcombine.low %v690, %v698
        %v1071 = vunpack.c.l.s4 1983009808
        %v1072 = vunpack.c.0.s8 %v1071
        %v1073 = vlaneseq
        %v1074 = vshrl.u32 %v1073, 7
        %v1075 = vsub.s32 %v1072, %v1074
        %v1076 = vrot.slane %v1068, %v1075
        %v1078 = vunpack.c.l.s4 1983009808
        %v1079 = vunpack.c.0.s8 %v1078
        %v1080 = vlaneseq
        %v1081 = vshrl.u32 %v1080, 7
        %v1082 = vsub.s32 %v1079, %v1081
        %v1083 = vrot.slane %v1069, %v1082
        %v1084 = vcombine.low %v1076, %v1083
        %v1085 = vcombine.low %v697, %v699
        %v1086 = vcombine.low %v707, %v715
        %v1088 = vunpack.c.l.s4 1983009808
        %v1089 = vunpack.c.0.s8 %v1088
        %v1090 = vlaneseq
        %v1091 = vshrl.u32 %v1090, 7
        %v1092 = vsub.s32 %v1089, %v1091
        %v1093 = vrot.slane %v1085, %v1092
        %v1095 = vunpack.c.l.s4 1983009808
        %v1096 = vunpack.c.0.s8 %v1095
        %v1097 = vlaneseq
        %v1098 = vshrl.u32 %v1097, 7
        %v1099 = vsub.s32 %v1096, %v1098
        %v1100 = vrot.slane %v1086, %v1099
        %v1101 = vcombine.low %v1093, %v1100
        %v1102 = vcombine.low %v714, %v716
        %v1103 = vcombine.low %v723, %v731
        %v1105 = vunpack.c.l.s4 1983009808
        %v1106 = vunpack.c.0.s8 %v1105
        %v1107 = vlaneseq
        %v1108 = vshrl.u32 %v1107, 7
        %v1109 = vsub.s32 %v1106, %v1108
        %v1110 = vrot.slane %v1102, %v1109
        %v1112 = vunpack.c.l.s4 1983009808
        %v1113 = vunpack.c.0.s8 %v1112
        %v1114 = vlaneseq
        %v1115 = vshrl.u32 %v1114, 7
        %v1116 = vsub.s32 %v1113, %v1115
        %v1117 = vrot.slane %v1103, %v1116
        %v1118 = vcombine.low %v1110, %v1117
        %v1119 = vcombine.low %v739, %v738
        %v1120 = vcombine.low %v740, %v748
        %v1122 = vunpack.c.l.s4 1983009808
        %v1123 = vunpack.c.0.s8 %v1122
        %v1124 = vlaneseq
        %v1125 = vshrl.u32 %v1124, 7
        %v1126 = vsub.s32 %v1123, %v1125
        %v1127 = vrot.slane %v1119, %v1126
        %v1129 = vunpack.c.l.s4 1983009808
        %v1130 = vunpack.c.0.s8 %v1129
        %v1131 = vlaneseq
        %v1132 = vshrl.u32 %v1131, 7
        %v1133 = vsub.s32 %v1130, %v1132
        %v1134 = vrot.slane %v1120, %v1133
        %v1135 = vcombine.low %v1127, %v1134
        %v1136 = vcombine.low %v756, %v755
        %v1137 = vcombine.low %v757, %v764
        %v1139 = vunpack.c.l.s4 1983009808
        %v1140 = vunpack.c.0.s8 %v1139
        %v1141 = vlaneseq
        %v1142 = vshrl.u32 %v1141, 7
        %v1143 = vsub.s32 %v1140, %v1142
        %v1144 = vrot.slane %v1136, %v1143
        %v1146 = vunpack.c.l.s4 1983009808
        %v1147 = vunpack.c.0.s8 %v1146
        %v1148 = vlaneseq
        %v1149 = vshrl.u32 %v1148, 7
        %v1150 = vsub.s32 %v1147, %v1149
        %v1151 = vrot.slane %v1137, %v1150
        %v1152 = vcombine.low %v1144, %v1151
        %v1153 = vcombine.low %v772, %v780
        %v1154 = vcombine.low %v779, %v781
        %v1156 = vunpack.c.l.s4 1983009808
        %v1157 = vunpack.c.0.s8 %v1156
        %v1158 = vlaneseq
        %v1159 = vshrl.u32 %v1158, 7
        %v1160 = vsub.s32 %v1157, %v1159
        %v1161 = vrot.slane %v1153, %v1160
        %v1163 = vunpack.c.l.s4 1983009808
        %v1164 = vunpack.c.0.s8 %v1163
        %v1165 = vlaneseq
        %v1166 = vshrl.u32 %v1165, 7
        %v1167 = vsub.s32 %v1164, %v1166
        %v1168 = vrot.slane %v1154, %v1167
        %v1169 = vcombine.low %v1161, %v1168
        %v1170 = vcombine.low %v789, %v797
        %v1171 = vcombine.low %v796, %v798
        %v1173 = vunpack.c.l.s4 1983009808
        %v1174 = vunpack.c.0.s8 %v1173
        %v1175 = vlaneseq
        %v1176 = vshrl.u32 %v1175, 7
        %v1177 = vsub.s32 %v1174, %v1176
        %v1178 = vrot.slane %v1170, %v1177
        %v1180 = vunpack.c.l.s4 1983009808
        %v1181 = vunpack.c.0.s8 %v1180
        %v1182 = vlaneseq
        %v1183 = vshrl.u32 %v1182, 7
        %v1184 = vsub.s32 %v1181, %v1183
        %v1185 = vrot.slane %v1171, %v1184
        %v1186 = vcombine.low %v1178, %v1185
        %v1187 = vcombine.low %v805, %v813
        %v1188 = vcombine.low %v821, %v820
        %v1190 = vunpack.c.l.s4 1983009808
        %v1191 = vunpack.c.0.s8 %v1190
        %v1192 = vlaneseq
        %v1193 = vshrl.u32 %v1192, 7
        %v1194 = vsub.s32 %v1191, %v1193
        %v1195 = vrot.slane %v1187, %v1194
        %v1197 = vunpack.c.l.s4 1983009808
        %v1198 = vunpack.c.0.s8 %v1197
        %v1199 = vlaneseq
        %v1200 = vshrl.u32 %v1199, 7
        %v1201 = vsub.s32 %v1198, %v1200
        %v1202 = vrot.slane %v1188, %v1201
        %v1203 = vcombine.low %v1195, %v1202
        %v1204 = vcombine.low %v822, %v830
        %v1205 = vcombine.low %v838, %v837
        %v1207 = vunpack.c.l.s4 1983009808
        %v1208 = vunpack.c.0.s8 %v1207
        %v1209 = vlaneseq
        %v1210 = vshrl.u32 %v1209, 7
        %v1211 = vsub.s32 %v1208, %v1210
        %v1212 = vrot.slane %v1204, %v1211
        %v1214 = vunpack.c.l.s4 1983009808
        %v1215 = vunpack.c.0.s8 %v1214
        %v1216 = vlaneseq
        %v1217 = vshrl.u32 %v1216, 7
        %v1218 = vsub.s32 %v1215, %v1217
        %v1219 = vrot.slane %v1205, %v1218
        %v1220 = vcombine.low %v1212, %v1219
        %v1221 = vcombine.low %v839, %v846
        %v1223 = vunpack.c.l.s4 1983009808
        %v1224 = vunpack.c.0.s8 %v1223
        %v1225 = vlaneseq
        %v1226 = vshrl.u32 %v1225, 7
        %v1227 = vsub.s32 %v1224, %v1226
        %v1228 = vrot.slane %v1221, %v1227
        %v1252 = vpack.c.bf16 %v880, %v863
        %v1253 = vpack.c.bf16 %v914, %v897
        %v1254 = vpack.c.bf16 %v948, %v931
        %v1255 = vpack.c.bf16 %v982, %v965
        %v1256 = vpack.c.bf16 %v1016, %v999
        %v1257 = vpack.c.bf16 %v1050, %v1033
        %v1258 = vpack.c.bf16 %v1084, %v1067
        %v1259 = vpack.c.bf16 %v1118, %v1101
        %v1260 = vpack.c.bf16 %v1152, %v1135
        %v1261 = vpack.c.bf16 %v1186, %v1169
        %v1262 = vpack.c.bf16 %v1220, %v1203
        %v1263 = vpack.c.bf16 %v1228, %v1228
        %v1264 = vld [vmem:[%s1] sm:$0xf]
        %v1265 = vld [vmem:[%s1 + $0x4] sm:$0xf]
        %v1266 = vld [vmem:[%s1 + $0x8] sm:$0xf]
        %v1267 = vld [vmem:[%s1 + $0xc] sm:$0xf]
        %v1268 = vld [vmem:[%s1 + $0x10] sm:$0xf]
        %v1269 = vld [vmem:[%s1 + $0x14] sm:$0xf]
        %v1270 = vld [vmem:[%s1 + $0x18] sm:$0xf]
        %v1271 = vld [vmem:[%s1 + $0x1c] sm:$0xf]
        %v1272 = vld [vmem:[%s1 + $0x20] sm:$0xf]
        %v1273 = vld [vmem:[%s1 + $0x24] sm:$0xf]
        %v1274 = vld [vmem:[%s1 + $0x28] sm:$0xf]
        %v1275 = vld [vmem:[%s1 + $0x2c] sm:$0xf]
        %v1276 = vld [vmem:[%s1 + $0x30] sm:$0xf]
        %v1277 = vld [vmem:[%s1 + $0x34] sm:$0xf]
        %v1278 = vld [vmem:[%s1 + $0x38] sm:$0xf]
        %v1279 = vld [vmem:[%s1 + $0x3c] sm:$0xf]
        %v1296 = vunpack.c.l.b16 %v1264
        %v1297 = vunpack.c.l.b16 %v1265
        %v1298 = vunpack.c.l.b16 %v1266
        %v1299 = vunpack.c.l.b16 %v1267
        %v1300 = vunpack.c.l.b16 %v1268
        %v1301 = vunpack.c.l.b16 %v1269
        %v1302 = vunpack.c.l.b16 %v1270
        %v1303 = vunpack.c.l.b16 %v1271
        %v1304 = vunpack.c.l.b16 %v1272
        %v1305 = vunpack.c.l.b16 %v1273
        %v1306 = vunpack.c.l.b16 %v1274
        %v1307 = vunpack.c.l.b16 %v1275
        %v1308 = vunpack.c.l.b16 %v1276
        %v1309 = vunpack.c.l.b16 %v1277
        %v1310 = vunpack.c.l.b16 %v1278
        %v1311 = vunpack.c.l.b16 %v1279
        %v1312 = vpack.c.b16 %v1297, %v1296
        %v1313 = vpack.c.b16 %v1299, %v1298
        %v1314 = vpack.c.b16 %v1301, %v1300
        %v1315 = vpack.c.b16 %v1303, %v1302
        %v1316 = vpack.c.b16 %v1305, %v1304
        %v1317 = vpack.c.b16 %v1307, %v1306
        %v1318 = vpack.c.b16 %v1309, %v1308
        %v1319 = vpack.c.b16 %v1311, %v1310
        %1328 = vmatprep.subr.bf16.mxu0 0
        %1329 = vmatpush1.bf16.msra.mxu0 %v1312
        %1330 = vmatprep.subr.bf16.mxu0 0
        %1331 = vmatpush1.bf16.msra.mxu0 %v1313
        %1332 = vmatprep.subr.bf16.mxu0 0
        %1333 = vmatpush1.bf16.msra.mxu0 %v1314
        %1334 = vmatprep.subr.bf16.mxu0 0
        %1335 = vmatpush1.bf16.msra.mxu0 %v1315
        %1336 = vmatprep.subr.bf16.mxu0 0
        %1337 = vmatpush1.bf16.msra.mxu0 %v1316
        %1338 = vmatprep.subr.bf16.mxu0 0
        %1339 = vmatpush1.bf16.msra.mxu0 %v1317
        %1340 = vmatprep.subr.bf16.mxu0 0
        %1341 = vmatpush1.bf16.msra.mxu0 %v1318
        %1342 = vmatprep.subr.bf16.mxu0 0
        %1343 = vmatpush1.bf16.msra.mxu0 %v1319
        %1344 = vmatprep.subr.bf16.mxu0 0
        %1345 = vmatpush1.bf16.msra.mxu0 0
        %1346 = vmatprep.subr.bf16.mxu0 0
        %1347 = vmatpush1.bf16.msra.mxu0 0
        %1348 = vmatprep.subr.bf16.mxu0 0
        %1349 = vmatpush1.bf16.msra.mxu0 0
        %1350 = vmatprep.subr.bf16.mxu0 0
        %1351 = vmatpush1.bf16.msra.mxu0 0
        %1352 = vmatprep.subr.bf16.mxu0 0
        %1353 = vmatpush1.bf16.msra.mxu0 0
        %1354 = vmatprep.subr.bf16.mxu0 0
        %1355 = vmatpush1.bf16.msra.mxu0 0
        %1356 = vmatprep.subr.bf16.mxu0 0
        %1357 = vmatpush1.bf16.msra.mxu0 0
        %1358 = vmatprep.subr.bf16.mxu0 0
        %1359 = vmatpush1.bf16.msra.mxu0 0
        %1360 = vmatprep.mubr.bf16.mxu0 0
        %1361 = vmatmul.mubr.bf16.gmra.mrb[0].mxu0 %v1252
        %v1362 = vpop.f32.mrb[0].mxu0
        %v1363 = vadd.f32 0.0, %v1362
        %v1364 = vpop.f32.mrb[0].mxu0
        %v1365 = vpop.f32.mrb[0].mxu0
        %v1366 = vadd.f32 0.0, %v1365
        %v1367 = vpop.f32.mrb[0].mxu0
        %1368 = vmatprep.mubr.bf16.mxu0 0
        %1369 = vmatmul.mubr.bf16.gmra.mrb[0].mxu0 %v1253
        %v1370 = vpop.f32.mrb[0].mxu0
        %v1371 = vadd.f32 0.0, %v1370
        %v1372 = vpop.f32.mrb[0].mxu0
        %v1373 = vpop.f32.mrb[0].mxu0
        %v1374 = vadd.f32 0.0, %v1373
        %v1375 = vpop.f32.mrb[0].mxu0
        %1376 = vmatprep.mubr.bf16.mxu0 0
        %1377 = vmatmul.mubr.bf16.gmra.mrb[0].mxu0 %v1254
        %v1378 = vpop.f32.mrb[0].mxu0
        %v1379 = vadd.f32 0.0, %v1378
        %v1380 = vpop.f32.mrb[0].mxu0
        %v1381 = vpop.f32.mrb[0].mxu0
        %v1382 = vadd.f32 0.0, %v1381
        %v1383 = vpop.f32.mrb[0].mxu0
        %1384 = vmatprep.mubr.bf16.mxu0 0
        %1385 = vmatmul.mubr.bf16.gmra.mrb[0].mxu0 %v1255
        %v1386 = vpop.f32.mrb[0].mxu0
        %v1387 = vadd.f32 0.0, %v1386
        %v1388 = vpop.f32.mrb[0].mxu0
        %v1389 = vpop.f32.mrb[0].mxu0
        %v1390 = vadd.f32 0.0, %v1389
        %v1391 = vpop.f32.mrb[0].mxu0
        %1392 = vmatprep.mubr.bf16.mxu0 0
        %1393 = vmatmul.mubr.bf16.gmra.mrb[0].mxu0 %v1256
        %v1394 = vpop.f32.mrb[0].mxu0
        %v1395 = vadd.f32 0.0, %v1394
        %v1396 = vpop.f32.mrb[0].mxu0
        %v1397 = vpop.f32.mrb[0].mxu0
        %v1398 = vadd.f32 0.0, %v1397
        %v1399 = vpop.f32.mrb[0].mxu0
        %1400 = vmatprep.mubr.bf16.mxu0 0
        %1401 = vmatmul.mubr.bf16.gmra.mrb[0].mxu0 %v1257
        %v1402 = vpop.f32.mrb[0].mxu0
        %v1403 = vadd.f32 0.0, %v1402
        %v1404 = vpop.f32.mrb[0].mxu0
        %v1405 = vpop.f32.mrb[0].mxu0
        %v1406 = vadd.f32 0.0, %v1405
        %v1407 = vpop.f32.mrb[0].mxu0
        %1408 = vmatprep.mubr.bf16.mxu0 0
        %1409 = vmatmul.mubr.bf16.gmra.mrb[0].mxu0 %v1258
        %v1410 = vpop.f32.mrb[0].mxu0
        %v1411 = vadd.f32 0.0, %v1410
        %v1412 = vpop.f32.mrb[0].mxu0
        %v1413 = vpop.f32.mrb[0].mxu0
        %v1414 = vadd.f32 0.0, %v1413
        %v1415 = vpop.f32.mrb[0].mxu0
        %1416 = vmatprep.mubr.bf16.mxu0 0
        %1417 = vmatmul.mubr.bf16.gmra.mrb[0].mxu0 %v1259
        %v1418 = vpop.f32.mrb[0].mxu0
        %v1419 = vadd.f32 0.0, %v1418
        %v1420 = vpop.f32.mrb[0].mxu0
        %v1421 = vpop.f32.mrb[0].mxu0
        %v1422 = vadd.f32 0.0, %v1421
        %v1423 = vpop.f32.mrb[0].mxu0
        %1424 = vmatprep.mubr.bf16.mxu0 0
        %1425 = vmatmul.mubr.bf16.gmra.mrb[0].mxu0 %v1260
        %v1426 = vpop.f32.mrb[0].mxu0
        %v1427 = vadd.f32 0.0, %v1426
        %v1428 = vpop.f32.mrb[0].mxu0
        %v1429 = vpop.f32.mrb[0].mxu0
        %v1430 = vadd.f32 0.0, %v1429
        %v1431 = vpop.f32.mrb[0].mxu0
        %1432 = vmatprep.mubr.bf16.mxu0 0
        %1433 = vmatmul.mubr.bf16.gmra.mrb[0].mxu0 %v1261
        %v1434 = vpop.f32.mrb[0].mxu0
        %v1435 = vadd.f32 0.0, %v1434
        %v1436 = vpop.f32.mrb[0].mxu0
        %v1437 = vpop.f32.mrb[0].mxu0
        %v1438 = vadd.f32 0.0, %v1437
        %v1439 = vpop.f32.mrb[0].mxu0
        %1440 = vmatprep.mubr.bf16.mxu0 0
        %1441 = vmatmul.mubr.bf16.gmra.mrb[0].mxu0 %v1262
        %v1442 = vpop.f32.mrb[0].mxu0
        %v1443 = vadd.f32 0.0, %v1442
        %v1444 = vpop.f32.mrb[0].mxu0
        %v1445 = vpop.f32.mrb[0].mxu0
        %v1446 = vadd.f32 0.0, %v1445
        %v1447 = vpop.f32.mrb[0].mxu0
        %1448 = vmatprep.mubr.bf16.mxu0 0
        %1449 = vmatmul.mubr.bf16.gmra.mrb[0].mxu0 %v1263
        %v1450 = vpop.f32.mrb[0].mxu0
        %v1451 = vadd.f32 0.0, %v1450
        %v1452 = vpop.f32.mrb[0].mxu0
        %v1453 = vpop.f32.mrb[0].mxu0
        %v1454 = vpop.f32.mrb[0].mxu0
        %1455 = vdwg.mxu0
        %v1456 = vld [vmem:[%s2] sm:$0x1]
        %v1458 = vlaneseq
        %v1459 = vshrl.u32 %v1458, 7
        %v1460 = vsub.s32 0, %v1459
        %v1461 = vrot.slane %v1456, %v1460
        %v1463 = vmul.f32 %v1363, %v1461
        %v1464 = vmul.f32 %v1366, %v1461
        %v1465 = vmul.f32 %v1371, %v1461
        %v1466 = vmul.f32 %v1374, %v1461
        %v1467 = vmul.f32 %v1379, %v1461
        %v1468 = vmul.f32 %v1382, %v1461
        %v1469 = vmul.f32 %v1387, %v1461
        %v1470 = vmul.f32 %v1390, %v1461
        %v1471 = vmul.f32 %v1395, %v1461
        %v1472 = vmul.f32 %v1398, %v1461
        %v1473 = vmul.f32 %v1403, %v1461
        %v1474 = vmul.f32 %v1406, %v1461
        %v1475 = vmul.f32 %v1411, %v1461
        %v1476 = vmul.f32 %v1414, %v1461
        %v1477 = vmul.f32 %v1419, %v1461
        %v1478 = vmul.f32 %v1422, %v1461
        %v1479 = vmul.f32 %v1427, %v1461
        %v1480 = vmul.f32 %v1430, %v1461
        %v1481 = vmul.f32 %v1435, %v1461
        %v1482 = vmul.f32 %v1438, %v1461
        %v1483 = vmul.f32 %v1443, %v1461
        %v1484 = vmul.f32 %v1446, %v1461
        %v1485 = vmul.f32 %v1451, %v1461
        %v1486 = vld [vmem:[%s3] sm:$0x1]
        %v1488 = vlaneseq
        %v1489 = vshrl.u32 %v1488, 7
        %v1490 = vsub.s32 0, %v1489
        %v1491 = vrot.slane %v1486, %v1490
        %v1493 = vadd.f32 %v1463, %v1491
        %v1494 = vadd.f32 %v1464, %v1491
        %v1495 = vadd.f32 %v1465, %v1491
        %v1496 = vadd.f32 %v1466, %v1491
        %v1497 = vadd.f32 %v1467, %v1491
        %v1498 = vadd.f32 %v1468, %v1491
        %v1499 = vadd.f32 %v1469, %v1491
        %v1500 = vadd.f32 %v1470, %v1491
        %v1501 = vadd.f32 %v1471, %v1491
        %v1502 = vadd.f32 %v1472, %v1491
        %v1503 = vadd.f32 %v1473, %v1491
        %v1504 = vadd.f32 %v1474, %v1491
        %v1505 = vadd.f32 %v1475, %v1491
        %v1506 = vadd.f32 %v1476, %v1491
        %v1507 = vadd.f32 %v1477, %v1491
        %v1508 = vadd.f32 %v1478, %v1491
        %v1509 = vadd.f32 %v1479, %v1491
        %v1510 = vadd.f32 %v1480, %v1491
        %v1511 = vadd.f32 %v1481, %v1491
        %v1512 = vadd.f32 %v1482, %v1491
        %v1513 = vadd.f32 %v1483, %v1491
        %v1514 = vadd.f32 %v1484, %v1491
        %v1515 = vadd.f32 %v1485, %v1491
        %v1516 = vmax.f32 %v1493, 0.0
        %v1517 = vmax.f32 %v1494, 0.0
        %v1518 = vmax.f32 %v1495, 0.0
        %v1519 = vmax.f32 %v1496, 0.0
        %v1520 = vmax.f32 %v1497, 0.0
        %v1521 = vmax.f32 %v1498, 0.0
        %v1522 = vmax.f32 %v1499, 0.0
        %v1523 = vmax.f32 %v1500, 0.0
        %v1524 = vmax.f32 %v1501, 0.0
        %v1525 = vmax.f32 %v1502, 0.0
        %v1526 = vmax.f32 %v1503, 0.0
        %v1527 = vmax.f32 %v1504, 0.0
        %v1528 = vmax.f32 %v1505, 0.0
        %v1529 = vmax.f32 %v1506, 0.0
        %v1530 = vmax.f32 %v1507, 0.0
        %v1531 = vmax.f32 %v1508, 0.0
        %v1532 = vmax.f32 %v1509, 0.0
        %v1533 = vmax.f32 %v1510, 0.0
        %v1534 = vmax.f32 %v1511, 0.0
        %v1535 = vmax.f32 %v1512, 0.0
        %v1536 = vmax.f32 %v1513, 0.0
        %v1537 = vmax.f32 %v1514, 0.0
        %v1538 = vmax.f32 %v1515, 0.0
        %v1562 = vcombine.high %v1516, %v1516
        %v1564 = vunpack.c.l.s4 1983009808
        %v1565 = vunpack.c.0.s8 %v1564
        %v1566 = vlaneseq
        %v1567 = vshrl.u32 %v1566, 7
        %v1568 = vsub.s32 %v1565, %v1567
        %v1569 = vrot.slane %v1516, %v1568
        %v1571 = vunpack.c.l.s4 1983009808
        %v1572 = vunpack.c.0.s8 %v1571
        %v1573 = vlaneseq
        %v1574 = vshrl.u32 %v1573, 7
        %v1575 = vsub.s32 %v1572, %v1574
        %v1576 = vrot.slane %v1562, %v1575
        %v1577 = vcombine.high %v1569, %v1569
        %v1578 = vcombine.high %v1576, %v1576
        %v1579 = vcombine.high %v1517, %v1517
        %v1581 = vunpack.c.l.s4 1983009808
        %v1582 = vunpack.c.0.s8 %v1581
        %v1583 = vlaneseq
        %v1584 = vshrl.u32 %v1583, 7
        %v1585 = vsub.s32 %v1582, %v1584
        %v1586 = vrot.slane %v1517, %v1585
        %v1588 = vunpack.c.l.s4 1983009808
        %v1589 = vunpack.c.0.s8 %v1588
        %v1590 = vlaneseq
        %v1591 = vshrl.u32 %v1590, 7
        %v1592 = vsub.s32 %v1589, %v1591
        %v1593 = vrot.slane %v1579, %v1592
        %v1594 = vcombine.high %v1586, %v1586
        %v1595 = vcombine.high %v1593, %v1593
        %v1596 = vcombine.high %v1518, %v1518
        %v1598 = vunpack.c.l.s4 1983009808
        %v1599 = vunpack.c.0.s8 %v1598
        %v1600 = vlaneseq
        %v1601 = vshrl.u32 %v1600, 7
        %v1602 = vsub.s32 %v1599, %v1601
        %v1603 = vrot.slane %v1518, %v1602
        %v1605 = vunpack.c.l.s4 1983009808
        %v1606 = vunpack.c.0.s8 %v1605
        %v1607 = vlaneseq
        %v1608 = vshrl.u32 %v1607, 7
        %v1609 = vsub.s32 %v1606, %v1608
        %v1610 = vrot.slane %v1596, %v1609
        %v1611 = vcombine.high %v1603, %v1603
        %v1612 = vcombine.high %v1610, %v1610
        %v1613 = vcombine.high %v1519, %v1519
        %v1615 = vunpack.c.l.s4 1983009808
        %v1616 = vunpack.c.0.s8 %v1615
        %v1617 = vlaneseq
        %v1618 = vshrl.u32 %v1617, 7
        %v1619 = vsub.s32 %v1616, %v1618
        %v1620 = vrot.slane %v1519, %v1619
        %v1622 = vunpack.c.l.s4 1983009808
        %v1623 = vunpack.c.0.s8 %v1622
        %v1624 = vlaneseq
        %v1625 = vshrl.u32 %v1624, 7
        %v1626 = vsub.s32 %v1623, %v1625
        %v1627 = vrot.slane %v1613, %v1626
        %v1628 = vcombine.high %v1620, %v1620
        %v1629 = vcombine.high %v1627, %v1627
        %v1630 = vcombine.high %v1520, %v1520
        %v1632 = vunpack.c.l.s4 1983009808
        %v1633 = vunpack.c.0.s8 %v1632
        %v1634 = vlaneseq
        %v1635 = vshrl.u32 %v1634, 7
        %v1636 = vsub.s32 %v1633, %v1635
        %v1637 = vrot.slane %v1520, %v1636
        %v1639 = vunpack.c.l.s4 1983009808
        %v1640 = vunpack.c.0.s8 %v1639
        %v1641 = vlaneseq
        %v1642 = vshrl.u32 %v1641, 7
        %v1643 = vsub.s32 %v1640, %v1642
        %v1644 = vrot.slane %v1630, %v1643
        %v1645 = vcombine.high %v1637, %v1637
        %v1646 = vcombine.high %v1644, %v1644
        %v1647 = vcombine.high %v1521, %v1521
        %v1649 = vunpack.c.l.s4 1983009808
        %v1650 = vunpack.c.0.s8 %v1649
        %v1651 = vlaneseq
        %v1652 = vshrl.u32 %v1651, 7
        %v1653 = vsub.s32 %v1650, %v1652
        %v1654 = vrot.slane %v1521, %v1653
        %v1656 = vunpack.c.l.s4 1983009808
        %v1657 = vunpack.c.0.s8 %v1656
        %v1658 = vlaneseq
        %v1659 = vshrl.u32 %v1658, 7
        %v1660 = vsub.s32 %v1657, %v1659
        %v1661 = vrot.slane %v1647, %v1660
        %v1662 = vcombine.high %v1654, %v1654
        %v1663 = vcombine.high %v1661, %v1661
        %v1664 = vcombine.high %v1522, %v1522
        %v1666 = vunpack.c.l.s4 1983009808
        %v1667 = vunpack.c.0.s8 %v1666
        %v1668 = vlaneseq
        %v1669 = vshrl.u32 %v1668, 7
        %v1670 = vsub.s32 %v1667, %v1669
        %v1671 = vrot.slane %v1522, %v1670
        %v1673 = vunpack.c.l.s4 1983009808
        %v1674 = vunpack.c.0.s8 %v1673
        %v1675 = vlaneseq
        %v1676 = vshrl.u32 %v1675, 7
        %v1677 = vsub.s32 %v1674, %v1676
        %v1678 = vrot.slane %v1664, %v1677
        %v1679 = vcombine.high %v1671, %v1671
        %v1680 = vcombine.high %v1678, %v1678
        %v1681 = vcombine.high %v1523, %v1523
        %v1683 = vunpack.c.l.s4 1983009808
        %v1684 = vunpack.c.0.s8 %v1683
        %v1685 = vlaneseq
        %v1686 = vshrl.u32 %v1685, 7
        %v1687 = vsub.s32 %v1684, %v1686
        %v1688 = vrot.slane %v1523, %v1687
        %v1690 = vunpack.c.l.s4 1983009808
        %v1691 = vunpack.c.0.s8 %v1690
        %v1692 = vlaneseq
        %v1693 = vshrl.u32 %v1692, 7
        %v1694 = vsub.s32 %v1691, %v1693
        %v1695 = vrot.slane %v1681, %v1694
        %v1696 = vcombine.high %v1688, %v1688
        %v1697 = vcombine.high %v1695, %v1695
        %v1698 = vcombine.high %v1524, %v1524
        %v1700 = vunpack.c.l.s4 1983009808
        %v1701 = vunpack.c.0.s8 %v1700
        %v1702 = vlaneseq
        %v1703 = vshrl.u32 %v1702, 7
        %v1704 = vsub.s32 %v1701, %v1703
        %v1705 = vrot.slane %v1524, %v1704
        %v1707 = vunpack.c.l.s4 1983009808
        %v1708 = vunpack.c.0.s8 %v1707
        %v1709 = vlaneseq
        %v1710 = vshrl.u32 %v1709, 7
        %v1711 = vsub.s32 %v1708, %v1710
        %v1712 = vrot.slane %v1698, %v1711
        %v1713 = vcombine.high %v1705, %v1705
        %v1714 = vcombine.high %v1712, %v1712
        %v1715 = vcombine.high %v1525, %v1525
        %v1717 = vunpack.c.l.s4 1983009808
        %v1718 = vunpack.c.0.s8 %v1717
        %v1719 = vlaneseq
        %v1720 = vshrl.u32 %v1719, 7
        %v1721 = vsub.s32 %v1718, %v1720
        %v1722 = vrot.slane %v1525, %v1721
        %v1724 = vunpack.c.l.s4 1983009808
        %v1725 = vunpack.c.0.s8 %v1724
        %v1726 = vlaneseq
        %v1727 = vshrl.u32 %v1726, 7
        %v1728 = vsub.s32 %v1725, %v1727
        %v1729 = vrot.slane %v1715, %v1728
        %v1730 = vcombine.high %v1722, %v1722
        %v1731 = vcombine.high %v1729, %v1729
        %v1732 = vcombine.high %v1526, %v1526
        %v1734 = vunpack.c.l.s4 1983009808
        %v1735 = vunpack.c.0.s8 %v1734
        %v1736 = vlaneseq
        %v1737 = vshrl.u32 %v1736, 7
        %v1738 = vsub.s32 %v1735, %v1737
        %v1739 = vrot.slane %v1526, %v1738
        %v1741 = vunpack.c.l.s4 1983009808
        %v1742 = vunpack.c.0.s8 %v1741
        %v1743 = vlaneseq
        %v1744 = vshrl.u32 %v1743, 7
        %v1745 = vsub.s32 %v1742, %v1744
        %v1746 = vrot.slane %v1732, %v1745
        %v1747 = vcombine.high %v1739, %v1739
        %v1748 = vcombine.high %v1746, %v1746
        %v1749 = vcombine.high %v1527, %v1527
        %v1751 = vunpack.c.l.s4 1983009808
        %v1752 = vunpack.c.0.s8 %v1751
        %v1753 = vlaneseq
        %v1754 = vshrl.u32 %v1753, 7
        %v1755 = vsub.s32 %v1752, %v1754
        %v1756 = vrot.slane %v1527, %v1755
        %v1758 = vunpack.c.l.s4 1983009808
        %v1759 = vunpack.c.0.s8 %v1758
        %v1760 = vlaneseq
        %v1761 = vshrl.u32 %v1760, 7
        %v1762 = vsub.s32 %v1759, %v1761
        %v1763 = vrot.slane %v1749, %v1762
        %v1764 = vcombine.high %v1756, %v1756
        %v1765 = vcombine.high %v1763, %v1763
        %v1766 = vcombine.high %v1528, %v1528
        %v1768 = vunpack.c.l.s4 1983009808
        %v1769 = vunpack.c.0.s8 %v1768
        %v1770 = vlaneseq
        %v1771 = vshrl.u32 %v1770, 7
        %v1772 = vsub.s32 %v1769, %v1771
        %v1773 = vrot.slane %v1528, %v1772
        %v1775 = vunpack.c.l.s4 1983009808
        %v1776 = vunpack.c.0.s8 %v1775
        %v1777 = vlaneseq
        %v1778 = vshrl.u32 %v1777, 7
        %v1779 = vsub.s32 %v1776, %v1778
        %v1780 = vrot.slane %v1766, %v1779
        %v1781 = vcombine.high %v1773, %v1773
        %v1782 = vcombine.high %v1780, %v1780
        %v1783 = vcombine.high %v1529, %v1529
        %v1785 = vunpack.c.l.s4 1983009808
        %v1786 = vunpack.c.0.s8 %v1785
        %v1787 = vlaneseq
        %v1788 = vshrl.u32 %v1787, 7
        %v1789 = vsub.s32 %v1786, %v1788
        %v1790 = vrot.slane %v1529, %v1789
        %v1792 = vunpack.c.l.s4 1983009808
        %v1793 = vunpack.c.0.s8 %v1792
        %v1794 = vlaneseq
        %v1795 = vshrl.u32 %v1794, 7
        %v1796 = vsub.s32 %v1793, %v1795
        %v1797 = vrot.slane %v1783, %v1796
        %v1798 = vcombine.high %v1790, %v1790
        %v1799 = vcombine.high %v1797, %v1797
        %v1800 = vcombine.high %v1530, %v1530
        %v1802 = vunpack.c.l.s4 1983009808
        %v1803 = vunpack.c.0.s8 %v1802
        %v1804 = vlaneseq
        %v1805 = vshrl.u32 %v1804, 7
        %v1806 = vsub.s32 %v1803, %v1805
        %v1807 = vrot.slane %v1530, %v1806
        %v1809 = vunpack.c.l.s4 1983009808
        %v1810 = vunpack.c.0.s8 %v1809
        %v1811 = vlaneseq
        %v1812 = vshrl.u32 %v1811, 7
        %v1813 = vsub.s32 %v1810, %v1812
        %v1814 = vrot.slane %v1800, %v1813
        %v1815 = vcombine.high %v1807, %v1807
        %v1816 = vcombine.high %v1814, %v1814
        %v1817 = vcombine.high %v1531, %v1531
        %v1819 = vunpack.c.l.s4 1983009808
        %v1820 = vunpack.c.0.s8 %v1819
        %v1821 = vlaneseq
        %v1822 = vshrl.u32 %v1821, 7
        %v1823 = vsub.s32 %v1820, %v1822
        %v1824 = vrot.slane %v1531, %v1823
        %v1826 = vunpack.c.l.s4 1983009808
        %v1827 = vunpack.c.0.s8 %v1826
        %v1828 = vlaneseq
        %v1829 = vshrl.u32 %v1828, 7
        %v1830 = vsub.s32 %v1827, %v1829
        %v1831 = vrot.slane %v1817, %v1830
        %v1832 = vcombine.high %v1824, %v1824
        %v1833 = vcombine.high %v1831, %v1831
        %v1834 = vcombine.high %v1532, %v1532
        %v1836 = vunpack.c.l.s4 1983009808
        %v1837 = vunpack.c.0.s8 %v1836
        %v1838 = vlaneseq
        %v1839 = vshrl.u32 %v1838, 7
        %v1840 = vsub.s32 %v1837, %v1839
        %v1841 = vrot.slane %v1532, %v1840
        %v1843 = vunpack.c.l.s4 1983009808
        %v1844 = vunpack.c.0.s8 %v1843
        %v1845 = vlaneseq
        %v1846 = vshrl.u32 %v1845, 7
        %v1847 = vsub.s32 %v1844, %v1846
        %v1848 = vrot.slane %v1834, %v1847
        %v1849 = vcombine.high %v1841, %v1841
        %v1850 = vcombine.high %v1848, %v1848
        %v1851 = vcombine.high %v1533, %v1533
        %v1853 = vunpack.c.l.s4 1983009808
        %v1854 = vunpack.c.0.s8 %v1853
        %v1855 = vlaneseq
        %v1856 = vshrl.u32 %v1855, 7
        %v1857 = vsub.s32 %v1854, %v1856
        %v1858 = vrot.slane %v1533, %v1857
        %v1860 = vunpack.c.l.s4 1983009808
        %v1861 = vunpack.c.0.s8 %v1860
        %v1862 = vlaneseq
        %v1863 = vshrl.u32 %v1862, 7
        %v1864 = vsub.s32 %v1861, %v1863
        %v1865 = vrot.slane %v1851, %v1864
        %v1866 = vcombine.high %v1858, %v1858
        %v1867 = vcombine.high %v1865, %v1865
        %v1868 = vcombine.high %v1534, %v1534
        %v1870 = vunpack.c.l.s4 1983009808
        %v1871 = vunpack.c.0.s8 %v1870
        %v1872 = vlaneseq
        %v1873 = vshrl.u32 %v1872, 7
        %v1874 = vsub.s32 %v1871, %v1873
        %v1875 = vrot.slane %v1534, %v1874
        %v1877 = vunpack.c.l.s4 1983009808
        %v1878 = vunpack.c.0.s8 %v1877
        %v1879 = vlaneseq
        %v1880 = vshrl.u32 %v1879, 7
        %v1881 = vsub.s32 %v1878, %v1880
        %v1882 = vrot.slane %v1868, %v1881
        %v1883 = vcombine.high %v1875, %v1875
        %v1884 = vcombine.high %v1882, %v1882
        %v1885 = vcombine.high %v1535, %v1535
        %v1887 = vunpack.c.l.s4 1983009808
        %v1888 = vunpack.c.0.s8 %v1887
        %v1889 = vlaneseq
        %v1890 = vshrl.u32 %v1889, 7
        %v1891 = vsub.s32 %v1888, %v1890
        %v1892 = vrot.slane %v1535, %v1891
        %v1894 = vunpack.c.l.s4 1983009808
        %v1895 = vunpack.c.0.s8 %v1894
        %v1896 = vlaneseq
        %v1897 = vshrl.u32 %v1896, 7
        %v1898 = vsub.s32 %v1895, %v1897
        %v1899 = vrot.slane %v1885, %v1898
        %v1900 = vcombine.high %v1892, %v1892
        %v1901 = vcombine.high %v1899, %v1899
        %v1902 = vcombine.high %v1536, %v1536
        %v1904 = vunpack.c.l.s4 1983009808
        %v1905 = vunpack.c.0.s8 %v1904
        %v1906 = vlaneseq
        %v1907 = vshrl.u32 %v1906, 7
        %v1908 = vsub.s32 %v1905, %v1907
        %v1909 = vrot.slane %v1536, %v1908
        %v1911 = vunpack.c.l.s4 1983009808
        %v1912 = vunpack.c.0.s8 %v1911
        %v1913 = vlaneseq
        %v1914 = vshrl.u32 %v1913, 7
        %v1915 = vsub.s32 %v1912, %v1914
        %v1916 = vrot.slane %v1902, %v1915
        %v1917 = vcombine.high %v1909, %v1909
        %v1918 = vcombine.high %v1916, %v1916
        %v1919 = vcombine.high %v1537, %v1537
        %v1921 = vunpack.c.l.s4 1983009808
        %v1922 = vunpack.c.0.s8 %v1921
        %v1923 = vlaneseq
        %v1924 = vshrl.u32 %v1923, 7
        %v1925 = vsub.s32 %v1922, %v1924
        %v1926 = vrot.slane %v1537, %v1925
        %v1928 = vunpack.c.l.s4 1983009808
        %v1929 = vunpack.c.0.s8 %v1928
        %v1930 = vlaneseq
        %v1931 = vshrl.u32 %v1930, 7
        %v1932 = vsub.s32 %v1929, %v1931
        %v1933 = vrot.slane %v1919, %v1932
        %v1934 = vcombine.high %v1926, %v1926
        %v1935 = vcombine.high %v1933, %v1933
        %v1937 = vunpack.c.l.s4 1983009808
        %v1938 = vunpack.c.0.s8 %v1937
        %v1939 = vlaneseq
        %v1940 = vshrl.u32 %v1939, 7
        %v1941 = vsub.s32 %v1938, %v1940
        %v1942 = vrot.slane %v1538, %v1941
        %v1943 = vcombine.high %v1942, %v1942
        %s1944 = ssub.s32 %s374, 1
        %v1945 = vstv %s1944
        %v1946 = vadd.s32 %v1945, 1
        %v1947 = vadd.s32 %v1945, 2
        %v1948 = vadd.s32 %v1945, 3
        %v1949 = vadd.s32 %v1945, 4
        %v1950 = vadd.s32 %v1945, 5
        %v1951 = vadd.s32 %v1945, 6
        %v1952 = vadd.s32 %v1945, 7
        %v1953 = vadd.s32 %v1945, 8
        %v1954 = vadd.s32 %v1945, 9
        %v1955 = vlaneseq
        %v1956 = vshrl.u32 %v1955, 7
        %v1957 = vadd.s32 %v1956, 8
        %v1958 = vadd.s32 %v1956, 16
        %v1959 = vsub.s32 %v1956, 1
        %v1960 = vsub.s32 %v1957, 1
        %v1961 = vsub.s32 %v1958, 1
        %vm1962 = vcmp.ge.s32.totalorder %v1945, 0
        %vm1963 = vcmp.ge.s32.totalorder %v1946, 0
        %vm1964 = vcmp.ge.s32.totalorder %v1947, 0
        %vm1965 = vcmp.ge.s32.totalorder %v1948, 0
        %vm1966 = vcmp.ge.s32.totalorder %v1949, 0
        %vm1967 = vcmp.ge.s32.totalorder %v1950, 0
        %vm1968 = vcmp.ge.s32.totalorder %v1951, 0
        %vm1969 = vcmp.ge.s32.totalorder %v1952, 0
        %vm1970 = vcmp.ge.s32.totalorder %v1953, 0
        %vm1971 = vcmp.ge.s32.totalorder %v1954, 0
        %vm1972 = vcmp.lt.s32.totalorder %v1945, 16
        %vm1973 = vcmp.lt.s32.totalorder %v1946, 16
        %vm1974 = vcmp.lt.s32.totalorder %v1947, 16
        %vm1975 = vcmp.lt.s32.totalorder %v1948, 16
        %vm1976 = vcmp.lt.s32.totalorder %v1949, 16
        %vm1977 = vcmp.lt.s32.totalorder %v1950, 16
        %vm1978 = vcmp.lt.s32.totalorder %v1951, 16
        %vm1979 = vcmp.lt.s32.totalorder %v1952, 16
        %vm1980 = vcmp.lt.s32.totalorder %v1953, 16
        %vm1981 = vcmp.lt.s32.totalorder %v1954, 16
        %vm1982 = vmand %vm1962, %vm1972
        %vm1983 = vmand %vm1963, %vm1973
        %vm1984 = vmand %vm1964, %vm1974
        %vm1985 = vmand %vm1965, %vm1975
        %vm1986 = vmand %vm1966, %vm1976
        %vm1987 = vmand %vm1967, %vm1977
        %vm1988 = vmand %vm1968, %vm1978
        %vm1989 = vmand %vm1969, %vm1979
        %vm1990 = vmand %vm1970, %vm1980
        %vm1991 = vmand %vm1971, %vm1981
        %vm1992 = vcmp.ge.s32.totalorder %v1959, 0
        %vm1993 = vcmp.ge.s32.totalorder %v1960, 0
        %vm1994 = vcmp.ge.s32.totalorder %v1961, 0
        %vm1995 = vmand %vm1982, %vm1992
        %vm1996 = vmand %vm1982, %vm1993
        %vm1997 = vmand %vm1982, %vm1994
        %vm1998 = vmand %vm1983, %vm1992
        %vm1999 = vmand %vm1983, %vm1993
        %vm2000 = vmand %vm1983, %vm1994
        %vm2001 = vmand %vm1984, %vm1992
        %vm2002 = vmand %vm1984, %vm1993
        %vm2003 = vmand %vm1984, %vm1994
        %vm2004 = vmand %vm1985, %vm1992
        %vm2005 = vmand %vm1985, %vm1993
        %vm2006 = vmand %vm1985, %vm1994
        %vm2007 = vmand %vm1986, %vm1992
        %vm2008 = vmand %vm1986, %vm1993
        %vm2009 = vmand %vm1986, %vm1994
        %vm2010 = vmand %vm1987, %vm1992
        %vm2011 = vmand %vm1987, %vm1993
        %vm2012 = vmand %vm1987, %vm1994
        %vm2013 = vmand %vm1988, %vm1992
        %vm2014 = vmand %vm1988, %vm1993
        %vm2015 = vmand %vm1988, %vm1994
        %vm2016 = vmand %vm1989, %vm1992
        %vm2017 = vmand %vm1989, %vm1993
        %vm2018 = vmand %vm1989, %vm1994
        %vm2019 = vmand %vm1990, %vm1992
        %vm2020 = vmand %vm1990, %vm1993
        %vm2021 = vmand %vm1990, %vm1994
        %vm2022 = vmand %vm1991, %vm1992
        %vm2023 = vmand %vm1991, %vm1993
        %vm2024 = vmand %vm1991, %vm1994
        %vm2025 = vcmp.lt.s32.totalorder %v1959, 16
        %vm2026 = vcmp.lt.s32.totalorder %v1960, 16
        %vm2027 = vcmp.lt.s32.totalorder %v1961, 16
        %vm2028 = vmand %vm1995, %vm2025
        %vm2029 = vmand %vm1996, %vm2026
        %vm2030 = vmand %vm1997, %vm2027
        %vm2031 = vmand %vm1998, %vm2025
        %vm2032 = vmand %vm1999, %vm2026
        %vm2033 = vmand %vm2000, %vm2027
        %vm2034 = vmand %vm2001, %vm2025
        %vm2035 = vmand %vm2002, %vm2026
        %vm2036 = vmand %vm2003, %vm2027
        %vm2037 = vmand %vm2004, %vm2025
        %vm2038 = vmand %vm2005, %vm2026
        %vm2039 = vmand %vm2006, %vm2027
        %vm2040 = vmand %vm2007, %vm2025
        %vm2041 = vmand %vm2008, %vm2026
        %vm2042 = vmand %vm2009, %vm2027
        %vm2043 = vmand %vm2010, %vm2025
        %vm2044 = vmand %vm2011, %vm2026
        %vm2045 = vmand %vm2012, %vm2027
        %vm2046 = vmand %vm2013, %vm2025
        %vm2047 = vmand %vm2014, %vm2026
        %vm2048 = vmand %vm2015, %vm2027
        %vm2049 = vmand %vm2016, %vm2025
        %vm2050 = vmand %vm2017, %vm2026
        %vm2051 = vmand %vm2018, %vm2027
        %vm2052 = vmand %vm2019, %vm2025
        %vm2053 = vmand %vm2020, %vm2026
        %vm2054 = vmand %vm2021, %vm2027
        %vm2055 = vmand %vm2022, %vm2025
        %vm2056 = vmand %vm2023, %vm2026
        %vm2057 = vmand %vm2024, %vm2027
        %v2058 = vsel %vm2028, 1, 0
        %v2059 = vsel %vm2029, 1, 0
        %v2060 = vsel %vm2030, 1, 0
        %v2061 = vsel %vm2031, 1, 0
        %v2062 = vsel %vm2032, 1, 0
        %v2063 = vsel %vm2033, 1, 0
        %v2064 = vsel %vm2034, 1, 0
        %v2065 = vsel %vm2035, 1, 0
        %v2066 = vsel %vm2036, 1, 0
        %v2067 = vsel %vm2037, 1, 0
        %v2068 = vsel %vm2038, 1, 0
        %v2069 = vsel %vm2039, 1, 0
        %v2070 = vsel %vm2040, 1, 0
        %v2071 = vsel %vm2041, 1, 0
        %v2072 = vsel %vm2042, 1, 0
        %v2073 = vsel %vm2043, 1, 0
        %v2074 = vsel %vm2044, 1, 0
        %v2075 = vsel %vm2045, 1, 0
        %v2076 = vsel %vm2046, 1, 0
        %v2077 = vsel %vm2047, 1, 0
        %v2078 = vsel %vm2048, 1, 0
        %v2079 = vsel %vm2049, 1, 0
        %v2080 = vsel %vm2050, 1, 0
        %v2081 = vsel %vm2051, 1, 0
        %v2082 = vsel %vm2052, 1, 0
        %v2083 = vsel %vm2053, 1, 0
        %v2084 = vsel %vm2054, 1, 0
        %v2085 = vsel %vm2055, 1, 0
        %v2086 = vsel %vm2056, 1, 0
        %v2087 = vsel %vm2057, 1, 0
        %vm2088 = vcmp.eq.s32.totalorder %v2058, 1
        %vm2089 = vcmp.eq.s32.totalorder %v2059, 1
        %vm2090 = vcmp.eq.s32.totalorder %v2060, 1
        %vm2091 = vcmp.eq.s32.totalorder %v2061, 1
        %vm2092 = vcmp.eq.s32.totalorder %v2062, 1
        %vm2093 = vcmp.eq.s32.totalorder %v2063, 1
        %vm2094 = vcmp.eq.s32.totalorder %v2064, 1
        %vm2095 = vcmp.eq.s32.totalorder %v2065, 1
        %vm2096 = vcmp.eq.s32.totalorder %v2066, 1
        %vm2097 = vcmp.eq.s32.totalorder %v2067, 1
        %vm2098 = vcmp.eq.s32.totalorder %v2068, 1
        %vm2099 = vcmp.eq.s32.totalorder %v2069, 1
        %vm2100 = vcmp.eq.s32.totalorder %v2070, 1
        %vm2101 = vcmp.eq.s32.totalorder %v2071, 1
        %vm2102 = vcmp.eq.s32.totalorder %v2072, 1
        %vm2103 = vcmp.eq.s32.totalorder %v2073, 1
        %vm2104 = vcmp.eq.s32.totalorder %v2074, 1
        %vm2105 = vcmp.eq.s32.totalorder %v2075, 1
        %vm2106 = vcmp.eq.s32.totalorder %v2076, 1
        %vm2107 = vcmp.eq.s32.totalorder %v2077, 1
        %vm2108 = vcmp.eq.s32.totalorder %v2078, 1
        %vm2109 = vcmp.eq.s32.totalorder %v2079, 1
        %vm2110 = vcmp.eq.s32.totalorder %v2080, 1
        %vm2111 = vcmp.eq.s32.totalorder %v2081, 1
        %vm2112 = vcmp.eq.s32.totalorder %v2082, 1
        %vm2113 = vcmp.eq.s32.totalorder %v2083, 1
        %vm2114 = vcmp.eq.s32.totalorder %v2084, 1
        %vm2115 = vcmp.eq.s32.totalorder %v2085, 1
        %vm2116 = vcmp.eq.s32.totalorder %v2086, 1
        %vm2117 = vcmp.eq.s32.totalorder %v2087, 1
        %v2118 = vcombine.low %v1569, %v1577
        %v2119 = vcombine.low %v1576, %v1578
        %v2121 = vunpack.c.l.s4 1983009808
        %v2122 = vunpack.c.0.s8 %v2121
        %v2123 = vlaneseq
        %v2124 = vshrl.u32 %v2123, 7
        %v2125 = vsub.s32 %v2122, %v2124
        %v2126 = vrot.slane %v2118, %v2125
        %v2128 = vunpack.c.l.s4 1983009808
        %v2129 = vunpack.c.0.s8 %v2128
        %v2130 = vlaneseq
        %v2131 = vshrl.u32 %v2130, 7
        %v2132 = vsub.s32 %v2129, %v2131
        %v2133 = vrot.slane %v2119, %v2132
        %v2134 = vcombine.low %v2126, %v2133
        %v2135 = vcombine.low %v1586, %v1594
        %v2136 = vcombine.low %v1593, %v1595
        %v2138 = vunpack.c.l.s4 1983009808
        %v2139 = vunpack.c.0.s8 %v2138
        %v2140 = vlaneseq
        %v2141 = vshrl.u32 %v2140, 7
        %v2142 = vsub.s32 %v2139, %v2141
        %v2143 = vrot.slane %v2135, %v2142
        %v2145 = vunpack.c.l.s4 1983009808
        %v2146 = vunpack.c.0.s8 %v2145
        %v2147 = vlaneseq
        %v2148 = vshrl.u32 %v2147, 7
        %v2149 = vsub.s32 %v2146, %v2148
        %v2150 = vrot.slane %v2136, %v2149
        %v2151 = vcombine.low %v2143, %v2150
        %v2153 = vunpack.c.l.s4 1983009808
        %v2154 = vunpack.c.0.s8 %v2153
        %v2155 = vlaneseq
        %v2156 = vshrl.u32 %v2155, 7
        %v2157 = vsub.s32 %v2154, %v2156
        %v2158 = vrot.slane %v1603, %v2157
        %v2159 = vcombine.low %v1611, %v1610
        %v2160 = vcombine.low %v1612, %v1620
        %v2162 = vunpack.c.l.s4 1983009808
        %v2163 = vunpack.c.0.s8 %v2162
        %v2164 = vlaneseq
        %v2165 = vshrl.u32 %v2164, 7
        %v2166 = vsub.s32 %v2163, %v2165
        %v2167 = vrot.slane %v2159, %v2166
        %v2169 = vunpack.c.l.s4 1983009808
        %v2170 = vunpack.c.0.s8 %v2169
        %v2171 = vlaneseq
        %v2172 = vshrl.u32 %v2171, 7
        %v2173 = vsub.s32 %v2170, %v2172
        %v2174 = vrot.slane %v2160, %v2173
        %v2175 = vcombine.low %v2167, %v2174
        %v2176 = vcombine.low %v1628, %v1627
        %v2177 = vcombine.low %v1629, %v1637
        %v2179 = vunpack.c.l.s4 1983009808
        %v2180 = vunpack.c.0.s8 %v2179
        %v2181 = vlaneseq
        %v2182 = vshrl.u32 %v2181, 7
        %v2183 = vsub.s32 %v2180, %v2182
        %v2184 = vrot.slane %v2176, %v2183
        %v2186 = vunpack.c.l.s4 1983009808
        %v2187 = vunpack.c.0.s8 %v2186
        %v2188 = vlaneseq
        %v2189 = vshrl.u32 %v2188, 7
        %v2190 = vsub.s32 %v2187, %v2189
        %v2191 = vrot.slane %v2177, %v2190
        %v2192 = vcombine.low %v2184, %v2191
        %v2194 = vunpack.c.l.s4 1983009808
        %v2195 = vunpack.c.0.s8 %v2194
        %v2196 = vlaneseq
        %v2197 = vshrl.u32 %v2196, 7
        %v2198 = vsub.s32 %v2195, %v2197
        %v2199 = vrot.slane %v1645, %v2198
        %v2200 = vcombine.low %v1644, %v1646
        %v2201 = vcombine.low %v1654, %v1662
        %v2203 = vunpack.c.l.s4 1983009808
        %v2204 = vunpack.c.0.s8 %v2203
        %v2205 = vlaneseq
        %v2206 = vshrl.u32 %v2205, 7
        %v2207 = vsub.s32 %v2204, %v2206
        %v2208 = vrot.slane %v2200, %v2207
        %v2210 = vunpack.c.l.s4 1983009808
        %v2211 = vunpack.c.0.s8 %v2210
        %v2212 = vlaneseq
        %v2213 = vshrl.u32 %v2212, 7
        %v2214 = vsub.s32 %v2211, %v2213
        %v2215 = vrot.slane %v2201, %v2214
        %v2216 = vcombine.low %v2208, %v2215
        %v2217 = vcombine.low %v1661, %v1663
        %v2218 = vcombine.low %v1671, %v1679
        %v2220 = vunpack.c.l.s4 1983009808
        %v2221 = vunpack.c.0.s8 %v2220
        %v2222 = vlaneseq
        %v2223 = vshrl.u32 %v2222, 7
        %v2224 = vsub.s32 %v2221, %v2223
        %v2225 = vrot.slane %v2217, %v2224
        %v2227 = vunpack.c.l.s4 1983009808
        %v2228 = vunpack.c.0.s8 %v2227
        %v2229 = vlaneseq
        %v2230 = vshrl.u32 %v2229, 7
        %v2231 = vsub.s32 %v2228, %v2230
        %v2232 = vrot.slane %v2218, %v2231
        %v2233 = vcombine.low %v2225, %v2232
        %v2235 = vunpack.c.l.s4 1983009808
        %v2236 = vunpack.c.0.s8 %v2235
        %v2237 = vlaneseq
        %v2238 = vshrl.u32 %v2237, 7
        %v2239 = vsub.s32 %v2236, %v2238
        %v2240 = vrot.slane %v1678, %v2239
        %v2241 = vcombine.low %v1680, %v1688
        %v2242 = vcombine.low %v1696, %v1695
        %v2244 = vunpack.c.l.s4 1983009808
        %v2245 = vunpack.c.0.s8 %v2244
        %v2246 = vlaneseq
        %v2247 = vshrl.u32 %v2246, 7
        %v2248 = vsub.s32 %v2245, %v2247
        %v2249 = vrot.slane %v2241, %v2248
        %v2251 = vunpack.c.l.s4 1983009808
        %v2252 = vunpack.c.0.s8 %v2251
        %v2253 = vlaneseq
        %v2254 = vshrl.u32 %v2253, 7
        %v2255 = vsub.s32 %v2252, %v2254
        %v2256 = vrot.slane %v2242, %v2255
        %v2257 = vcombine.low %v2249, %v2256
        %v2258 = vcombine.low %v1697, %v1705
        %v2259 = vcombine.low %v1713, %v1712
        %v2261 = vunpack.c.l.s4 1983009808
        %v2262 = vunpack.c.0.s8 %v2261
        %v2263 = vlaneseq
        %v2264 = vshrl.u32 %v2263, 7
        %v2265 = vsub.s32 %v2262, %v2264
        %v2266 = vrot.slane %v2258, %v2265
        %v2268 = vunpack.c.l.s4 1983009808
        %v2269 = vunpack.c.0.s8 %v2268
        %v2270 = vlaneseq
        %v2271 = vshrl.u32 %v2270, 7
        %v2272 = vsub.s32 %v2269, %v2271
        %v2273 = vrot.slane %v2259, %v2272
        %v2274 = vcombine.low %v2266, %v2273
        %v2276 = vunpack.c.l.s4 1983009808
        %v2277 = vunpack.c.0.s8 %v2276
        %v2278 = vlaneseq
        %v2279 = vshrl.u32 %v2278, 7
        %v2280 = vsub.s32 %v2277, %v2279
        %v2281 = vrot.slane %v1714, %v2280
        %v2282 = vcombine.low %v1722, %v1730
        %v2283 = vcombine.low %v1729, %v1731
        %v2285 = vunpack.c.l.s4 1983009808
        %v2286 = vunpack.c.0.s8 %v2285
        %v2287 = vlaneseq
        %v2288 = vshrl.u32 %v2287, 7
        %v2289 = vsub.s32 %v2286, %v2288
        %v2290 = vrot.slane %v2282, %v2289
        %v2292 = vunpack.c.l.s4 1983009808
        %v2293 = vunpack.c.0.s8 %v2292
        %v2294 = vlaneseq
        %v2295 = vshrl.u32 %v2294, 7
        %v2296 = vsub.s32 %v2293, %v2295
        %v2297 = vrot.slane %v2283, %v2296
        %v2298 = vcombine.low %v2290, %v2297
        %v2299 = vcombine.low %v1739, %v1747
        %v2300 = vcombine.low %v1746, %v1748
        %v2302 = vunpack.c.l.s4 1983009808
        %v2303 = vunpack.c.0.s8 %v2302
        %v2304 = vlaneseq
        %v2305 = vshrl.u32 %v2304, 7
        %v2306 = vsub.s32 %v2303, %v2305
        %v2307 = vrot.slane %v2299, %v2306
        %v2309 = vunpack.c.l.s4 1983009808
        %v2310 = vunpack.c.0.s8 %v2309
        %v2311 = vlaneseq
        %v2312 = vshrl.u32 %v2311, 7
        %v2313 = vsub.s32 %v2310, %v2312
        %v2314 = vrot.slane %v2300, %v2313
        %v2315 = vcombine.low %v2307, %v2314
        %v2317 = vunpack.c.l.s4 1983009808
        %v2318 = vunpack.c.0.s8 %v2317
        %v2319 = vlaneseq
        %v2320 = vshrl.u32 %v2319, 7
        %v2321 = vsub.s32 %v2318, %v2320
        %v2322 = vrot.slane %v1756, %v2321
        %v2323 = vcombine.low %v1764, %v1763
        %v2324 = vcombine.low %v1765, %v1773
        %v2326 = vunpack.c.l.s4 1983009808
        %v2327 = vunpack.c.0.s8 %v2326
        %v2328 = vlaneseq
        %v2329 = vshrl.u32 %v2328, 7
        %v2330 = vsub.s32 %v2327, %v2329
        %v2331 = vrot.slane %v2323, %v2330
        %v2333 = vunpack.c.l.s4 1983009808
        %v2334 = vunpack.c.0.s8 %v2333
        %v2335 = vlaneseq
        %v2336 = vshrl.u32 %v2335, 7
        %v2337 = vsub.s32 %v2334, %v2336
        %v2338 = vrot.slane %v2324, %v2337
        %v2339 = vcombine.low %v2331, %v2338
        %v2340 = vcombine.low %v1781, %v1780
        %v2341 = vcombine.low %v1782, %v1790
        %v2343 = vunpack.c.l.s4 1983009808
        %v2344 = vunpack.c.0.s8 %v2343
        %v2345 = vlaneseq
        %v2346 = vshrl.u32 %v2345, 7
        %v2347 = vsub.s32 %v2344, %v2346
        %v2348 = vrot.slane %v2340, %v2347
        %v2350 = vunpack.c.l.s4 1983009808
        %v2351 = vunpack.c.0.s8 %v2350
        %v2352 = vlaneseq
        %v2353 = vshrl.u32 %v2352, 7
        %v2354 = vsub.s32 %v2351, %v2353
        %v2355 = vrot.slane %v2341, %v2354
        %v2356 = vcombine.low %v2348, %v2355
        %v2358 = vunpack.c.l.s4 1983009808
        %v2359 = vunpack.c.0.s8 %v2358
        %v2360 = vlaneseq
        %v2361 = vshrl.u32 %v2360, 7
        %v2362 = vsub.s32 %v2359, %v2361
        %v2363 = vrot.slane %v1798, %v2362
        %v2364 = vcombine.low %v1797, %v1799
        %v2365 = vcombine.low %v1807, %v1815
        %v2367 = vunpack.c.l.s4 1983009808
        %v2368 = vunpack.c.0.s8 %v2367
        %v2369 = vlaneseq
        %v2370 = vshrl.u32 %v2369, 7
        %v2371 = vsub.s32 %v2368, %v2370
        %v2372 = vrot.slane %v2364, %v2371
        %v2374 = vunpack.c.l.s4 1983009808
        %v2375 = vunpack.c.0.s8 %v2374
        %v2376 = vlaneseq
        %v2377 = vshrl.u32 %v2376, 7
        %v2378 = vsub.s32 %v2375, %v2377
        %v2379 = vrot.slane %v2365, %v2378
        %v2380 = vcombine.low %v2372, %v2379
        %v2381 = vcombine.low %v1814, %v1816
        %v2382 = vcombine.low %v1824, %v1832
        %v2384 = vunpack.c.l.s4 1983009808
        %v2385 = vunpack.c.0.s8 %v2384
        %v2386 = vlaneseq
        %v2387 = vshrl.u32 %v2386, 7
        %v2388 = vsub.s32 %v2385, %v2387
        %v2389 = vrot.slane %v2381, %v2388
        %v2391 = vunpack.c.l.s4 1983009808
        %v2392 = vunpack.c.0.s8 %v2391
        %v2393 = vlaneseq
        %v2394 = vshrl.u32 %v2393, 7
        %v2395 = vsub.s32 %v2392, %v2394
        %v2396 = vrot.slane %v2382, %v2395
        %v2397 = vcombine.low %v2389, %v2396
        %v2399 = vunpack.c.l.s4 1983009808
        %v2400 = vunpack.c.0.s8 %v2399
        %v2401 = vlaneseq
        %v2402 = vshrl.u32 %v2401, 7
        %v2403 = vsub.s32 %v2400, %v2402
        %v2404 = vrot.slane %v1831, %v2403
        %v2405 = vcombine.low %v1833, %v1841
        %v2406 = vcombine.low %v1849, %v1848
        %v2408 = vunpack.c.l.s4 1983009808
        %v2409 = vunpack.c.0.s8 %v2408
        %v2410 = vlaneseq
        %v2411 = vshrl.u32 %v2410, 7
        %v2412 = vsub.s32 %v2409, %v2411
        %v2413 = vrot.slane %v2405, %v2412
        %v2415 = vunpack.c.l.s4 1983009808
        %v2416 = vunpack.c.0.s8 %v2415
        %v2417 = vlaneseq
        %v2418 = vshrl.u32 %v2417, 7
        %v2419 = vsub.s32 %v2416, %v2418
        %v2420 = vrot.slane %v2406, %v2419
        %v2421 = vcombine.low %v2413, %v2420
        %v2422 = vcombine.low %v1850, %v1858
        %v2423 = vcombine.low %v1866, %v1865
        %v2425 = vunpack.c.l.s4 1983009808
        %v2426 = vunpack.c.0.s8 %v2425
        %v2427 = vlaneseq
        %v2428 = vshrl.u32 %v2427, 7
        %v2429 = vsub.s32 %v2426, %v2428
        %v2430 = vrot.slane %v2422, %v2429
        %v2432 = vunpack.c.l.s4 1983009808
        %v2433 = vunpack.c.0.s8 %v2432
        %v2434 = vlaneseq
        %v2435 = vshrl.u32 %v2434, 7
        %v2436 = vsub.s32 %v2433, %v2435
        %v2437 = vrot.slane %v2423, %v2436
        %v2438 = vcombine.low %v2430, %v2437
        %v2440 = vunpack.c.l.s4 1983009808
        %v2441 = vunpack.c.0.s8 %v2440
        %v2442 = vlaneseq
        %v2443 = vshrl.u32 %v2442, 7
        %v2444 = vsub.s32 %v2441, %v2443
        %v2445 = vrot.slane %v1867, %v2444
        %v2446 = vcombine.low %v1875, %v1883
        %v2447 = vcombine.low %v1882, %v1884
        %v2449 = vunpack.c.l.s4 1983009808
        %v2450 = vunpack.c.0.s8 %v2449
        %v2451 = vlaneseq
        %v2452 = vshrl.u32 %v2451, 7
        %v2453 = vsub.s32 %v2450, %v2452
        %v2454 = vrot.slane %v2446, %v2453
        %v2456 = vunpack.c.l.s4 1983009808
        %v2457 = vunpack.c.0.s8 %v2456
        %v2458 = vlaneseq
        %v2459 = vshrl.u32 %v2458, 7
        %v2460 = vsub.s32 %v2457, %v2459
        %v2461 = vrot.slane %v2447, %v2460
        %v2462 = vcombine.low %v2454, %v2461
        %v2463 = vcombine.low %v1892, %v1900
        %v2464 = vcombine.low %v1899, %v1901
        %v2466 = vunpack.c.l.s4 1983009808
        %v2467 = vunpack.c.0.s8 %v2466
        %v2468 = vlaneseq
        %v2469 = vshrl.u32 %v2468, 7
        %v2470 = vsub.s32 %v2467, %v2469
        %v2471 = vrot.slane %v2463, %v2470
        %v2473 = vunpack.c.l.s4 1983009808
        %v2474 = vunpack.c.0.s8 %v2473
        %v2475 = vlaneseq
        %v2476 = vshrl.u32 %v2475, 7
        %v2477 = vsub.s32 %v2474, %v2476
        %v2478 = vrot.slane %v2464, %v2477
        %v2479 = vcombine.low %v2471, %v2478
        %v2481 = vunpack.c.l.s4 1983009808
        %v2482 = vunpack.c.0.s8 %v2481
        %v2483 = vlaneseq
        %v2484 = vshrl.u32 %v2483, 7
        %v2485 = vsub.s32 %v2482, %v2484
        %v2486 = vrot.slane %v1909, %v2485
        %v2487 = vcombine.low %v1917, %v1916
        %v2488 = vcombine.low %v1918, %v1926
        %v2490 = vunpack.c.l.s4 1983009808
        %v2491 = vunpack.c.0.s8 %v2490
        %v2492 = vlaneseq
        %v2493 = vshrl.u32 %v2492, 7
        %v2494 = vsub.s32 %v2491, %v2493
        %v2495 = vrot.slane %v2487, %v2494
        %v2497 = vunpack.c.l.s4 1983009808
        %v2498 = vunpack.c.0.s8 %v2497
        %v2499 = vlaneseq
        %v2500 = vshrl.u32 %v2499, 7
        %v2501 = vsub.s32 %v2498, %v2500
        %v2502 = vrot.slane %v2488, %v2501
        %v2503 = vcombine.low %v2495, %v2502
        %v2504 = vcombine.low %v1934, %v1933
        %v2505 = vcombine.low %v1935, %v1942
        %v2507 = vunpack.c.l.s4 1983009808
        %v2508 = vunpack.c.0.s8 %v2507
        %v2509 = vlaneseq
        %v2510 = vshrl.u32 %v2509, 7
        %v2511 = vsub.s32 %v2508, %v2510
        %v2512 = vrot.slane %v2504, %v2511
        %v2514 = vunpack.c.l.s4 1983009808
        %v2515 = vunpack.c.0.s8 %v2514
        %v2516 = vlaneseq
        %v2517 = vshrl.u32 %v2516, 7
        %v2518 = vsub.s32 %v2515, %v2517
        %v2519 = vrot.slane %v2505, %v2518
        %v2520 = vcombine.low %v2512, %v2519
        %v2522 = vunpack.c.l.s4 1983009808
        %v2523 = vunpack.c.0.s8 %v2522
        %v2524 = vlaneseq
        %v2525 = vshrl.u32 %v2524, 7
        %v2526 = vsub.s32 %v2523, %v2525
        %v2527 = vrot.slane %v1943, %v2526
        %v2558 = vsel %vm2088, %v2134, 0.0
        %v2559 = vsel %vm2089, %v2151, 0.0
        %v2560 = vsel %vm2090, %v2158, 0.0
        %v2561 = vsel %vm2091, %v2175, 0.0
        %v2562 = vsel %vm2092, %v2192, 0.0
        %v2563 = vsel %vm2093, %v2199, 0.0
        %v2564 = vsel %vm2094, %v2216, 0.0
        %v2565 = vsel %vm2095, %v2233, 0.0
        %v2566 = vsel %vm2096, %v2240, 0.0
        %v2567 = vsel %vm2097, %v2257, 0.0
        %v2568 = vsel %vm2098, %v2274, 0.0
        %v2569 = vsel %vm2099, %v2281, 0.0
        %v2570 = vsel %vm2100, %v2298, 0.0
        %v2571 = vsel %vm2101, %v2315, 0.0
        %v2572 = vsel %vm2102, %v2322, 0.0
        %v2573 = vsel %vm2103, %v2339, 0.0
        %v2574 = vsel %vm2104, %v2356, 0.0
        %v2575 = vsel %vm2105, %v2363, 0.0
        %v2576 = vsel %vm2106, %v2380, 0.0
        %v2577 = vsel %vm2107, %v2397, 0.0
        %v2578 = vsel %vm2108, %v2404, 0.0
        %v2579 = vsel %vm2109, %v2421, 0.0
        %v2580 = vsel %vm2110, %v2438, 0.0
        %v2581 = vsel %vm2111, %v2445, 0.0
        %v2582 = vsel %vm2112, %v2462, 0.0
        %v2583 = vsel %vm2113, %v2479, 0.0
        %v2584 = vsel %vm2114, %v2486, 0.0
        %v2585 = vsel %vm2115, %v2503, 0.0
        %v2586 = vsel %vm2116, %v2520, 0.0
        %v2587 = vsel %vm2117, %v2527, 0.0
        %v2588 = vpack.c.bf16 %v2559, %v2558
        %v2589 = vpack.c.bf16 %v2560, %v2560
        %v2590 = vpack.c.bf16 %v2562, %v2561
        %v2591 = vpack.c.bf16 %v2563, %v2563
        %v2592 = vpack.c.bf16 %v2565, %v2564
        %v2593 = vpack.c.bf16 %v2566, %v2566
        %v2594 = vpack.c.bf16 %v2568, %v2567
        %v2595 = vpack.c.bf16 %v2569, %v2569
        %v2596 = vpack.c.bf16 %v2571, %v2570
        %v2597 = vpack.c.bf16 %v2572, %v2572
        %v2598 = vpack.c.bf16 %v2574, %v2573
        %v2599 = vpack.c.bf16 %v2575, %v2575
        %v2600 = vpack.c.bf16 %v2577, %v2576
        %v2601 = vpack.c.bf16 %v2578, %v2578
        %v2602 = vpack.c.bf16 %v2580, %v2579
        %v2603 = vpack.c.bf16 %v2581, %v2581
        %v2604 = vpack.c.bf16 %v2583, %v2582
        %v2605 = vpack.c.bf16 %v2584, %v2584
        %v2606 = vpack.c.bf16 %v2586, %v2585
        %v2607 = vpack.c.bf16 %v2587, %v2587
        %vm2608 = vsmask.f32 7424
        %v2610 = vshrl.u32 %v2588, 16
        %v2612 = vshll.u32 %v2588, 16
        %v2614 = vrot.slane %v2612, 1
        %v2615 = vor.u32 %v2610, %v2614
        %v2617 = vshll.u32 %v2589, 16
        %v2619 = vrot.slane %v2617, 1
        %v2620 = vsel %vm2608, %v2615, %v2619
        %v2622 = vshrl.u32 %v2590, 16
        %v2624 = vshll.u32 %v2590, 16
        %v2626 = vrot.slane %v2624, 1
        %v2627 = vor.u32 %v2622, %v2626
        %v2629 = vshll.u32 %v2591, 16
        %v2631 = vrot.slane %v2629, 1
        %v2632 = vsel %vm2608, %v2627, %v2631
        %v2634 = vshrl.u32 %v2592, 16
        %v2636 = vshll.u32 %v2592, 16
        %v2638 = vrot.slane %v2636, 1
        %v2639 = vor.u32 %v2634, %v2638
        %v2641 = vshll.u32 %v2593, 16
        %v2643 = vrot.slane %v2641, 1
        %v2644 = vsel %vm2608, %v2639, %v2643
        %v2646 = vshrl.u32 %v2594, 16
        %v2648 = vshll.u32 %v2594, 16
        %v2650 = vrot.slane %v2648, 1
        %v2651 = vor.u32 %v2646, %v2650
        %v2653 = vshll.u32 %v2595, 16
        %v2655 = vrot.slane %v2653, 1
        %v2656 = vsel %vm2608, %v2651, %v2655
        %v2658 = vshrl.u32 %v2596, 16
        %v2660 = vshll.u32 %v2596, 16
        %v2662 = vrot.slane %v2660, 1
        %v2663 = vor.u32 %v2658, %v2662
        %v2665 = vshll.u32 %v2597, 16
        %v2667 = vrot.slane %v2665, 1
        %v2668 = vsel %vm2608, %v2663, %v2667
        %v2670 = vshrl.u32 %v2598, 16
        %v2672 = vshll.u32 %v2598, 16
        %v2674 = vrot.slane %v2672, 1
        %v2675 = vor.u32 %v2670, %v2674
        %v2677 = vshll.u32 %v2599, 16
        %v2679 = vrot.slane %v2677, 1
        %v2680 = vsel %vm2608, %v2675, %v2679
        %v2682 = vshrl.u32 %v2600, 16
        %v2684 = vshll.u32 %v2600, 16
        %v2686 = vrot.slane %v2684, 1
        %v2687 = vor.u32 %v2682, %v2686
        %v2689 = vshll.u32 %v2601, 16
        %v2691 = vrot.slane %v2689, 1
        %v2692 = vsel %vm2608, %v2687, %v2691
        %v2694 = vshrl.u32 %v2602, 16
        %v2696 = vshll.u32 %v2602, 16
        %v2698 = vrot.slane %v2696, 1
        %v2699 = vor.u32 %v2694, %v2698
        %v2701 = vshll.u32 %v2603, 16
        %v2703 = vrot.slane %v2701, 1
        %v2704 = vsel %vm2608, %v2699, %v2703
        %2705 = vrot.lane.b32.xlu0 %v2620, 32
        %v2706 = vpop.permute.xlu0 %2705
        %2707 = vrot.lane.b32.xlu0 %v2632, 32
        %v2708 = vpop.permute.xlu0 %2707
        %2709 = vrot.lane.b32.xlu0 %v2644, 32
        %v2710 = vpop.permute.xlu0 %2709
        %2711 = vrot.lane.b32.xlu0 %v2656, 32
        %v2712 = vpop.permute.xlu0 %2711
        %2713 = vrot.lane.b32.xlu0 %v2668, 32
        %v2714 = vpop.permute.xlu0 %2713
        %2715 = vrot.lane.b32.xlu0 %v2680, 32
        %v2716 = vpop.permute.xlu0 %2715
        %2717 = vrot.lane.b32.xlu0 %v2692, 32
        %v2718 = vpop.permute.xlu0 %2717
        %2719 = vrot.lane.b32.xlu0 %v2704, 32
        %v2720 = vpop.permute.xlu0 %2719
        %vm2737 = vcmask 1046528
        %v2738 = vrot.slane %v2588, 1
        %v2739 = vrot.slane %v2589, 1
        %v2740 = vsel %vm2737, %v2738, %v2739
        %v2741 = vrot.slane %v2590, 1
        %v2742 = vrot.slane %v2591, 1
        %v2743 = vsel %vm2737, %v2741, %v2742
        %v2744 = vrot.slane %v2592, 1
        %v2745 = vrot.slane %v2593, 1
        %v2746 = vsel %vm2737, %v2744, %v2745
        %v2747 = vrot.slane %v2594, 1
        %v2748 = vrot.slane %v2595, 1
        %v2749 = vsel %vm2737, %v2747, %v2748
        %v2750 = vrot.slane %v2596, 1
        %v2751 = vrot.slane %v2597, 1
        %v2752 = vsel %vm2737, %v2750, %v2751
        %v2753 = vrot.slane %v2598, 1
        %v2754 = vrot.slane %v2599, 1
        %v2755 = vsel %vm2737, %v2753, %v2754
        %v2756 = vrot.slane %v2600, 1
        %v2757 = vrot.slane %v2601, 1
        %v2758 = vsel %vm2737, %v2756, %v2757
        %v2759 = vrot.slane %v2602, 1
        %v2760 = vrot.slane %v2603, 1
        %v2761 = vsel %vm2737, %v2759, %v2760
        %2762 = vrot.lane.b32.xlu0 %v2740, 64
        %v2763 = vpop.permute.xlu0 %2762
        %2764 = vrot.lane.b32.xlu0 %v2743, 64
        %v2765 = vpop.permute.xlu0 %2764
        %2766 = vrot.lane.b32.xlu0 %v2746, 64
        %v2767 = vpop.permute.xlu0 %2766
        %2768 = vrot.lane.b32.xlu0 %v2749, 64
        %v2769 = vpop.permute.xlu0 %2768
        %2770 = vrot.lane.b32.xlu0 %v2752, 64
        %v2771 = vpop.permute.xlu0 %2770
        %2772 = vrot.lane.b32.xlu0 %v2755, 64
        %v2773 = vpop.permute.xlu0 %2772
        %2774 = vrot.lane.b32.xlu0 %v2758, 64
        %v2775 = vpop.permute.xlu0 %2774
        %2776 = vrot.lane.b32.xlu0 %v2761, 64
        %v2777 = vpop.permute.xlu0 %2776
        %2779 = vrot.lane.b32.xlu0 %v2590, 96
        %v2780 = vpop.permute.xlu0 %2779
        %2781 = vrot.lane.b32.xlu0 %v2592, 96
        %v2782 = vpop.permute.xlu0 %2781
        %2783 = vrot.lane.b32.xlu0 %v2594, 96
        %v2784 = vpop.permute.xlu0 %2783
        %2785 = vrot.lane.b32.xlu0 %v2596, 96
        %v2786 = vpop.permute.xlu0 %2785
        %2787 = vrot.lane.b32.xlu0 %v2598, 96
        %v2788 = vpop.permute.xlu0 %2787
        %2789 = vrot.lane.b32.xlu0 %v2600, 96
        %v2790 = vpop.permute.xlu0 %2789
        %2791 = vrot.lane.b32.xlu0 %v2602, 96
        %v2792 = vpop.permute.xlu0 %2791
        %2793 = vrot.lane.b32.xlu0 %v2604, 96
        %v2794 = vpop.permute.xlu0 %2793
        %v2796 = vshrl.u32 %v2604, 16
        %v2798 = vshll.u32 %v2604, 16
        %v2800 = vrot.slane %v2798, 1
        %v2801 = vor.u32 %v2796, %v2800
        %v2803 = vshll.u32 %v2605, 16
        %v2805 = vrot.slane %v2803, 1
        %v2806 = vsel %vm2608, %v2801, %v2805
        %v2808 = vrot.slane %v2604, 1
        %v2809 = vrot.slane %v2605, 1
        %v2810 = vsel %vm2737, %v2808, %v2809
        %2811 = vrot.lane.b32.xlu0 %v2743, 32
        %v2812 = vpop.permute.xlu0 %2811
        %2813 = vrot.lane.b32.xlu0 %v2746, 32
        %v2814 = vpop.permute.xlu0 %2813
        %2815 = vrot.lane.b32.xlu0 %v2749, 32
        %v2816 = vpop.permute.xlu0 %2815
        %2817 = vrot.lane.b32.xlu0 %v2752, 32
        %v2818 = vpop.permute.xlu0 %2817
        %2819 = vrot.lane.b32.xlu0 %v2755, 32
        %v2820 = vpop.permute.xlu0 %2819
        %2821 = vrot.lane.b32.xlu0 %v2758, 32
        %v2822 = vpop.permute.xlu0 %2821
        %2823 = vrot.lane.b32.xlu0 %v2761, 32
        %v2824 = vpop.permute.xlu0 %2823
        %2825 = vrot.lane.b32.xlu0 %v2810, 32
        %v2826 = vpop.permute.xlu0 %2825
        %2828 = vrot.lane.b32.xlu0 %v2592, 64
        %v2829 = vpop.permute.xlu0 %2828
        %2830 = vrot.lane.b32.xlu0 %v2594, 64
        %v2831 = vpop.permute.xlu0 %2830
        %2832 = vrot.lane.b32.xlu0 %v2596, 64
        %v2833 = vpop.permute.xlu0 %2832
        %2834 = vrot.lane.b32.xlu0 %v2598, 64
        %v2835 = vpop.permute.xlu0 %2834
        %2836 = vrot.lane.b32.xlu0 %v2600, 64
        %v2837 = vpop.permute.xlu0 %2836
        %2838 = vrot.lane.b32.xlu0 %v2602, 64
        %v2839 = vpop.permute.xlu0 %2838
        %2840 = vrot.lane.b32.xlu0 %v2604, 64
        %v2841 = vpop.permute.xlu0 %2840
        %2842 = vrot.lane.b32.xlu0 %v2606, 64
        %v2843 = vpop.permute.xlu0 %2842
        %v2845 = vshrl.u32 %v2606, 16
        %v2847 = vshll.u32 %v2606, 16
        %v2849 = vrot.slane %v2847, 1
        %v2850 = vor.u32 %v2845, %v2849
        %v2852 = vshll.u32 %v2607, 16
        %v2854 = vrot.slane %v2852, 1
        %v2855 = vsel %vm2608, %v2850, %v2854
        %2856 = vrot.lane.b32.xlu0 %v2644, 96
        %v2857 = vpop.permute.xlu0 %2856
        %2858 = vrot.lane.b32.xlu0 %v2656, 96
        %v2859 = vpop.permute.xlu0 %2858
        %2860 = vrot.lane.b32.xlu0 %v2668, 96
        %v2861 = vpop.permute.xlu0 %2860
        %2862 = vrot.lane.b32.xlu0 %v2680, 96
        %v2863 = vpop.permute.xlu0 %2862
        %2864 = vrot.lane.b32.xlu0 %v2692, 96
        %v2865 = vpop.permute.xlu0 %2864
        %2866 = vrot.lane.b32.xlu0 %v2704, 96
        %v2867 = vpop.permute.xlu0 %2866
        %2868 = vrot.lane.b32.xlu0 %v2806, 96
        %v2869 = vpop.permute.xlu0 %2868
        %2870 = vrot.lane.b32.xlu0 %v2855, 96
        %v2871 = vpop.permute.xlu0 %2870
        %v2873 = vrot.slane %v2606, 1
        %v2874 = vrot.slane %v2607, 1
        %v2875 = vsel %vm2737, %v2873, %v2874
        %vm2876 = vcmask 261120
        %v2878 = vsel %vm2876, %v2588, %v2706
        %v2880 = vsel %vm2876, %v2590, %v2708
        %v2882 = vsel %vm2876, %v2592, %v2710
        %v2884 = vsel %vm2876, %v2594, %v2712
        %v2886 = vsel %vm2876, %v2596, %v2714
        %v2888 = vsel %vm2876, %v2598, %v2716
        %v2890 = vsel %vm2876, %v2600, %v2718
        %v2892 = vsel %vm2876, %v2602, %v2720
        %vm2893 = vcmask 523264
        %v2895 = vsel %vm2893, %v2878, %v2763
        %v2897 = vsel %vm2893, %v2880, %v2765
        %v2899 = vsel %vm2893, %v2882, %v2767
        %v2901 = vsel %vm2893, %v2884, %v2769
        %v2903 = vsel %vm2893, %v2886, %v2771
        %v2905 = vsel %vm2893, %v2888, %v2773
        %v2907 = vsel %vm2893, %v2890, %v2775
        %v2909 = vsel %vm2893, %v2892, %v2777
        %vm2910 = vcmask 785408
        %v2912 = vsel %vm2910, %v2895, %v2780
        %v2915 = vsel %vm2910, %v2897, %v2782
        %v2918 = vsel %vm2910, %v2899, %v2784
        %v2921 = vsel %vm2910, %v2901, %v2786
        %v2924 = vsel %vm2910, %v2903, %v2788
        %v2927 = vsel %vm2910, %v2905, %v2790
        %v2930 = vsel %vm2910, %v2907, %v2792
        %v2933 = vsel %vm2910, %v2909, %v2794
        %v2937 = vsel %vm2876, %v2632, %v2812
        %v2940 = vsel %vm2876, %v2644, %v2814
        %v2943 = vsel %vm2876, %v2656, %v2816
        %v2946 = vsel %vm2876, %v2668, %v2818
        %v2949 = vsel %vm2876, %v2680, %v2820
        %v2952 = vsel %vm2876, %v2692, %v2822
        %v2955 = vsel %vm2876, %v2704, %v2824
        %v2958 = vsel %vm2876, %v2806, %v2826
        %v2960 = vsel %vm2893, %v2937, %v2829
        %v2962 = vsel %vm2893, %v2940, %v2831
        %v2964 = vsel %vm2893, %v2943, %v2833
        %v2966 = vsel %vm2893, %v2946, %v2835
        %v2968 = vsel %vm2893, %v2949, %v2837
        %v2970 = vsel %vm2893, %v2952, %v2839
        %v2972 = vsel %vm2893, %v2955, %v2841
        %v2974 = vsel %vm2893, %v2958, %v2843
        %v2976 = vsel %vm2910, %v2960, %v2857
        %v2979 = vsel %vm2910, %v2962, %v2859
        %v2982 = vsel %vm2910, %v2964, %v2861
        %v2985 = vsel %vm2910, %v2966, %v2863
        %v2988 = vsel %vm2910, %v2968, %v2865
        %v2991 = vsel %vm2910, %v2970, %v2867
        %v2994 = vsel %vm2910, %v2972, %v2869
        %v2997 = vsel %vm2910, %v2974, %v2871
        %v2999 = vld [vmem:[%s4] sm:$0xf]
        %v3000 = vld [vmem:[%s4 + $0x4] sm:$0xf]
        %v3001 = vld [vmem:[%s4 + $0x8] sm:$0xf]
        %v3002 = vld [vmem:[%s4 + $0xc] sm:$0xf]
        %v3003 = vld [vmem:[%s4 + $0x10] sm:$0xf]
        %v3004 = vld [vmem:[%s4 + $0x14] sm:$0xf]
        %v3005 = vld [vmem:[%s4 + $0x18] sm:$0xf]
        %v3006 = vld [vmem:[%s4 + $0x1c] sm:$0xf]
        %v3007 = vld [vmem:[%s4 + $0x20] sm:$0xf]
        %v3008 = vld [vmem:[%s4 + $0x24] sm:$0xf]
        %v3009 = vld [vmem:[%s4 + $0x28] sm:$0xf]
        %v3010 = vld [vmem:[%s4 + $0x2c] sm:$0xf]
        %v3011 = vld [vmem:[%s4 + $0x30] sm:$0xf]
        %v3012 = vld [vmem:[%s4 + $0x34] sm:$0xf]
        %v3013 = vld [vmem:[%s4 + $0x38] sm:$0xf]
        %v3014 = vld [vmem:[%s4 + $0x3c] sm:$0xf]
        %v3015 = vld [vmem:[%s4 + $0x40] sm:$0xf]
        %v3016 = vld [vmem:[%s4 + $0x44] sm:$0xf]
        %v3017 = vld [vmem:[%s4 + $0x48] sm:$0xf]
        %v3018 = vld [vmem:[%s4 + $0x4c] sm:$0xf]
        %v3019 = vld [vmem:[%s4 + $0x50] sm:$0xf]
        %v3020 = vld [vmem:[%s4 + $0x54] sm:$0xf]
        %v3021 = vld [vmem:[%s4 + $0x58] sm:$0xf]
        %v3022 = vld [vmem:[%s4 + $0x5c] sm:$0xf]
        %v3023 = vld [vmem:[%s4 + $0x60] sm:$0xf]
        %v3024 = vld [vmem:[%s4 + $0x64] sm:$0xf]
        %v3025 = vld [vmem:[%s4 + $0x68] sm:$0xf]
        %v3026 = vld [vmem:[%s4 + $0x6c] sm:$0xf]
        %v3027 = vld [vmem:[%s4 + $0x70] sm:$0xf]
        %v3028 = vld [vmem:[%s4 + $0x74] sm:$0xf]
        %v3029 = vld [vmem:[%s4 + $0x78] sm:$0xf]
        %v3030 = vld [vmem:[%s4 + $0x7c] sm:$0xf]
        %v3031 = vld [vmem:[%s4 + $0x80] sm:$0xf]
        %v3032 = vld [vmem:[%s4 + $0x84] sm:$0xf]
        %v3033 = vld [vmem:[%s4 + $0x88] sm:$0xf]
        %v3034 = vld [vmem:[%s4 + $0x8c] sm:$0xf]
        %v3071 = vunpack.c.l.b16 %v2999
        %v3072 = vunpack.c.l.b16 %v3000
        %v3073 = vunpack.c.l.b16 %v3001
        %v3074 = vunpack.c.l.b16 %v3002
        %v3075 = vunpack.c.l.b16 %v3003
        %v3076 = vunpack.c.l.b16 %v3004
        %v3077 = vunpack.c.l.b16 %v3005
        %v3078 = vunpack.c.l.b16 %v3006
        %v3079 = vunpack.c.l.b16 %v3007
        %v3080 = vunpack.c.l.b16 %v3008
        %v3081 = vunpack.c.l.b16 %v3009
        %v3082 = vunpack.c.l.b16 %v3010
        %v3083 = vunpack.c.l.b16 %v3011
        %v3084 = vunpack.c.l.b16 %v3012
        %v3085 = vunpack.c.l.b16 %v3013
        %v3086 = vunpack.c.l.b16 %v3014
        %v3087 = vunpack.c.l.b16 %v3015
        %v3088 = vunpack.c.l.b16 %v3016
        %v3089 = vunpack.c.l.b16 %v3017
        %v3090 = vunpack.c.l.b16 %v3018
        %v3091 = vunpack.c.l.b16 %v3019
        %v3092 = vunpack.c.l.b16 %v3020
        %v3093 = vunpack.c.l.b16 %v3021
        %v3094 = vunpack.c.l.b16 %v3022
        %v3095 = vunpack.c.l.b16 %v3023
        %v3096 = vunpack.c.l.b16 %v3024
        %v3097 = vunpack.c.l.b16 %v3025
        %v3098 = vunpack.c.l.b16 %v3026
        %v3099 = vunpack.c.l.b16 %v3027
        %v3100 = vunpack.c.l.b16 %v3028
        %v3101 = vunpack.c.l.b16 %v3029
        %v3102 = vunpack.c.l.b16 %v3030
        %v3103 = vunpack.c.l.b16 %v3031
        %v3104 = vunpack.c.l.b16 %v3032
        %v3105 = vunpack.c.l.b16 %v3033
        %v3106 = vunpack.c.l.b16 %v3034
        %v3107 = vpack.c.b16 %v3072, %v3071
        %v3108 = vpack.c.b16 %v3074, %v3073
        %v3109 = vpack.c.b16 %v3076, %v3075
        %v3110 = vpack.c.b16 %v3078, %v3077
        %v3111 = vpack.c.b16 %v3080, %v3079
        %v3112 = vpack.c.b16 %v3082, %v3081
        %v3113 = vpack.c.b16 %v3084, %v3083
        %v3114 = vpack.c.b16 %v3086, %v3085
        %v3115 = vpack.c.b16 %v3088, %v3087
        %v3116 = vpack.c.b16 %v3090, %v3089
        %v3117 = vpack.c.b16 %v3092, %v3091
        %v3118 = vpack.c.b16 %v3094, %v3093
        %v3119 = vpack.c.b16 %v3096, %v3095
        %v3120 = vpack.c.b16 %v3098, %v3097
        %v3121 = vpack.c.b16 %v3100, %v3099
        %v3122 = vpack.c.b16 %v3102, %v3101
        %v3123 = vpack.c.b16 %v3104, %v3103
        %v3124 = vpack.c.b16 %v3106, %v3105
        %v3144 = vsel %vm2876, %v2746, 0
        %v3147 = vsel %vm2876, %v2749, 0
        %v3150 = vsel %vm2876, %v2752, 0
        %v3153 = vsel %vm2876, %v2755, 0
        %v3156 = vsel %vm2876, %v2758, 0
        %v3159 = vsel %vm2876, %v2761, 0
        %v3162 = vsel %vm2876, %v2810, 0
        %v3165 = vsel %vm2876, %v2875, 0
        %3167 = vmatprep.subr.bf16.mxu0 0
        %3168 = vmatpush1.bf16.msra.mxu0 %v3107
        %3169 = vmatprep.subr.bf16.mxu0 0
        %3170 = vmatpush1.bf16.msra.mxu0 %v3108
        %3171 = vmatprep.subr.bf16.mxu0 0
        %3172 = vmatpush1.bf16.msra.mxu0 %v3109
        %3173 = vmatprep.subr.bf16.mxu0 0
        %3174 = vmatpush1.bf16.msra.mxu0 %v3110
        %3175 = vmatprep.subr.bf16.mxu0 0
        %3176 = vmatpush1.bf16.msra.mxu0 %v3111
        %3177 = vmatprep.subr.bf16.mxu0 0
        %3178 = vmatpush1.bf16.msra.mxu0 %v3112
        %3179 = vmatprep.subr.bf16.mxu0 0
        %3180 = vmatpush1.bf16.msra.mxu0 %v3113
        %3181 = vmatprep.subr.bf16.mxu0 0
        %3182 = vmatpush1.bf16.msra.mxu0 %v3114
        %3183 = vmatprep.subr.bf16.mxu0 0
        %3184 = vmatpush1.bf16.msra.mxu0 %v3115
        %3185 = vmatprep.subr.bf16.mxu0 0
        %3186 = vmatpush1.bf16.msra.mxu0 %v3116
        %3187 = vmatprep.subr.bf16.mxu0 0
        %3188 = vmatpush1.bf16.msra.mxu0 %v3117
        %3189 = vmatprep.subr.bf16.mxu0 0
        %3190 = vmatpush1.bf16.msra.mxu0 %v3118
        %3191 = vmatprep.subr.bf16.mxu0 0
        %3192 = vmatpush1.bf16.msra.mxu0 %v3119
        %3193 = vmatprep.subr.bf16.mxu0 0
        %3194 = vmatpush1.bf16.msra.mxu0 %v3120
        %3195 = vmatprep.subr.bf16.mxu0 0
        %3196 = vmatpush1.bf16.msra.mxu0 %v3121
        %3197 = vmatprep.subr.bf16.mxu0 0
        %3198 = vmatpush1.bf16.msra.mxu0 %v3122
        %3199 = vmatprep.mubr.bf16.mxu0 %v2976
        %3200 = vmatmul.mubr.bf16.gmra.mrb[0].mxu0 %v2912
        %v3201 = vpop.f32.mrb[0].mxu0
        %v3202 = vadd.f32 0.0, %v3201
        %v3203 = vpop.f32.mrb[0].mxu0
        %v3204 = vpop.f32.mrb[0].mxu0
        %v3205 = vadd.f32 0.0, %v3204
        %v3206 = vpop.f32.mrb[0].mxu0
        %3207 = vmatprep.mubr.bf16.mxu0 %v2979
        %3208 = vmatmul.mubr.bf16.gmra.mrb[0].mxu0 %v2915
        %v3209 = vpop.f32.mrb[0].mxu0
        %v3210 = vadd.f32 0.0, %v3209
        %v3211 = vpop.f32.mrb[0].mxu0
        %v3212 = vpop.f32.mrb[0].mxu0
        %v3213 = vadd.f32 0.0, %v3212
        %v3214 = vpop.f32.mrb[0].mxu0
        %3215 = vmatprep.mubr.bf16.mxu0 %v2982
        %3216 = vmatmul.mubr.bf16.gmra.mrb[0].mxu0 %v2918
        %v3217 = vpop.f32.mrb[0].mxu0
        %v3218 = vadd.f32 0.0, %v3217
        %v3219 = vpop.f32.mrb[0].mxu0
        %v3220 = vpop.f32.mrb[0].mxu0
        %v3221 = vadd.f32 0.0, %v3220
        %v3222 = vpop.f32.mrb[0].mxu0
        %3223 = vmatprep.mubr.bf16.mxu0 %v2985
        %3224 = vmatmul.mubr.bf16.gmra.mrb[0].mxu0 %v2921
        %v3225 = vpop.f32.mrb[0].mxu0
        %v3226 = vadd.f32 0.0, %v3225
        %v3227 = vpop.f32.mrb[0].mxu0
        %v3228 = vpop.f32.mrb[0].mxu0
        %v3229 = vadd.f32 0.0, %v3228
        %v3230 = vpop.f32.mrb[0].mxu0
        %3231 = vmatprep.mubr.bf16.mxu0 %v2988
        %3232 = vmatmul.mubr.bf16.gmra.mrb[0].mxu0 %v2924
        %v3233 = vpop.f32.mrb[0].mxu0
        %v3234 = vadd.f32 0.0, %v3233
        %v3235 = vpop.f32.mrb[0].mxu0
        %v3236 = vpop.f32.mrb[0].mxu0
        %v3237 = vadd.f32 0.0, %v3236
        %v3238 = vpop.f32.mrb[0].mxu0
        %3239 = vmatprep.mubr.bf16.mxu0 %v2991
        %3240 = vmatmul.mubr.bf16.gmra.mrb[0].mxu0 %v2927
        %v3241 = vpop.f32.mrb[0].mxu0
        %v3242 = vadd.f32 0.0, %v3241
        %v3243 = vpop.f32.mrb[0].mxu0
        %v3244 = vpop.f32.mrb[0].mxu0
        %v3245 = vadd.f32 0.0, %v3244
        %v3246 = vpop.f32.mrb[0].mxu0
        %3247 = vmatprep.mubr.bf16.mxu0 %v2994
        %3248 = vmatmul.mubr.bf16.gmra.mrb[0].mxu0 %v2930
        %v3249 = vpop.f32.mrb[0].mxu0
        %v3250 = vadd.f32 0.0, %v3249
        %v3251 = vpop.f32.mrb[0].mxu0
        %v3252 = vpop.f32.mrb[0].mxu0
        %v3253 = vadd.f32 0.0, %v3252
        %v3254 = vpop.f32.mrb[0].mxu0
        %3255 = vmatprep.mubr.bf16.mxu0 %v2997
        %3256 = vmatmul.mubr.bf16.gmra.mrb[0].mxu0 %v2933
        %v3257 = vpop.f32.mrb[0].mxu0
        %v3258 = vadd.f32 0.0, %v3257
        %v3259 = vpop.f32.mrb[0].mxu0
        %v3260 = vpop.f32.mrb[0].mxu0
        %v3261 = vadd.f32 0.0, %v3260
        %v3262 = vpop.f32.mrb[0].mxu0
        %3263 = vdwg.mxu0
        %3264 = vmatprep.subr.bf16.mxu0 0
        %3265 = vmatpush1.bf16.msra.mxu0 %v3123
        %3266 = vmatprep.subr.bf16.mxu0 0
        %3267 = vmatpush1.bf16.msra.mxu0 %v3124
        %3268 = vmatprep.subr.bf16.mxu0 0
        %3269 = vmatpush1.bf16.msra.mxu0 0
        %3270 = vmatprep.subr.bf16.mxu0 0
        %3271 = vmatpush1.bf16.msra.mxu0 0
        %3272 = vmatprep.subr.bf16.mxu0 0
        %3273 = vmatpush1.bf16.msra.mxu0 0
        %3274 = vmatprep.subr.bf16.mxu0 0
        %3275 = vmatpush1.bf16.msra.mxu0 0
        %3276 = vmatprep.subr.bf16.mxu0 0
        %3277 = vmatpush1.bf16.msra.mxu0 0
        %3278 = vmatprep.subr.bf16.mxu0 0
        %3279 = vmatpush1.bf16.msra.mxu0 0
        %3280 = vmatprep.subr.bf16.mxu0 0
        %3281 = vmatpush1.bf16.msra.mxu0 0
        %3282 = vmatprep.subr.bf16.mxu0 0
        %3283 = vmatpush1.bf16.msra.mxu0 0
        %3284 = vmatprep.subr.bf16.mxu0 0
        %3285 = vmatpush1.bf16.msra.mxu0 0
        %3286 = vmatprep.subr.bf16.mxu0 0
        %3287 = vmatpush1.bf16.msra.mxu0 0
        %3288 = vmatprep.subr.bf16.mxu0 0
        %3289 = vmatpush1.bf16.msra.mxu0 0
        %3290 = vmatprep.subr.bf16.mxu0 0
        %3291 = vmatpush1.bf16.msra.mxu0 0
        %3292 = vmatprep.subr.bf16.mxu0 0
        %3293 = vmatpush1.bf16.msra.mxu0 0
        %3294 = vmatprep.subr.bf16.mxu0 0
        %3295 = vmatpush1.bf16.msra.mxu0 0
        %3296 = vmatprep.mubr.bf16.mxu0 0
        %3297 = vmatmul.mubr.bf16.gmra.mrb[0].mxu0 %v3144
        %v3298 = vpop.f32.mrb[0].mxu0
        %v3299 = vadd.f32 %v3202, %v3298
        %v3300 = vpop.f32.mrb[0].mxu0
        %v3301 = vpop.f32.mrb[0].mxu0
        %v3302 = vadd.f32 %v3205, %v3301
        %v3303 = vpop.f32.mrb[0].mxu0
        %3304 = vmatprep.mubr.bf16.mxu0 0
        %3305 = vmatmul.mubr.bf16.gmra.mrb[0].mxu0 %v3147
        %v3306 = vpop.f32.mrb[0].mxu0
        %v3307 = vadd.f32 %v3210, %v3306
        %v3308 = vpop.f32.mrb[0].mxu0
        %v3309 = vpop.f32.mrb[0].mxu0
        %v3310 = vadd.f32 %v3213, %v3309
        %v3311 = vpop.f32.mrb[0].mxu0
        %3312 = vmatprep.mubr.bf16.mxu0 0
        %3313 = vmatmul.mubr.bf16.gmra.mrb[0].mxu0 %v3150
        %v3314 = vpop.f32.mrb[0].mxu0
        %v3315 = vadd.f32 %v3218, %v3314
        %v3316 = vpop.f32.mrb[0].mxu0
        %v3317 = vpop.f32.mrb[0].mxu0
        %v3318 = vadd.f32 %v3221, %v3317
        %v3319 = vpop.f32.mrb[0].mxu0
        %3320 = vmatprep.mubr.bf16.mxu0 0
        %3321 = vmatmul.mubr.bf16.gmra.mrb[0].mxu0 %v3153
        %v3322 = vpop.f32.mrb[0].mxu0
        %v3323 = vadd.f32 %v3226, %v3322
        %v3324 = vpop.f32.mrb[0].mxu0
        %v3325 = vpop.f32.mrb[0].mxu0
        %v3326 = vadd.f32 %v3229, %v3325
        %v3327 = vpop.f32.mrb[0].mxu0
        %3328 = vmatprep.mubr.bf16.mxu0 0
        %3329 = vmatmul.mubr.bf16.gmra.mrb[0].mxu0 %v3156
        %v3330 = vpop.f32.mrb[0].mxu0
        %v3331 = vadd.f32 %v3234, %v3330
        %v3332 = vpop.f32.mrb[0].mxu0
        %v3333 = vpop.f32.mrb[0].mxu0
        %v3334 = vadd.f32 %v3237, %v3333
        %v3335 = vpop.f32.mrb[0].mxu0
        %3336 = vmatprep.mubr.bf16.mxu0 0
        %3337 = vmatmul.mubr.bf16.gmra.mrb[0].mxu0 %v3159
        %v3338 = vpop.f32.mrb[0].mxu0
        %v3339 = vadd.f32 %v3242, %v3338
        %v3340 = vpop.f32.mrb[0].mxu0
        %v3341 = vpop.f32.mrb[0].mxu0
        %v3342 = vadd.f32 %v3245, %v3341
        %v3343 = vpop.f32.mrb[0].mxu0
        %3344 = vmatprep.mubr.bf16.mxu0 0
        %3345 = vmatmul.mubr.bf16.gmra.mrb[0].mxu0 %v3162
        %v3346 = vpop.f32.mrb[0].mxu0
        %v3347 = vadd.f32 %v3250, %v3346
        %v3348 = vpop.f32.mrb[0].mxu0
        %v3349 = vpop.f32.mrb[0].mxu0
        %v3350 = vadd.f32 %v3253, %v3349
        %v3351 = vpop.f32.mrb[0].mxu0
        %3352 = vmatprep.mubr.bf16.mxu0 0
        %3353 = vmatmul.mubr.bf16.gmra.mrb[0].mxu0 %v3165
        %v3354 = vpop.f32.mrb[0].mxu0
        %v3355 = vadd.f32 %v3258, %v3354
        %v3356 = vpop.f32.mrb[0].mxu0
        %v3357 = vpop.f32.mrb[0].mxu0
        %v3358 = vadd.f32 %v3261, %v3357
        %v3359 = vpop.f32.mrb[0].mxu0
        %3360 = vdwg.mxu0
        %v3361 = vld [vmem:[%s5] sm:$0x1]
        %v3363 = vlaneseq
        %v3364 = vshrl.u32 %v3363, 7
        %v3365 = vsub.s32 0, %v3364
        %v3366 = vrot.slane %v3361, %v3365
        %v3368 = vmul.f32 %v3299, %v3366
        %v3369 = vmul.f32 %v3302, %v3366
        %v3370 = vmul.f32 %v3307, %v3366
        %v3371 = vmul.f32 %v3310, %v3366
        %v3372 = vmul.f32 %v3315, %v3366
        %v3373 = vmul.f32 %v3318, %v3366
        %v3374 = vmul.f32 %v3323, %v3366
        %v3375 = vmul.f32 %v3326, %v3366
        %v3376 = vmul.f32 %v3331, %v3366
        %v3377 = vmul.f32 %v3334, %v3366
        %v3378 = vmul.f32 %v3339, %v3366
        %v3379 = vmul.f32 %v3342, %v3366
        %v3380 = vmul.f32 %v3347, %v3366
        %v3381 = vmul.f32 %v3350, %v3366
        %v3382 = vmul.f32 %v3355, %v3366
        %v3383 = vmul.f32 %v3358, %v3366
        %v3384 = vld [vmem:[%s6] sm:$0x1]
        %v3386 = vlaneseq
        %v3387 = vshrl.u32 %v3386, 7
        %v3388 = vsub.s32 0, %v3387
        %v3389 = vrot.slane %v3384, %v3388
        %v3391 = vadd.f32 %v3368, %v3389
        %v3392 = vadd.f32 %v3369, %v3389
        %v3393 = vadd.f32 %v3370, %v3389
        %v3394 = vadd.f32 %v3371, %v3389
        %v3395 = vadd.f32 %v3372, %v3389
        %v3396 = vadd.f32 %v3373, %v3389
        %v3397 = vadd.f32 %v3374, %v3389
        %v3398 = vadd.f32 %v3375, %v3389
        %v3399 = vadd.f32 %v3376, %v3389
        %v3400 = vadd.f32 %v3377, %v3389
        %v3401 = vadd.f32 %v3378, %v3389
        %v3402 = vadd.f32 %v3379, %v3389
        %v3403 = vadd.f32 %v3380, %v3389
        %v3404 = vadd.f32 %v3381, %v3389
        %v3405 = vadd.f32 %v3382, %v3389
        %v3406 = vadd.f32 %v3383, %v3389
        %v3407 = vmax.f32 %v3391, 0.0
        %v3408 = vmax.f32 %v3392, 0.0
        %v3409 = vmax.f32 %v3393, 0.0
        %v3410 = vmax.f32 %v3394, 0.0
        %v3411 = vmax.f32 %v3395, 0.0
        %v3412 = vmax.f32 %v3396, 0.0
        %v3413 = vmax.f32 %v3397, 0.0
        %v3414 = vmax.f32 %v3398, 0.0
        %v3415 = vmax.f32 %v3399, 0.0
        %v3416 = vmax.f32 %v3400, 0.0
        %v3417 = vmax.f32 %v3401, 0.0
        %v3418 = vmax.f32 %v3402, 0.0
        %v3419 = vmax.f32 %v3403, 0.0
        %v3420 = vmax.f32 %v3404, 0.0
        %v3421 = vmax.f32 %v3405, 0.0
        %v3422 = vmax.f32 %v3406, 0.0
        %v3423 = vpack.c.bf16 %v3408, %v3407
        %v3424 = vpack.c.bf16 %v3410, %v3409
        %v3425 = vpack.c.bf16 %v3412, %v3411
        %v3426 = vpack.c.bf16 %v3414, %v3413
        %v3427 = vpack.c.bf16 %v3416, %v3415
        %v3428 = vpack.c.bf16 %v3418, %v3417
        %v3429 = vpack.c.bf16 %v3420, %v3419
        %v3430 = vpack.c.bf16 %v3422, %v3421
        %v3431 = vld [vmem:[%s7] sm:$0xf]
        %v3432 = vld [vmem:[%s7 + $0x4] sm:$0xf]
        %v3433 = vld [vmem:[%s7 + $0x8] sm:$0xf]
        %v3434 = vld [vmem:[%s7 + $0xc] sm:$0xf]
        %v3439 = vunpack.c.l.b16 %v3431
        %v3440 = vunpack.c.l.b16 %v3432
        %v3441 = vunpack.c.l.b16 %v3433
        %v3442 = vunpack.c.l.b16 %v3434
        %v3443 = vpack.c.b16 %v3440, %v3439
        %v3444 = vpack.c.b16 %v3442, %v3441
        %v3448 = vsel %vm2876, %v3423, 0
        %v3451 = vsel %vm2876, %v3424, 0
        %v3454 = vsel %vm2876, %v3425, 0
        %v3457 = vsel %vm2876, %v3426, 0
        %v3460 = vsel %vm2876, %v3427, 0
        %v3463 = vsel %vm2876, %v3428, 0
        %v3466 = vsel %vm2876, %v3429, 0
        %v3469 = vsel %vm2876, %v3430, 0
        %3471 = vmatprep.subr.bf16.mxu0 0
        %3472 = vmatpush1.bf16.msra.mxu0 %v3443
        %3473 = vmatprep.subr.bf16.mxu0 0
        %3474 = vmatpush1.bf16.msra.mxu0 %v3444
        %3475 = vmatprep.subr.bf16.mxu0 0
        %3476 = vmatpush1.bf16.msra.mxu0 0
        %3477 = vmatprep.subr.bf16.mxu0 0
        %3478 = vmatpush1.bf16.msra.mxu0 0
        %3479 = vmatprep.subr.bf16.mxu0 0
        %3480 = vmatpush1.bf16.msra.mxu0 0
        %3481 = vmatprep.subr.bf16.mxu0 0
        %3482 = vmatpush1.bf16.msra.mxu0 0
        %3483 = vmatprep.subr.bf16.mxu0 0
        %3484 = vmatpush1.bf16.msra.mxu0 0
        %3485 = vmatprep.subr.bf16.mxu0 0
        %3486 = vmatpush1.bf16.msra.mxu0 0
        %3487 = vmatprep.subr.bf16.mxu0 0
        %3488 = vmatpush1.bf16.msra.mxu0 0
        %3489 = vmatprep.subr.bf16.mxu0 0
        %3490 = vmatpush1.bf16.msra.mxu0 0
        %3491 = vmatprep.subr.bf16.mxu0 0
        %3492 = vmatpush1.bf16.msra.mxu0 0
        %3493 = vmatprep.subr.bf16.mxu0 0
        %3494 = vmatpush1.bf16.msra.mxu0 0
        %3495 = vmatprep.subr.bf16.mxu0 0
        %3496 = vmatpush1.bf16.msra.mxu0 0
        %3497 = vmatprep.subr.bf16.mxu0 0
        %3498 = vmatpush1.bf16.msra.mxu0 0
        %3499 = vmatprep.subr.bf16.mxu0 0
        %3500 = vmatpush1.bf16.msra.mxu0 0
        %3501 = vmatprep.subr.bf16.mxu0 0
        %3502 = vmatpush1.bf16.msra.mxu0 0
        %3503 = vmatprep.mubr.bf16.mxu0 0
        %3504 = vmatmul.mubr.bf16.gmra.mrb[0].mxu0 %v3448
        %v3505 = vpop.f32.mrb[0].mxu0
        %v3506 = vadd.f32 0.0, %v3505
        %v3507 = vpop.f32.mrb[0].mxu0
        %v3508 = vpop.f32.mrb[0].mxu0
        %v3509 = vadd.f32 0.0, %v3508
        %v3510 = vpop.f32.mrb[0].mxu0
        %3511 = vmatprep.mubr.bf16.mxu0 0
        %3512 = vmatmul.mubr.bf16.gmra.mrb[0].mxu0 %v3451
        %v3513 = vpop.f32.mrb[0].mxu0
        %v3514 = vadd.f32 0.0, %v3513
        %v3515 = vpop.f32.mrb[0].mxu0
        %v3516 = vpop.f32.mrb[0].mxu0
        %v3517 = vadd.f32 0.0, %v3516
        %v3518 = vpop.f32.mrb[0].mxu0
        %3519 = vmatprep.mubr.bf16.mxu0 0
        %3520 = vmatmul.mubr.bf16.gmra.mrb[0].mxu0 %v3454
        %v3521 = vpop.f32.mrb[0].mxu0
        %v3522 = vadd.f32 0.0, %v3521
        %v3523 = vpop.f32.mrb[0].mxu0
        %v3524 = vpop.f32.mrb[0].mxu0
        %v3525 = vadd.f32 0.0, %v3524
        %v3526 = vpop.f32.mrb[0].mxu0
        %3527 = vmatprep.mubr.bf16.mxu0 0
        %3528 = vmatmul.mubr.bf16.gmra.mrb[0].mxu0 %v3457
        %v3529 = vpop.f32.mrb[0].mxu0
        %v3530 = vadd.f32 0.0, %v3529
        %v3531 = vpop.f32.mrb[0].mxu0
        %v3532 = vpop.f32.mrb[0].mxu0
        %v3533 = vadd.f32 0.0, %v3532
        %v3534 = vpop.f32.mrb[0].mxu0
        %3535 = vmatprep.mubr.bf16.mxu0 0
        %3536 = vmatmul.mubr.bf16.gmra.mrb[0].mxu0 %v3460
        %v3537 = vpop.f32.mrb[0].mxu0
        %v3538 = vadd.f32 0.0, %v3537
        %v3539 = vpop.f32.mrb[0].mxu0
        %v3540 = vpop.f32.mrb[0].mxu0
        %v3541 = vadd.f32 0.0, %v3540
        %v3542 = vpop.f32.mrb[0].mxu0
        %3543 = vmatprep.mubr.bf16.mxu0 0
        %3544 = vmatmul.mubr.bf16.gmra.mrb[0].mxu0 %v3463
        %v3545 = vpop.f32.mrb[0].mxu0
        %v3546 = vadd.f32 0.0, %v3545
        %v3547 = vpop.f32.mrb[0].mxu0
        %v3548 = vpop.f32.mrb[0].mxu0
        %v3549 = vadd.f32 0.0, %v3548
        %v3550 = vpop.f32.mrb[0].mxu0
        %3551 = vmatprep.mubr.bf16.mxu0 0
        %3552 = vmatmul.mubr.bf16.gmra.mrb[0].mxu0 %v3466
        %v3553 = vpop.f32.mrb[0].mxu0
        %v3554 = vadd.f32 0.0, %v3553
        %v3555 = vpop.f32.mrb[0].mxu0
        %v3556 = vpop.f32.mrb[0].mxu0
        %v3557 = vadd.f32 0.0, %v3556
        %v3558 = vpop.f32.mrb[0].mxu0
        %3559 = vmatprep.mubr.bf16.mxu0 0
        %3560 = vmatmul.mubr.bf16.gmra.mrb[0].mxu0 %v3469
        %v3561 = vpop.f32.mrb[0].mxu0
        %v3562 = vadd.f32 0.0, %v3561
        %v3563 = vpop.f32.mrb[0].mxu0
        %v3564 = vpop.f32.mrb[0].mxu0
        %v3565 = vadd.f32 0.0, %v3564
        %v3566 = vpop.f32.mrb[0].mxu0
        %3567 = vdwg.mxu0
        %v3568 = vld [vmem:[%s8] sm:$0x1]
        %v3570 = vlaneseq
        %v3571 = vshrl.u32 %v3570, 7
        %v3572 = vsub.s32 0, %v3571
        %v3573 = vrot.slane %v3568, %v3572
        %v3575 = vmul.f32 %v3506, %v3573
        %v3576 = vmul.f32 %v3509, %v3573
        %v3577 = vmul.f32 %v3514, %v3573
        %v3578 = vmul.f32 %v3517, %v3573
        %v3579 = vmul.f32 %v3522, %v3573
        %v3580 = vmul.f32 %v3525, %v3573
        %v3581 = vmul.f32 %v3530, %v3573
        %v3582 = vmul.f32 %v3533, %v3573
        %v3583 = vmul.f32 %v3538, %v3573
        %v3584 = vmul.f32 %v3541, %v3573
        %v3585 = vmul.f32 %v3546, %v3573
        %v3586 = vmul.f32 %v3549, %v3573
        %v3587 = vmul.f32 %v3554, %v3573
        %v3588 = vmul.f32 %v3557, %v3573
        %v3589 = vmul.f32 %v3562, %v3573
        %v3590 = vmul.f32 %v3565, %v3573
        %v3591 = vld [vmem:[%s9] sm:$0x1]
        %v3593 = vlaneseq
        %v3594 = vshrl.u32 %v3593, 7
        %v3595 = vsub.s32 0, %v3594
        %v3596 = vrot.slane %v3591, %v3595
        %v3598 = vadd.f32 %v3575, %v3596
        %v3599 = vadd.f32 %v3576, %v3596
        %v3600 = vadd.f32 %v3577, %v3596
        %v3601 = vadd.f32 %v3578, %v3596
        %v3602 = vadd.f32 %v3579, %v3596
        %v3603 = vadd.f32 %v3580, %v3596
        %v3604 = vadd.f32 %v3581, %v3596
        %v3605 = vadd.f32 %v3582, %v3596
        %v3606 = vadd.f32 %v3583, %v3596
        %v3607 = vadd.f32 %v3584, %v3596
        %v3608 = vadd.f32 %v3585, %v3596
        %v3609 = vadd.f32 %v3586, %v3596
        %v3610 = vadd.f32 %v3587, %v3596
        %v3611 = vadd.f32 %v3588, %v3596
        %v3612 = vadd.f32 %v3589, %v3596
        %v3613 = vadd.f32 %v3590, %v3596
        %s3614 = sadd.s32 %s374, 1
        %s3615 = smul.u32 %s3614, 24
        %s3616 = scalar_lea.vmem %s371, %s3615
        %v3617 = vld [vmem:[%s3616 + $0x1] sm:$0xff]
        %v3618 = vld [vmem:[%s3616 + $0x9] sm:$0xff]
        %v3619 = vld [vmem:[%s3616 + $0x19] sm:$0xff]
        %v3620 = vld [vmem:[%s3616 + $0x21] sm:$0xff]
        %v3621 = vld [vmem:[%s3616 + $0x31] sm:$0xff]
        %v3622 = vld [vmem:[%s3616 + $0x39] sm:$0xff]
        %v3623 = vld [vmem:[%s3616 + $0x49] sm:$0xff]
        %v3624 = vld [vmem:[%s3616 + $0x51] sm:$0xff]
        %v3625 = vld [vmem:[%s3616 + $0x61] sm:$0xff]
        %v3626 = vld [vmem:[%s3616 + $0x69] sm:$0xff]
        %v3627 = vld [vmem:[%s3616 + $0x79] sm:$0xff]
        %v3628 = vld [vmem:[%s3616 + $0x81] sm:$0xff]
        %v3629 = vld [vmem:[%s3616 + $0x91] sm:$0xff]
        %v3630 = vld [vmem:[%s3616 + $0x99] sm:$0xff]
        %v3631 = vld [vmem:[%s3616 + $0xa9] sm:$0xff]
        %v3632 = vld [vmem:[%s3616 + $0xb1] sm:$0xff]
        %v3633 = vadd.f32 %v3598, %v3617
        %v3634 = vadd.f32 %v3599, %v3618
        %v3635 = vadd.f32 %v3600, %v3619
        %v3636 = vadd.f32 %v3601, %v3620
        %v3637 = vadd.f32 %v3602, %v3621
        %v3638 = vadd.f32 %v3603, %v3622
        %v3639 = vadd.f32 %v3604, %v3623
        %v3640 = vadd.f32 %v3605, %v3624
        %v3641 = vadd.f32 %v3606, %v3625
        %v3642 = vadd.f32 %v3607, %v3626
        %v3643 = vadd.f32 %v3608, %v3627
        %v3644 = vadd.f32 %v3609, %v3628
        %v3645 = vadd.f32 %v3610, %v3629
        %v3646 = vadd.f32 %v3611, %v3630
        %v3647 = vadd.f32 %v3612, %v3631
        %v3648 = vadd.f32 %v3613, %v3632
        %v3649 = vmax.f32 %v3633, 0.0
        %v3650 = vmax.f32 %v3634, 0.0
        %v3651 = vmax.f32 %v3635, 0.0
        %v3652 = vmax.f32 %v3636, 0.0
        %v3653 = vmax.f32 %v3637, 0.0
        %v3654 = vmax.f32 %v3638, 0.0
        %v3655 = vmax.f32 %v3639, 0.0
        %v3656 = vmax.f32 %v3640, 0.0
        %v3657 = vmax.f32 %v3641, 0.0
        %v3658 = vmax.f32 %v3642, 0.0
        %v3659 = vmax.f32 %v3643, 0.0
        %v3660 = vmax.f32 %v3644, 0.0
        %v3661 = vmax.f32 %v3645, 0.0
        %v3662 = vmax.f32 %v3646, 0.0
        %v3663 = vmax.f32 %v3647, 0.0
        %v3664 = vmax.f32 %v3648, 0.0
        %3665 = vst [vmem:[%s366] sm:$0xff] %v3649
        %3666 = vst [vmem:[%s366 + $0x8] sm:$0xff] %v3650
        %3667 = vst [vmem:[%s366 + $0x10] sm:$0xff] %v3651
        %3668 = vst [vmem:[%s366 + $0x18] sm:$0xff] %v3652
        %3669 = vst [vmem:[%s366 + $0x20] sm:$0xff] %v3653
        %3670 = vst [vmem:[%s366 + $0x28] sm:$0xff] %v3654
        %3671 = vst [vmem:[%s366 + $0x30] sm:$0xff] %v3655
        %3672 = vst [vmem:[%s366 + $0x38] sm:$0xff] %v3656
        %3673 = vst [vmem:[%s366 + $0x40] sm:$0xff] %v3657
        %3674 = vst [vmem:[%s366 + $0x48] sm:$0xff] %v3658
        %3675 = vst [vmem:[%s366 + $0x50] sm:$0xff] %v3659
        %3676 = vst [vmem:[%s366 + $0x58] sm:$0xff] %v3660
        %3677 = vst [vmem:[%s366 + $0x60] sm:$0xff] %v3661
        %3678 = vst [vmem:[%s366 + $0x68] sm:$0xff] %v3662
        %3679 = vst [vmem:[%s366 + $0x70] sm:$0xff] %v3663
        %3680 = vst [vmem:[%s366 + $0x78] sm:$0xff] %v3664
        %s3681 = sand.u32 %s261, 1
        %s3682 = scalar_lea.sflag [#allocation3], %s3681
        %s3683 = sand.u32 %s261, 1
        %s3684 = smul.addr %s3683, 128
        %s3685 = scalar_lea.vmem [#allocation2], %s3684
        // Predicated region
        $region61: #{tpu_custom_call.1} parent=59 // pred_check
          %p3686 = pneg %p271
        $region62: #{tpu_custom_call.1} parent=59 // pred_check_branch
          %3688 = sbr.rel (%p3686) target = $region64
        $region63: #{tpu_custom_call.1} parent=59 // pred_region
          %s3689 = smul.u32 8, %s29
          %s3691 = ssub.s32 2048, 2048
          %3692 = vsyncadd %s3682, %s3691
          %s3693 = smul.addr %s3689, 2
          %s3694 = smul.addr %s28, 32
          %s3695 = sadd.s32 %s3693, %s3694
          %s3696 = smul.addr %s3695, 128
          %s3697 = scalar_lea.hbm %s10, %s3696
          %s3698 = sshll.u32 %s3685, 4
          %s3699 = int_to_ptr.vmem [resolvable:$true] %s3698
          %3704 = dma.vmem_to_hbm [thread:$0]  %s3699, 2048, %s3697, %s3682, 128, 128, 8
        $region64: #{tpu_custom_call.1} parent=59 // pred_fallthru
          _
      $region60: #{tpu_custom_call.1} parent=5 // pred_fallthru
        _
      %p3705 = scmp.le.s32.totalorder 2, %s19
      // Predicated region
      $region65: #{tpu_custom_call.1} parent=5 // pred_check
        %p3706 = pneg %p3705
      $region66: #{tpu_custom_call.1} parent=5 // pred_check_branch
        %3708 = sbr.rel (%p3706) target = $region68
      $region67: #{tpu_custom_call.1} parent=5 // pred_region
        %s3709 = ssub.s32 %s19, 2
        // Predicated region
        $region69: #{tpu_custom_call.1} parent=67 // pred_check
          %p3710 = pneg %p277
        $region70: #{tpu_custom_call.1} parent=67 // pred_check_branch
          %3712 = sbr.rel (%p3710) target = $region72
        $region71: #{tpu_custom_call.1} parent=67 // pred_region
          %s3713 = sand.u32 %s262, 1
          %s3714 = scalar_lea.sflag [#allocation3], %s3713
          %s3715 = sand.u32 %s262, 1
          %s3716 = smul.addr %s3715, 128
          %s3717 = scalar_lea.vmem [#allocation2], %s3716
          %3718 = dma.done %s3714, 2048
        $region72: #{tpu_custom_call.1} parent=67 // pred_fallthru
          _
      $region68: #{tpu_custom_call.1} parent=5 // pred_fallthru
        _
    $region6: #{tpu_custom_call.1} parent=1 // loop_footer
      %s23 = sadd.s32 1, %s19
    $region7: #{tpu_custom_call.1} parent=1 // loop_footer_branch
      %18 = sbr.rel target = $region3
    $region8: #{tpu_custom_call.1} parent=1 // loop_exit
      _
    %3719 = vsyncpa [#allocation3], 1
    %s3720 = scalar_lea.sflag [#allocation3], 1
    %3721 = vsyncpa %s3720, 1

</llo_original>
